<compile_context>
chip_gen: v5e
topology: v5e:2x2
jax: 0.10.0
libtpu: 0.0.40
codegen_flags: <defaults>
</compile_context>

<pallas_src>
import functools

import jax
import jax.numpy as jnp
from jax.experimental import pallas as pl
from jax.experimental.pallas import tpu as pltpu


# ---------------------------------------------------------------------------
# Fused kernel: [channel concat] -> 3x3 conv (im2col, single MXU matmul)
#               -> training-mode BatchNorm (in-kernel batch stats) -> ReLU
# The whole (small) batch is resident in VMEM; grid = (1,).
# ---------------------------------------------------------------------------
def _conv_bn_relu_kernel(*args, n_imgs, H, W, eps):
    img_refs = args[:n_imgs]                      # pre-padded NHWC images
    w_ref, g_ref, b_ref, o_ref = args[n_imgs:]    # (9*Cin,Cout),(1,Cout),(1,Cout)

    N = img_refs[0].shape[0]
    Cout = o_ref.shape[3]
    M = H * W

    # ---- 3x3 conv (stride 1, pad 1; inputs arrive spatially pre-padded) ----
    # Build one (N*H*W, 9*Cin) im2col slab and do a single matmul; K = 9*Cin
    # amortises MXU push/pop ~9x better than per-tap K=Cin matmuls and keeps
    # the relayout work off the critical path.
    slabs = []
    for n in range(N):
        if n_imgs == 1:
            img = img_refs[0][n]                                  # (H+2,W+2,C)
        else:
            # torch.cat([x, skip], dim=1) fused here (VMEM-only concat).
            img = jnp.concatenate([r[n] for r in img_refs], axis=-1)
        cin = img.shape[-1]
        cols = []
        for dy in range(3):
            for dx in range(3):
                cols.append(img[dy:dy + H, dx:dx + W, :].reshape(M, cin))
        slabs.append(jnp.concatenate(cols, axis=-1))              # (M, 9*Cin)
    patches = slabs[0] if N == 1 else jnp.concatenate(slabs, axis=0)

    y = jnp.dot(patches, w_ref[...],
                preferred_element_type=jnp.float32)               # (N*M, Cout)
    # conv bias intentionally omitted: it cancels under training-mode BN.

    # ---- BatchNorm statistics over (N, H, W): two-pass, biased variance ----
    inv_cnt = 1.0 / float(N * M)
    mean = jnp.sum(y, axis=0, keepdims=True) * inv_cnt            # (1, Cout)
    d = y - mean
    var = jnp.sum(d * d, axis=0, keepdims=True) * inv_cnt         # (1, Cout)

    scale = g_ref[...] * jax.lax.rsqrt(var + eps)                 # (1, Cout)
    shift = b_ref[...] - mean * scale

    # ---- normalise + ReLU + store ------------------------------------------
    a = jnp.maximum(y * scale + shift, 0.0)                       # (N*M, Cout)
    o_ref[...] = a.reshape(N, H, W, Cout)


def _conv_bn_relu(imgs_padded, w_flat, gamma, beta, *, H, W, eps=1e-5):
    """imgs_padded: list of (N, H+2, W+2, C_i) NHWC arrays whose channels are
    (virtually) concatenated; w_flat: (9*sum(C_i), Cout) im2col weights."""
    n_imgs = len(imgs_padded)
    N = imgs_padded[0].shape[0]
    Cout = w_flat.shape[-1]

    kernel = functools.partial(_conv_bn_relu_kernel,
                               n_imgs=n_imgs, H=H, W=W, eps=eps)

    in_specs = [pl.BlockSpec(img.shape, lambda n: (0, 0, 0, 0))
                for img in imgs_padded]
    in_specs += [
        pl.BlockSpec(w_flat.shape, lambda n: (0, 0)),
        pl.BlockSpec((1, Cout), lambda n: (0, 0)),
        pl.BlockSpec((1, Cout), lambda n: (0, 0)),
    ]

    return pl.pallas_call(
        kernel,
        out_shape=jax.ShapeDtypeStruct((N, H, W, Cout), jnp.float32),
        grid_spec=pltpu.PrefetchScalarGridSpec(
            num_scalar_prefetch=0,
            grid=(1,),                       # tiny problem: whole batch/block
            in_specs=in_specs,
            out_specs=pl.BlockSpec((N, H, W, Cout), lambda n: (0, 0, 0, 0)),
        ),
        compiler_params=pltpu.CompilerParams(
            dimension_semantics=("arbitrary",)),
    )(*imgs_padded, w_flat,
      gamma.reshape(1, Cout).astype(jnp.float32),
      beta.reshape(1, Cout).astype(jnp.float32))


# ---------------------------------------------------------------------------
# decoder_block forward
# ---------------------------------------------------------------------------
def decoder_block_forward(x_nchw, skip_nchw, params):
    # NCHW -> NHWC (channels on the 128-lane axis) for the TPU kernels.
    x = jnp.transpose(x_nchw, (0, 2, 3, 1))
    skip = jnp.transpose(skip_nchw, (0, 2, 3, 1))
    N, H, W, Cx = x.shape
    Cs = skip.shape[-1]
    Cout = params["w1"].shape[-1]

    # Spatial zero-padding for pad=1 convs (cheap XLA op). The channel concat
    # itself happens inside kernel 1.
    xp = jnp.pad(x, ((0, 0), (1, 1), (1, 1), (0, 0)))
    sp = jnp.pad(skip, ((0, 0), (1, 1), (1, 1), (0, 0)))

    # HWIO conv weights flattened once in the wrapper to im2col matrices.
    w1 = params["w1"].reshape(9 * (Cx + Cs), Cout)
    w2 = params["w2"].reshape(9 * Cout, Cout)

    # stage 1: concat + conv1 + BN1 + ReLU   (one fused kernel)
    a1 = _conv_bn_relu([xp, sp], w1, params["gamma1"], params["beta1"],
                       H=H, W=W)

    # stage 2: conv2 + BN2 + ReLU            (one fused kernel)
    # Padding is applied to the already-activated a1, exactly as in PyTorch
    # (conv padding happens after the previous ReLU).
    a1p = jnp.pad(a1, ((0, 0), (1, 1), (1, 1), (0, 0)))
    out = _conv_bn_relu([a1p], w2, params["gamma2"], params["beta2"],
                        H=H, W=W)

    return jnp.transpose(out, (0, 3, 1, 2))       # back to NCHW


def init_params(key, in_ch, out_ch):
    k1, k2 = jax.random.split(key, 2)
    # Conv biases are omitted: a per-channel constant added before
    # training-mode BatchNorm cancels exactly, so the forward output is
    # identical to the biased PyTorch module.
    return {
        "w1": jax.random.normal(k1, (3, 3, in_ch, out_ch), jnp.float32) * 0.1,
        "gamma1": jnp.ones((out_ch,), jnp.float32),
        "beta1": jnp.zeros((out_ch,), jnp.float32),
        "w2": jax.random.normal(k2, (3, 3, out_ch, out_ch), jnp.float32) * 0.1,
        "gamma2": jnp.ones((out_ch,), jnp.float32),
        "beta2": jnp.zeros((out_ch,), jnp.float32),
    }


# Pure-JAX reference (for a semantics check against the Pallas path).
def _reference(x_nchw, skip_nchw, params, eps=1e-5):
    h = jnp.concatenate([x_nchw, skip_nchw], axis=1)

    def conv_bn_relu(h_nchw, w_hwio, gamma, beta):
        hn = jnp.transpose(h_nchw, (0, 2, 3, 1))
        y = jax.lax.conv_general_dilated(
            hn, w_hwio, window_strides=(1, 1), padding="SAME",
            dimension_numbers=("NHWC", "HWIO", "NHWC"),
            precision=jax.lax.Precision.HIGHEST)
        mean = jnp.mean(y, axis=(0, 1, 2))
        var = jnp.mean((y - mean) ** 2, axis=(0, 1, 2))
        yn = (y - mean) * jax.lax.rsqrt(var + eps) * gamma + beta
        return jnp.transpose(jnp.maximum(yn, 0.0), (0, 3, 1, 2))

    h = conv_bn_relu(h, params["w1"], params["gamma1"], params["beta1"])
    h = conv_bn_relu(h, params["w2"], params["gamma2"], params["beta2"])
    return h


if __name__ == "__main__":
    # decoder_block(in_ch=8, out_ch=8); x and skip each carry 4 channels so
    # that the channel-concat has in_ch = 8 channels.
    N, Cx, Cskip, Hs, Ws = 2, 4, 4, 16, 16
    in_ch, out_ch = Cx + Cskip, 8

    key = jax.random.PRNGKey(0)
    kx, ks, kp = jax.random.split(key, 3)
    x = jax.random.normal(kx, (N, Cx, Hs, Ws), jnp.float32)
    skip = jax.random.normal(ks, (N, Cskip, Hs, Ws), jnp.float32)
    params = init_params(kp, in_ch, out_ch)

    out = jax.block_until_ready(decoder_block_forward(x, skip, params))

    assert out.shape == (N, out_ch, Hs, Ws), out.shape
    assert out.dtype == jnp.float32
    assert bool(jnp.all(out >= 0.0))              # ReLU output

    ref = jax.block_until_ready(_reference(x, skip, params))
    max_err = float(jnp.max(jnp.abs(out - ref)))
    assert bool(jnp.allclose(out, ref, rtol=1e-2, atol=1e-2)), max_err

    print("KERNEL_OK")
</pallas_src>

<mosaic_0001>
module attributes {stable_mosaic.version = 11 : i64} {
  func.func @_conv_bn_relu_kernel(%arg0: i32, %arg1: memref<2x18x18x4xf32, #tpu.memory_space<vmem>>, %arg2: memref<2x18x18x4xf32, #tpu.memory_space<vmem>>, %arg3: memref<72x8xf32, #tpu.memory_space<vmem>>, %arg4: memref<1x8xf32, #tpu.memory_space<vmem>>, %arg5: memref<1x8xf32, #tpu.memory_space<vmem>>, %arg6: memref<2x16x16x8xf32, #tpu.memory_space<vmem>>) attributes {dimension_semantics = [#tpu.dimension_semantics<arbitrary>], iteration_bounds = array<i64: 1>, scalar_prefetch = 0 : i64, scratch_operands = 0 : i64, tpu.core_type = #tpu.core_type<tc>, window_params = [{pipeline_mode = #tpu.pipeline_mode<synchronous>, transform_indices = @transform_0, window_bounds = array<i64: 2, 18, 18, 4>}, {pipeline_mode = #tpu.pipeline_mode<synchronous>, transform_indices = @transform_1, window_bounds = array<i64: 2, 18, 18, 4>}, {pipeline_mode = #tpu.pipeline_mode<synchronous>, transform_indices = @transform_2, window_bounds = array<i64: 72, 8>}, {pipeline_mode = #tpu.pipeline_mode<synchronous>, transform_indices = @transform_3, window_bounds = array<i64: 1, 8>}, {pipeline_mode = #tpu.pipeline_mode<synchronous>, transform_indices = @transform_4, window_bounds = array<i64: 1, 8>}, {pipeline_mode = #tpu.pipeline_mode<synchronous>, transform_indices = @transform_5, window_bounds = array<i64: 2, 16, 16, 8>}]} {
    %c0 = arith.constant 0 : index
    %c0_0 = arith.constant 0 : index
    %c0_1 = arith.constant 0 : index
    %c0_2 = arith.constant 0 : index
    %0 = vector.load %arg1[%c0, %c0_0, %c0_1, %c0_2] : memref<2x18x18x4xf32, #tpu.memory_space<vmem>>, vector<1x18x18x4xf32>
    %1 = vector.shape_cast %0 : vector<1x18x18x4xf32> to vector<18x18x4xf32>
    %c0_3 = arith.constant 0 : index
    %c0_4 = arith.constant 0 : index
    %c0_5 = arith.constant 0 : index
    %c0_6 = arith.constant 0 : index
    %2 = vector.load %arg2[%c0_3, %c0_4, %c0_5, %c0_6] : memref<2x18x18x4xf32, #tpu.memory_space<vmem>>, vector<1x18x18x4xf32>
    %3 = vector.shape_cast %2 : vector<1x18x18x4xf32> to vector<18x18x4xf32>
    %4 = tpu.concatenate %1, %3 in 2 : vector<18x18x4xf32>, vector<18x18x4xf32> -> vector<18x18x8xf32>
    %5 = vector.extract_strided_slice %4 {offsets = [0, 0, 0], sizes = [16, 16, 8], strides = [1, 1, 1]} : vector<18x18x8xf32> to vector<16x16x8xf32>
    %6 = vector.shape_cast %5 : vector<16x16x8xf32> to vector<256x8xf32>
    %7 = vector.extract_strided_slice %4 {offsets = [0, 1, 0], sizes = [16, 16, 8], strides = [1, 1, 1]} : vector<18x18x8xf32> to vector<16x16x8xf32>
    %8 = vector.shape_cast %7 : vector<16x16x8xf32> to vector<256x8xf32>
    %9 = vector.extract_strided_slice %4 {offsets = [0, 2, 0], sizes = [16, 16, 8], strides = [1, 1, 1]} : vector<18x18x8xf32> to vector<16x16x8xf32>
    %10 = vector.shape_cast %9 : vector<16x16x8xf32> to vector<256x8xf32>
    %11 = vector.extract_strided_slice %4 {offsets = [1, 0, 0], sizes = [16, 16, 8], strides = [1, 1, 1]} : vector<18x18x8xf32> to vector<16x16x8xf32>
    %12 = vector.shape_cast %11 : vector<16x16x8xf32> to vector<256x8xf32>
    %13 = vector.extract_strided_slice %4 {offsets = [1, 1, 0], sizes = [16, 16, 8], strides = [1, 1, 1]} : vector<18x18x8xf32> to vector<16x16x8xf32>
    %14 = vector.shape_cast %13 : vector<16x16x8xf32> to vector<256x8xf32>
    %15 = vector.extract_strided_slice %4 {offsets = [1, 2, 0], sizes = [16, 16, 8], strides = [1, 1, 1]} : vector<18x18x8xf32> to vector<16x16x8xf32>
    %16 = vector.shape_cast %15 : vector<16x16x8xf32> to vector<256x8xf32>
    %17 = vector.extract_strided_slice %4 {offsets = [2, 0, 0], sizes = [16, 16, 8], strides = [1, 1, 1]} : vector<18x18x8xf32> to vector<16x16x8xf32>
    %18 = vector.shape_cast %17 : vector<16x16x8xf32> to vector<256x8xf32>
    %19 = vector.extract_strided_slice %4 {offsets = [2, 1, 0], sizes = [16, 16, 8], strides = [1, 1, 1]} : vector<18x18x8xf32> to vector<16x16x8xf32>
    %20 = vector.shape_cast %19 : vector<16x16x8xf32> to vector<256x8xf32>
    %21 = vector.extract_strided_slice %4 {offsets = [2, 2, 0], sizes = [16, 16, 8], strides = [1, 1, 1]} : vector<18x18x8xf32> to vector<16x16x8xf32>
    %22 = vector.shape_cast %21 : vector<16x16x8xf32> to vector<256x8xf32>
    %23 = tpu.concatenate %6, %8, %10, %12, %14, %16, %18, %20, %22 in 1 : vector<256x8xf32>, vector<256x8xf32>, vector<256x8xf32>, vector<256x8xf32>, vector<256x8xf32>, vector<256x8xf32>, vector<256x8xf32>, vector<256x8xf32>, vector<256x8xf32> -> vector<256x72xf32>
    %c1 = arith.constant 1 : index
    %c0_7 = arith.constant 0 : index
    %c0_8 = arith.constant 0 : index
    %c0_9 = arith.constant 0 : index
    %24 = vector.load %arg1[%c1, %c0_7, %c0_8, %c0_9] : memref<2x18x18x4xf32, #tpu.memory_space<vmem>>, vector<1x18x18x4xf32>
    %25 = vector.shape_cast %24 : vector<1x18x18x4xf32> to vector<18x18x4xf32>
    %c1_10 = arith.constant 1 : index
    %c0_11 = arith.constant 0 : index
    %c0_12 = arith.constant 0 : index
    %c0_13 = arith.constant 0 : index
    %26 = vector.load %arg2[%c1_10, %c0_11, %c0_12, %c0_13] : memref<2x18x18x4xf32, #tpu.memory_space<vmem>>, vector<1x18x18x4xf32>
    %27 = vector.shape_cast %26 : vector<1x18x18x4xf32> to vector<18x18x4xf32>
    %28 = tpu.concatenate %25, %27 in 2 : vector<18x18x4xf32>, vector<18x18x4xf32> -> vector<18x18x8xf32>
    %29 = vector.extract_strided_slice %28 {offsets = [0, 0, 0], sizes = [16, 16, 8], strides = [1, 1, 1]} : vector<18x18x8xf32> to vector<16x16x8xf32>
    %30 = vector.shape_cast %29 : vector<16x16x8xf32> to vector<256x8xf32>
    %31 = vector.extract_strided_slice %28 {offsets = [0, 1, 0], sizes = [16, 16, 8], strides = [1, 1, 1]} : vector<18x18x8xf32> to vector<16x16x8xf32>
    %32 = vector.shape_cast %31 : vector<16x16x8xf32> to vector<256x8xf32>
    %33 = vector.extract_strided_slice %28 {offsets = [0, 2, 0], sizes = [16, 16, 8], strides = [1, 1, 1]} : vector<18x18x8xf32> to vector<16x16x8xf32>
    %34 = vector.shape_cast %33 : vector<16x16x8xf32> to vector<256x8xf32>
    %35 = vector.extract_strided_slice %28 {offsets = [1, 0, 0], sizes = [16, 16, 8], strides = [1, 1, 1]} : vector<18x18x8xf32> to vector<16x16x8xf32>
    %36 = vector.shape_cast %35 : vector<16x16x8xf32> to vector<256x8xf32>
    %37 = vector.extract_strided_slice %28 {offsets = [1, 1, 0], sizes = [16, 16, 8], strides = [1, 1, 1]} : vector<18x18x8xf32> to vector<16x16x8xf32>
    %38 = vector.shape_cast %37 : vector<16x16x8xf32> to vector<256x8xf32>
    %39 = vector.extract_strided_slice %28 {offsets = [1, 2, 0], sizes = [16, 16, 8], strides = [1, 1, 1]} : vector<18x18x8xf32> to vector<16x16x8xf32>
    %40 = vector.shape_cast %39 : vector<16x16x8xf32> to vector<256x8xf32>
    %41 = vector.extract_strided_slice %28 {offsets = [2, 0, 0], sizes = [16, 16, 8], strides = [1, 1, 1]} : vector<18x18x8xf32> to vector<16x16x8xf32>
    %42 = vector.shape_cast %41 : vector<16x16x8xf32> to vector<256x8xf32>
    %43 = vector.extract_strided_slice %28 {offsets = [2, 1, 0], sizes = [16, 16, 8], strides = [1, 1, 1]} : vector<18x18x8xf32> to vector<16x16x8xf32>
    %44 = vector.shape_cast %43 : vector<16x16x8xf32> to vector<256x8xf32>
    %45 = vector.extract_strided_slice %28 {offsets = [2, 2, 0], sizes = [16, 16, 8], strides = [1, 1, 1]} : vector<18x18x8xf32> to vector<16x16x8xf32>
    %46 = vector.shape_cast %45 : vector<16x16x8xf32> to vector<256x8xf32>
    %47 = tpu.concatenate %30, %32, %34, %36, %38, %40, %42, %44, %46 in 1 : vector<256x8xf32>, vector<256x8xf32>, vector<256x8xf32>, vector<256x8xf32>, vector<256x8xf32>, vector<256x8xf32>, vector<256x8xf32>, vector<256x8xf32>, vector<256x8xf32> -> vector<256x72xf32>
    %48 = tpu.concatenate %23, %47 in 0 : vector<256x72xf32>, vector<256x72xf32> -> vector<512x72xf32>
    %c0_14 = arith.constant 0 : index
    %c0_15 = arith.constant 0 : index
    %49 = vector.load %arg3[%c0_14, %c0_15] : memref<72x8xf32, #tpu.memory_space<vmem>>, vector<72x8xf32>
    %cst = arith.constant dense<0.000000e+00> : vector<512x8xf32>
    %50 = tpu.matmul %48, %49, %cst {dimension_numbers = #tpu.dot_dimension_numbers<[1], [0], [0], [1], [0, 0, 1, 1], [], []>} : vector<512x72xf32>, vector<72x8xf32>, vector<512x8xf32> -> vector<512x8xf32>
    %cst_16 = arith.constant dense<0.000000e+00> : vector<8xf32>
    %51 = vector.multi_reduction <add>, %50, %cst_16 [0] : vector<512x8xf32> to vector<8xf32>
    %52 = vector.shape_cast %51 : vector<8xf32> to vector<1x8xf32>
    %cst_17 = arith.constant 0.001953125 : f32
    %53 = vector.broadcast %cst_17 : f32 to vector<1x8xf32>
    %54 = arith.mulf %52, %53 : vector<1x8xf32>
    %55 = vector.broadcast %54 : vector<1x8xf32> to vector<512x8xf32>
    %56 = arith.subf %50, %55 : vector<512x8xf32>
    %57 = arith.mulf %56, %56 : vector<512x8xf32>
    %cst_18 = arith.constant dense<0.000000e+00> : vector<8xf32>
    %58 = vector.multi_reduction <add>, %57, %cst_18 [0] : vector<512x8xf32> to vector<8xf32>
    %59 = vector.shape_cast %58 : vector<8xf32> to vector<1x8xf32>
    %cst_19 = arith.constant 0.001953125 : f32
    %60 = vector.broadcast %cst_19 : f32 to vector<1x8xf32>
    %61 = arith.mulf %59, %60 : vector<1x8xf32>
    %c0_20 = arith.constant 0 : index
    %c0_21 = arith.constant 0 : index
    %62 = vector.load %arg4[%c0_20, %c0_21] : memref<1x8xf32, #tpu.memory_space<vmem>>, vector<1x8xf32>
    %cst_22 = arith.constant 9.99999974E-6 : f32
    %63 = vector.broadcast %cst_22 : f32 to vector<1x8xf32>
    %64 = arith.addf %61, %63 : vector<1x8xf32>
    %65 = math.rsqrt %64 : vector<1x8xf32>
    %66 = arith.mulf %62, %65 : vector<1x8xf32>
    %c0_23 = arith.constant 0 : index
    %c0_24 = arith.constant 0 : index
    %67 = vector.load %arg5[%c0_23, %c0_24] : memref<1x8xf32, #tpu.memory_space<vmem>>, vector<1x8xf32>
    %68 = arith.mulf %54, %66 : vector<1x8xf32>
    %69 = arith.subf %67, %68 : vector<1x8xf32>
    %70 = vector.broadcast %66 : vector<1x8xf32> to vector<512x8xf32>
    %71 = arith.mulf %50, %70 : vector<512x8xf32>
    %72 = vector.broadcast %69 : vector<1x8xf32> to vector<512x8xf32>
    %73 = arith.addf %71, %72 : vector<512x8xf32>
    %cst_25 = arith.constant 0.000000e+00 : f32
    %74 = vector.broadcast %cst_25 : f32 to vector<512x8xf32>
    %75 = arith.maximumf %73, %74 : vector<512x8xf32>
    %76 = vector.shape_cast %75 : vector<512x8xf32> to vector<2x16x16x8xf32>
    %c0_26 = arith.constant 0 : index
    %c0_27 = arith.constant 0 : index
    %c0_28 = arith.constant 0 : index
    %c0_29 = arith.constant 0 : index
    %77 = vector.load %arg6[%c0_26, %c0_27, %c0_28, %c0_29] : memref<2x16x16x8xf32, #tpu.memory_space<vmem>>, vector<2x16x16x8xf32>
    tpu.vector_store %arg6[%c0_26, %c0_27, %c0_28, %c0_29], %76 {strides = array<i32>} : memref<2x16x16x8xf32, #tpu.memory_space<vmem>>, vector<2x16x16x8xf32>,
    return
  }
  func.func @transform_0(%arg0: i32) -> (i32, i32, i32, i32) {
    %c0_i32 = arith.constant 0 : i32
    %c0_i32_0 = arith.constant 0 : i32
    %c0_i32_1 = arith.constant 0 : i32
    %c0_i32_2 = arith.constant 0 : i32
    %c0_i32_3 = arith.constant 0 : i32
    return %c0_i32, %c0_i32_0, %c0_i32_1, %c0_i32_2 : i32, i32, i32, i32
  }
  func.func @transform_1(%arg0: i32) -> (i32, i32, i32, i32) {
    %c0_i32 = arith.constant 0 : i32
    %c0_i32_0 = arith.constant 0 : i32
    %c0_i32_1 = arith.constant 0 : i32
    %c0_i32_2 = arith.constant 0 : i32
    %c0_i32_3 = arith.constant 0 : i32
    return %c0_i32, %c0_i32_0, %c0_i32_1, %c0_i32_2 : i32, i32, i32, i32
  }
  func.func @transform_2(%arg0: i32) -> (i32, i32) {
    %c0_i32 = arith.constant 0 : i32
    %c0_i32_0 = arith.constant 0 : i32
    %c0_i32_1 = arith.constant 0 : i32
    return %c0_i32, %c0_i32_0 : i32, i32
  }
  func.func @transform_3(%arg0: i32) -> (i32, i32) {
    %c0_i32 = arith.constant 0 : i32
    %c0_i32_0 = arith.constant 0 : i32
    %c0_i32_1 = arith.constant 0 : i32
    return %c0_i32, %c0_i32_0 : i32, i32
  }
  func.func @transform_4(%arg0: i32) -> (i32, i32) {
    %c0_i32 = arith.constant 0 : i32
    %c0_i32_0 = arith.constant 0 : i32
    %c0_i32_1 = arith.constant 0 : i32
    return %c0_i32, %c0_i32_0 : i32, i32
  }
  func.func @transform_5(%arg0: i32) -> (i32, i32, i32, i32) {
    %c0_i32 = arith.constant 0 : i32
    %c0_i32_0 = arith.constant 0 : i32
    %c0_i32_1 = arith.constant 0 : i32
    %c0_i32_2 = arith.constant 0 : i32
    %c0_i32_3 = arith.constant 0 : i32
    return %c0_i32, %c0_i32_0, %c0_i32_1, %c0_i32_2 : i32, i32, i32, i32
  }
}

</mosaic_0001>

<llo_original>
// kernel: tpu_custom_call.1
$region0: #{tpu_custom_call.1}
  #allocation0 [shape = 'u32[]', space=smem, size = 0x4, offset = 0x4, fixed_abs, tag = 'smem constant byte address 0x4 - core index']
  #allocation1 [shape = 'u32[72,128]{1,0:T(1,128)}', space=vmem, size = 0x9000, scoped, tag = 'internal scratch']
  %s0 = inlined_call_operand.vmem [shape: f32[2,18,18,4], index: 0, kind: input, shape index: {}]
  %s1 = inlined_call_operand.vmem [shape: f32[2,18,18,4], index: 1, kind: input, shape index: {}]
  %s2 = inlined_call_operand.vmem [shape: f32[72,8], index: 2, kind: input, shape index: {}]
  %s3 = inlined_call_operand.vmem [shape: f32[1,8], index: 3, kind: input, shape index: {}]
  %s4 = inlined_call_operand.vmem [shape: f32[1,8], index: 4, kind: input, shape index: {}]
  %s5 = inlined_call_operand.vmem [shape: f32[2,16,16,8], index: 5, kind: output, shape index: {}]
  %s6 = sld [smem:[#allocation0]]
  $region30: #{tpu_custom_call.1} parent=0
    _
  %s8 = ssub.s32 1, %s6
  %s9 = scalar_select 0, %s8, %s6
  // Predicated region
  $region2: #{tpu_custom_call.1} parent=0 // pred_check
    _
  $region3: #{tpu_custom_call.1} parent=0 // pred_check_branch
    %11 = sbr.rel (0) target = $region5
  $region4: #{tpu_custom_call.1} parent=0 // pred_region
    _
  $region5: #{tpu_custom_call.1} parent=0 // pred_fallthru
    _
  // Predicated region
  $region6: #{tpu_custom_call.1} parent=0 // pred_check
    _
  $region7: #{tpu_custom_call.1} parent=0 // pred_check_branch
    %13 = sbr.rel (0) target = $region9
  $region8: #{tpu_custom_call.1} parent=0 // pred_region
    _
  $region9: #{tpu_custom_call.1} parent=0 // pred_fallthru
    _
  // Predicated region
  $region10: #{tpu_custom_call.1} parent=0 // pred_check
    _
  $region11: #{tpu_custom_call.1} parent=0 // pred_check_branch
    %15 = sbr.rel (0) target = $region13
  $region12: #{tpu_custom_call.1} parent=0 // pred_region
    _
  $region13: #{tpu_custom_call.1} parent=0 // pred_fallthru
    _
  // Predicated region
  $region14: #{tpu_custom_call.1} parent=0 // pred_check
    _
  $region15: #{tpu_custom_call.1} parent=0 // pred_check_branch
    %17 = sbr.rel (0) target = $region17
  $region16: #{tpu_custom_call.1} parent=0 // pred_region
    _
  $region17: #{tpu_custom_call.1} parent=0 // pred_fallthru
    _
  // Predicated region
  $region18: #{tpu_custom_call.1} parent=0 // pred_check
    _
  $region19: #{tpu_custom_call.1} parent=0 // pred_check_branch
    %19 = sbr.rel (0) target = $region21
  $region20: #{tpu_custom_call.1} parent=0 // pred_region
    _
  $region21: #{tpu_custom_call.1} parent=0 // pred_fallthru
    _
  %v20 = vld [vmem:[%s0] sm:$0xff]
  %v21 = vld [vmem:[%s0 + $0x8] sm:$0xff]
  %v22 = vld [vmem:[%s0 + $0x10] sm:$0x3]
  %v23 = vld [vmem:[%s0 + $0x18] sm:$0xff]
  %v24 = vld [vmem:[%s0 + $0x20] sm:$0xff]
  %v25 = vld [vmem:[%s0 + $0x28] sm:$0x3]
  %v26 = vld [vmem:[%s0 + $0x30] sm:$0xff]
  %v27 = vld [vmem:[%s0 + $0x38] sm:$0xff]
  %v28 = vld [vmem:[%s0 + $0x40] sm:$0x3]
  %v29 = vld [vmem:[%s0 + $0x48] sm:$0xff]
  %v30 = vld [vmem:[%s0 + $0x50] sm:$0xff]
  %v31 = vld [vmem:[%s0 + $0x58] sm:$0x3]
  %v32 = vld [vmem:[%s0 + $0x60] sm:$0xff]
  %v33 = vld [vmem:[%s0 + $0x68] sm:$0xff]
  %v34 = vld [vmem:[%s0 + $0x70] sm:$0x3]
  %v35 = vld [vmem:[%s0 + $0x78] sm:$0xff]
  %v36 = vld [vmem:[%s0 + $0x80] sm:$0xff]
  %v37 = vld [vmem:[%s0 + $0x88] sm:$0x3]
  %v38 = vld [vmem:[%s0 + $0x90] sm:$0xff]
  %v39 = vld [vmem:[%s0 + $0x98] sm:$0xff]
  %v40 = vld [vmem:[%s0 + $0xa0] sm:$0x3]
  %v41 = vld [vmem:[%s0 + $0xa8] sm:$0xff]
  %v42 = vld [vmem:[%s0 + $0xb0] sm:$0xff]
  %v43 = vld [vmem:[%s0 + $0xb8] sm:$0x3]
  %v44 = vld [vmem:[%s0 + $0xc0] sm:$0xff]
  %v45 = vld [vmem:[%s0 + $0xc8] sm:$0xff]
  %v46 = vld [vmem:[%s0 + $0xd0] sm:$0x3]
  %v47 = vld [vmem:[%s0 + $0xd8] sm:$0xff]
  %v48 = vld [vmem:[%s0 + $0xe0] sm:$0xff]
  %v49 = vld [vmem:[%s0 + $0xe8] sm:$0x3]
  %v50 = vld [vmem:[%s0 + $0xf0] sm:$0xff]
  %v51 = vld [vmem:[%s0 + $0xf8] sm:$0xff]
  %v52 = vld [vmem:[%s0 + $0x100] sm:$0x3]
  %v53 = vld [vmem:[%s0 + $0x108] sm:$0xff]
  %v54 = vld [vmem:[%s0 + $0x110] sm:$0xff]
  %v55 = vld [vmem:[%s0 + $0x118] sm:$0x3]
  %v56 = vld [vmem:[%s0 + $0x120] sm:$0xff]
  %v57 = vld [vmem:[%s0 + $0x128] sm:$0xff]
  %v58 = vld [vmem:[%s0 + $0x130] sm:$0x3]
  %v59 = vld [vmem:[%s0 + $0x138] sm:$0xff]
  %v60 = vld [vmem:[%s0 + $0x140] sm:$0xff]
  %v61 = vld [vmem:[%s0 + $0x148] sm:$0x3]
  %v62 = vld [vmem:[%s0 + $0x150] sm:$0xff]
  %v63 = vld [vmem:[%s0 + $0x158] sm:$0xff]
  %v64 = vld [vmem:[%s0 + $0x160] sm:$0x3]
  %v65 = vld [vmem:[%s0 + $0x168] sm:$0xff]
  %v66 = vld [vmem:[%s0 + $0x170] sm:$0xff]
  %v67 = vld [vmem:[%s0 + $0x178] sm:$0x3]
  %v68 = vld [vmem:[%s0 + $0x180] sm:$0xff]
  %v69 = vld [vmem:[%s0 + $0x188] sm:$0xff]
  %v70 = vld [vmem:[%s0 + $0x190] sm:$0x3]
  %v71 = vld [vmem:[%s0 + $0x198] sm:$0xff]
  %v72 = vld [vmem:[%s0 + $0x1a0] sm:$0xff]
  %v73 = vld [vmem:[%s0 + $0x1a8] sm:$0x3]
  %v74 = vld [vmem:[%s1] sm:$0xff]
  %v75 = vld [vmem:[%s1 + $0x8] sm:$0xff]
  %v76 = vld [vmem:[%s1 + $0x10] sm:$0x3]
  %v77 = vld [vmem:[%s1 + $0x18] sm:$0xff]
  %v78 = vld [vmem:[%s1 + $0x20] sm:$0xff]
  %v79 = vld [vmem:[%s1 + $0x28] sm:$0x3]
  %v80 = vld [vmem:[%s1 + $0x30] sm:$0xff]
  %v81 = vld [vmem:[%s1 + $0x38] sm:$0xff]
  %v82 = vld [vmem:[%s1 + $0x40] sm:$0x3]
  %v83 = vld [vmem:[%s1 + $0x48] sm:$0xff]
  %v84 = vld [vmem:[%s1 + $0x50] sm:$0xff]
  %v85 = vld [vmem:[%s1 + $0x58] sm:$0x3]
  %v86 = vld [vmem:[%s1 + $0x60] sm:$0xff]
  %v87 = vld [vmem:[%s1 + $0x68] sm:$0xff]
  %v88 = vld [vmem:[%s1 + $0x70] sm:$0x3]
  %v89 = vld [vmem:[%s1 + $0x78] sm:$0xff]
  %v90 = vld [vmem:[%s1 + $0x80] sm:$0xff]
  %v91 = vld [vmem:[%s1 + $0x88] sm:$0x3]
  %v92 = vld [vmem:[%s1 + $0x90] sm:$0xff]
  %v93 = vld [vmem:[%s1 + $0x98] sm:$0xff]
  %v94 = vld [vmem:[%s1 + $0xa0] sm:$0x3]
  %v95 = vld [vmem:[%s1 + $0xa8] sm:$0xff]
  %v96 = vld [vmem:[%s1 + $0xb0] sm:$0xff]
  %v97 = vld [vmem:[%s1 + $0xb8] sm:$0x3]
  %v98 = vld [vmem:[%s1 + $0xc0] sm:$0xff]
  %v99 = vld [vmem:[%s1 + $0xc8] sm:$0xff]
  %v100 = vld [vmem:[%s1 + $0xd0] sm:$0x3]
  %v101 = vld [vmem:[%s1 + $0xd8] sm:$0xff]
  %v102 = vld [vmem:[%s1 + $0xe0] sm:$0xff]
  %v103 = vld [vmem:[%s1 + $0xe8] sm:$0x3]
  %v104 = vld [vmem:[%s1 + $0xf0] sm:$0xff]
  %v105 = vld [vmem:[%s1 + $0xf8] sm:$0xff]
  %v106 = vld [vmem:[%s1 + $0x100] sm:$0x3]
  %v107 = vld [vmem:[%s1 + $0x108] sm:$0xff]
  %v108 = vld [vmem:[%s1 + $0x110] sm:$0xff]
  %v109 = vld [vmem:[%s1 + $0x118] sm:$0x3]
  %v110 = vld [vmem:[%s1 + $0x120] sm:$0xff]
  %v111 = vld [vmem:[%s1 + $0x128] sm:$0xff]
  %v112 = vld [vmem:[%s1 + $0x130] sm:$0x3]
  %v113 = vld [vmem:[%s1 + $0x138] sm:$0xff]
  %v114 = vld [vmem:[%s1 + $0x140] sm:$0xff]
  %v115 = vld [vmem:[%s1 + $0x148] sm:$0x3]
  %v116 = vld [vmem:[%s1 + $0x150] sm:$0xff]
  %v117 = vld [vmem:[%s1 + $0x158] sm:$0xff]
  %v118 = vld [vmem:[%s1 + $0x160] sm:$0x3]
  %v119 = vld [vmem:[%s1 + $0x168] sm:$0xff]
  %v120 = vld [vmem:[%s1 + $0x170] sm:$0xff]
  %v121 = vld [vmem:[%s1 + $0x178] sm:$0x3]
  %v122 = vld [vmem:[%s1 + $0x180] sm:$0xff]
  %v123 = vld [vmem:[%s1 + $0x188] sm:$0xff]
  %v124 = vld [vmem:[%s1 + $0x190] sm:$0x3]
  %v125 = vld [vmem:[%s1 + $0x198] sm:$0xff]
  %v126 = vld [vmem:[%s1 + $0x1a0] sm:$0xff]
  %v127 = vld [vmem:[%s1 + $0x1a8] sm:$0x3]
  %182 = vrot.lane.b32.xlu0 %v74, 4
  %v183 = vpop.permute.xlu0 %182
  %184 = vrot.lane.b32.xlu0 %v75, 4
  %v185 = vpop.permute.xlu0 %184
  %186 = vrot.lane.b32.xlu0 %v76, 4
  %v187 = vpop.permute.xlu0 %186
  %188 = vrot.lane.b32.xlu0 %v77, 4
  %v189 = vpop.permute.xlu0 %188
  %190 = vrot.lane.b32.xlu0 %v78, 4
  %v191 = vpop.permute.xlu0 %190
  %192 = vrot.lane.b32.xlu0 %v79, 4
  %v193 = vpop.permute.xlu0 %192
  %194 = vrot.lane.b32.xlu0 %v80, 4
  %v195 = vpop.permute.xlu0 %194
  %196 = vrot.lane.b32.xlu0 %v81, 4
  %v197 = vpop.permute.xlu0 %196
  %198 = vrot.lane.b32.xlu0 %v82, 4
  %v199 = vpop.permute.xlu0 %198
  %200 = vrot.lane.b32.xlu0 %v83, 4
  %v201 = vpop.permute.xlu0 %200
  %202 = vrot.lane.b32.xlu0 %v84, 4
  %v203 = vpop.permute.xlu0 %202
  %204 = vrot.lane.b32.xlu0 %v85, 4
  %v205 = vpop.permute.xlu0 %204
  %206 = vrot.lane.b32.xlu0 %v86, 4
  %v207 = vpop.permute.xlu0 %206
  %208 = vrot.lane.b32.xlu0 %v87, 4
  %v209 = vpop.permute.xlu0 %208
  %210 = vrot.lane.b32.xlu0 %v88, 4
  %v211 = vpop.permute.xlu0 %210
  %212 = vrot.lane.b32.xlu0 %v89, 4
  %v213 = vpop.permute.xlu0 %212
  %214 = vrot.lane.b32.xlu0 %v90, 4
  %v215 = vpop.permute.xlu0 %214
  %216 = vrot.lane.b32.xlu0 %v91, 4
  %v217 = vpop.permute.xlu0 %216
  %218 = vrot.lane.b32.xlu0 %v92, 4
  %v219 = vpop.permute.xlu0 %218
  %220 = vrot.lane.b32.xlu0 %v93, 4
  %v221 = vpop.permute.xlu0 %220
  %222 = vrot.lane.b32.xlu0 %v94, 4
  %v223 = vpop.permute.xlu0 %222
  %224 = vrot.lane.b32.xlu0 %v95, 4
  %v225 = vpop.permute.xlu0 %224
  %226 = vrot.lane.b32.xlu0 %v96, 4
  %v227 = vpop.permute.xlu0 %226
  %228 = vrot.lane.b32.xlu0 %v97, 4
  %v229 = vpop.permute.xlu0 %228
  %230 = vrot.lane.b32.xlu0 %v98, 4
  %v231 = vpop.permute.xlu0 %230
  %232 = vrot.lane.b32.xlu0 %v99, 4
  %v233 = vpop.permute.xlu0 %232
  %234 = vrot.lane.b32.xlu0 %v100, 4
  %v235 = vpop.permute.xlu0 %234
  %236 = vrot.lane.b32.xlu0 %v101, 4
  %v237 = vpop.permute.xlu0 %236
  %238 = vrot.lane.b32.xlu0 %v102, 4
  %v239 = vpop.permute.xlu0 %238
  %240 = vrot.lane.b32.xlu0 %v103, 4
  %v241 = vpop.permute.xlu0 %240
  %242 = vrot.lane.b32.xlu0 %v104, 4
  %v243 = vpop.permute.xlu0 %242
  %244 = vrot.lane.b32.xlu0 %v105, 4
  %v245 = vpop.permute.xlu0 %244
  %246 = vrot.lane.b32.xlu0 %v106, 4
  %v247 = vpop.permute.xlu0 %246
  %248 = vrot.lane.b32.xlu0 %v107, 4
  %v249 = vpop.permute.xlu0 %248
  %250 = vrot.lane.b32.xlu0 %v108, 4
  %v251 = vpop.permute.xlu0 %250
  %252 = vrot.lane.b32.xlu0 %v109, 4
  %v253 = vpop.permute.xlu0 %252
  %254 = vrot.lane.b32.xlu0 %v110, 4
  %v255 = vpop.permute.xlu0 %254
  %256 = vrot.lane.b32.xlu0 %v111, 4
  %v257 = vpop.permute.xlu0 %256
  %258 = vrot.lane.b32.xlu0 %v112, 4
  %v259 = vpop.permute.xlu0 %258
  %260 = vrot.lane.b32.xlu0 %v113, 4
  %v261 = vpop.permute.xlu0 %260
  %262 = vrot.lane.b32.xlu0 %v114, 4
  %v263 = vpop.permute.xlu0 %262
  %264 = vrot.lane.b32.xlu0 %v115, 4
  %v265 = vpop.permute.xlu0 %264
  %266 = vrot.lane.b32.xlu0 %v116, 4
  %v267 = vpop.permute.xlu0 %266
  %268 = vrot.lane.b32.xlu0 %v117, 4
  %v269 = vpop.permute.xlu0 %268
  %270 = vrot.lane.b32.xlu0 %v118, 4
  %v271 = vpop.permute.xlu0 %270
  %272 = vrot.lane.b32.xlu0 %v119, 4
  %v273 = vpop.permute.xlu0 %272
  %274 = vrot.lane.b32.xlu0 %v120, 4
  %v275 = vpop.permute.xlu0 %274
  %276 = vrot.lane.b32.xlu0 %v121, 4
  %v277 = vpop.permute.xlu0 %276
  %278 = vrot.lane.b32.xlu0 %v122, 4
  %v279 = vpop.permute.xlu0 %278
  %280 = vrot.lane.b32.xlu0 %v123, 4
  %v281 = vpop.permute.xlu0 %280
  %282 = vrot.lane.b32.xlu0 %v124, 4
  %v283 = vpop.permute.xlu0 %282
  %284 = vrot.lane.b32.xlu0 %v125, 4
  %v285 = vpop.permute.xlu0 %284
  %286 = vrot.lane.b32.xlu0 %v126, 4
  %v287 = vpop.permute.xlu0 %286
  %288 = vrot.lane.b32.xlu0 %v127, 4
  %v289 = vpop.permute.xlu0 %288
  %vm344 = vcmask 31744
  %v345 = vsel %vm344, %v20, %v183
  %v346 = vsel %vm344, %v21, %v185
  %v347 = vsel %vm344, %v22, %v187
  %v348 = vsel %vm344, %v23, %v189
  %v349 = vsel %vm344, %v24, %v191
  %v350 = vsel %vm344, %v25, %v193
  %v351 = vsel %vm344, %v26, %v195
  %v352 = vsel %vm344, %v27, %v197
  %v353 = vsel %vm344, %v28, %v199
  %v354 = vsel %vm344, %v29, %v201
  %v355 = vsel %vm344, %v30, %v203
  %v356 = vsel %vm344, %v31, %v205
  %v357 = vsel %vm344, %v32, %v207
  %v358 = vsel %vm344, %v33, %v209
  %v359 = vsel %vm344, %v34, %v211
  %v360 = vsel %vm344, %v35, %v213
  %v361 = vsel %vm344, %v36, %v215
  %v362 = vsel %vm344, %v37, %v217
  %v363 = vsel %vm344, %v38, %v219
  %v364 = vsel %vm344, %v39, %v221
  %v365 = vsel %vm344, %v40, %v223
  %v366 = vsel %vm344, %v41, %v225
  %v367 = vsel %vm344, %v42, %v227
  %v368 = vsel %vm344, %v43, %v229
  %v369 = vsel %vm344, %v44, %v231
  %v370 = vsel %vm344, %v45, %v233
  %v371 = vsel %vm344, %v46, %v235
  %v372 = vsel %vm344, %v47, %v237
  %v373 = vsel %vm344, %v48, %v239
  %v374 = vsel %vm344, %v49, %v241
  %v375 = vsel %vm344, %v50, %v243
  %v376 = vsel %vm344, %v51, %v245
  %v377 = vsel %vm344, %v52, %v247
  %v378 = vsel %vm344, %v53, %v249
  %v379 = vsel %vm344, %v54, %v251
  %v380 = vsel %vm344, %v55, %v253
  %v381 = vsel %vm344, %v56, %v255
  %v382 = vsel %vm344, %v57, %v257
  %v383 = vsel %vm344, %v58, %v259
  %v384 = vsel %vm344, %v59, %v261
  %v385 = vsel %vm344, %v60, %v263
  %v386 = vsel %vm344, %v61, %v265
  %v387 = vsel %vm344, %v62, %v267
  %v388 = vsel %vm344, %v63, %v269
  %v389 = vsel %vm344, %v64, %v271
  %v390 = vsel %vm344, %v65, %v273
  %v391 = vsel %vm344, %v66, %v275
  %v392 = vsel %vm344, %v67, %v277
  %v393 = vsel %vm344, %v68, %v279
  %v394 = vsel %vm344, %v69, %v281
  %v395 = vsel %vm344, %v70, %v283
  %v396 = vsel %vm344, %v71, %v285
  %v397 = vsel %vm344, %v72, %v287
  %v398 = vsel %vm344, %v73, %v289
  %vm447 = vcmask 1046528
  %v448 = vrot.slane %v345, 1
  %v449 = vrot.slane %v346, 1
  %v450 = vsel %vm447, %v448, %v449
  %v451 = vrot.slane %v347, 1
  %v452 = vsel %vm447, %v449, %v451
  %v453 = vrot.slane %v348, 1
  %v454 = vrot.slane %v349, 1
  %v455 = vsel %vm447, %v453, %v454
  %v456 = vrot.slane %v350, 1
  %v457 = vsel %vm447, %v454, %v456
  %v458 = vrot.slane %v351, 1
  %v459 = vrot.slane %v352, 1
  %v460 = vsel %vm447, %v458, %v459
  %v461 = vrot.slane %v353, 1
  %v462 = vsel %vm447, %v459, %v461
  %v463 = vrot.slane %v354, 1
  %v464 = vrot.slane %v355, 1
  %v465 = vsel %vm447, %v463, %v464
  %v466 = vrot.slane %v356, 1
  %v467 = vsel %vm447, %v464, %v466
  %v468 = vrot.slane %v357, 1
  %v469 = vrot.slane %v358, 1
  %v470 = vsel %vm447, %v468, %v469
  %v471 = vrot.slane %v359, 1
  %v472 = vsel %vm447, %v469, %v471
  %v473 = vrot.slane %v360, 1
  %v474 = vrot.slane %v361, 1
  %v475 = vsel %vm447, %v473, %v474
  %v476 = vrot.slane %v362, 1
  %v477 = vsel %vm447, %v474, %v476
  %v478 = vrot.slane %v363, 1
  %v479 = vrot.slane %v364, 1
  %v480 = vsel %vm447, %v478, %v479
  %v481 = vrot.slane %v365, 1
  %v482 = vsel %vm447, %v479, %v481
  %v483 = vrot.slane %v366, 1
  %v484 = vrot.slane %v367, 1
  %v485 = vsel %vm447, %v483, %v484
  %v486 = vrot.slane %v368, 1
  %v487 = vsel %vm447, %v484, %v486
  %v488 = vrot.slane %v369, 1
  %v489 = vrot.slane %v370, 1
  %v490 = vsel %vm447, %v488, %v489
  %v491 = vrot.slane %v371, 1
  %v492 = vsel %vm447, %v489, %v491
  %v493 = vrot.slane %v372, 1
  %v494 = vrot.slane %v373, 1
  %v495 = vsel %vm447, %v493, %v494
  %v496 = vrot.slane %v374, 1
  %v497 = vsel %vm447, %v494, %v496
  %v498 = vrot.slane %v375, 1
  %v499 = vrot.slane %v376, 1
  %v500 = vsel %vm447, %v498, %v499
  %v501 = vrot.slane %v377, 1
  %v502 = vsel %vm447, %v499, %v501
  %v503 = vrot.slane %v378, 1
  %v504 = vrot.slane %v379, 1
  %v505 = vsel %vm447, %v503, %v504
  %v506 = vrot.slane %v380, 1
  %v507 = vsel %vm447, %v504, %v506
  %v508 = vrot.slane %v381, 1
  %v509 = vrot.slane %v382, 1
  %v510 = vsel %vm447, %v508, %v509
  %v511 = vrot.slane %v383, 1
  %v512 = vsel %vm447, %v509, %v511
  %v513 = vrot.slane %v384, 1
  %v514 = vrot.slane %v385, 1
  %v515 = vsel %vm447, %v513, %v514
  %v516 = vrot.slane %v386, 1
  %v517 = vsel %vm447, %v514, %v516
  %v518 = vrot.slane %v387, 1
  %v519 = vrot.slane %v388, 1
  %v520 = vsel %vm447, %v518, %v519
  %v521 = vrot.slane %v389, 1
  %v522 = vsel %vm447, %v519, %v521
  %v523 = vrot.slane %v390, 1
  %v524 = vrot.slane %v391, 1
  %v525 = vsel %vm447, %v523, %v524
  %v526 = vrot.slane %v392, 1
  %v527 = vsel %vm447, %v524, %v526
  %vm528 = vcmask 1045504
  %v529 = vrot.slane %v345, 2
  %v530 = vrot.slane %v346, 2
  %v531 = vsel %vm528, %v529, %v530
  %v532 = vrot.slane %v347, 2
  %v533 = vsel %vm528, %v530, %v532
  %v534 = vrot.slane %v348, 2
  %v535 = vrot.slane %v349, 2
  %v536 = vsel %vm528, %v534, %v535
  %v537 = vrot.slane %v350, 2
  %v538 = vsel %vm528, %v535, %v537
  %v539 = vrot.slane %v351, 2
  %v540 = vrot.slane %v352, 2
  %v541 = vsel %vm528, %v539, %v540
  %v542 = vrot.slane %v353, 2
  %v543 = vsel %vm528, %v540, %v542
  %v544 = vrot.slane %v354, 2
  %v545 = vrot.slane %v355, 2
  %v546 = vsel %vm528, %v544, %v545
  %v547 = vrot.slane %v356, 2
  %v548 = vsel %vm528, %v545, %v547
  %v549 = vrot.slane %v357, 2
  %v550 = vrot.slane %v358, 2
  %v551 = vsel %vm528, %v549, %v550
  %v552 = vrot.slane %v359, 2
  %v553 = vsel %vm528, %v550, %v552
  %v554 = vrot.slane %v360, 2
  %v555 = vrot.slane %v361, 2
  %v556 = vsel %vm528, %v554, %v555
  %v557 = vrot.slane %v362, 2
  %v558 = vsel %vm528, %v555, %v557
  %v559 = vrot.slane %v363, 2
  %v560 = vrot.slane %v364, 2
  %v561 = vsel %vm528, %v559, %v560
  %v562 = vrot.slane %v365, 2
  %v563 = vsel %vm528, %v560, %v562
  %v564 = vrot.slane %v366, 2
  %v565 = vrot.slane %v367, 2
  %v566 = vsel %vm528, %v564, %v565
  %v567 = vrot.slane %v368, 2
  %v568 = vsel %vm528, %v565, %v567
  %v569 = vrot.slane %v369, 2
  %v570 = vrot.slane %v370, 2
  %v571 = vsel %vm528, %v569, %v570
  %v572 = vrot.slane %v371, 2
  %v573 = vsel %vm528, %v570, %v572
  %v574 = vrot.slane %v372, 2
  %v575 = vrot.slane %v373, 2
  %v576 = vsel %vm528, %v574, %v575
  %v577 = vrot.slane %v374, 2
  %v578 = vsel %vm528, %v575, %v577
  %v579 = vrot.slane %v375, 2
  %v580 = vrot.slane %v376, 2
  %v581 = vsel %vm528, %v579, %v580
  %v582 = vrot.slane %v377, 2
  %v583 = vsel %vm528, %v580, %v582
  %v584 = vrot.slane %v378, 2
  %v585 = vrot.slane %v379, 2
  %v586 = vsel %vm528, %v584, %v585
  %v587 = vrot.slane %v380, 2
  %v588 = vsel %vm528, %v585, %v587
  %v589 = vrot.slane %v381, 2
  %v590 = vrot.slane %v382, 2
  %v591 = vsel %vm528, %v589, %v590
  %v592 = vrot.slane %v383, 2
  %v593 = vsel %vm528, %v590, %v592
  %v594 = vrot.slane %v384, 2
  %v595 = vrot.slane %v385, 2
  %v596 = vsel %vm528, %v594, %v595
  %v597 = vrot.slane %v386, 2
  %v598 = vsel %vm528, %v595, %v597
  %v599 = vrot.slane %v387, 2
  %v600 = vrot.slane %v388, 2
  %v601 = vsel %vm528, %v599, %v600
  %v602 = vrot.slane %v389, 2
  %v603 = vsel %vm528, %v600, %v602
  %v604 = vrot.slane %v390, 2
  %v605 = vrot.slane %v391, 2
  %v606 = vsel %vm528, %v604, %v605
  %v607 = vrot.slane %v392, 2
  %v608 = vsel %vm528, %v605, %v607
  %v612 = vrot.slane %v393, 1
  %v613 = vrot.slane %v394, 1
  %v614 = vsel %vm447, %v612, %v613
  %v615 = vrot.slane %v395, 1
  %v616 = vsel %vm447, %v613, %v615
  %v617 = vrot.slane %v393, 2
  %v618 = vrot.slane %v394, 2
  %v619 = vsel %vm528, %v617, %v618
  %v620 = vrot.slane %v395, 2
  %v621 = vsel %vm528, %v618, %v620
  %v625 = vrot.slane %v396, 1
  %v626 = vrot.slane %v397, 1
  %v627 = vsel %vm447, %v625, %v626
  %v628 = vrot.slane %v398, 1
  %v629 = vsel %vm447, %v626, %v628
  %v630 = vrot.slane %v396, 2
  %v631 = vrot.slane %v397, 2
  %v632 = vsel %vm528, %v630, %v631
  %v633 = vrot.slane %v398, 2
  %v634 = vsel %vm528, %v631, %v633
  %635 = vrot.lane.b32.xlu0 %v450, 8
  %v636 = vpop.permute.xlu0 %635
  %637 = vrot.lane.b32.xlu0 %v452, 8
  %v638 = vpop.permute.xlu0 %637
  %639 = vrot.lane.b32.xlu0 %v455, 8
  %v640 = vpop.permute.xlu0 %639
  %641 = vrot.lane.b32.xlu0 %v457, 8
  %v642 = vpop.permute.xlu0 %641
  %643 = vrot.lane.b32.xlu0 %v460, 8
  %v644 = vpop.permute.xlu0 %643
  %645 = vrot.lane.b32.xlu0 %v462, 8
  %v646 = vpop.permute.xlu0 %645
  %647 = vrot.lane.b32.xlu0 %v465, 8
  %v648 = vpop.permute.xlu0 %647
  %649 = vrot.lane.b32.xlu0 %v467, 8
  %v650 = vpop.permute.xlu0 %649
  %651 = vrot.lane.b32.xlu0 %v470, 8
  %v652 = vpop.permute.xlu0 %651
  %653 = vrot.lane.b32.xlu0 %v472, 8
  %v654 = vpop.permute.xlu0 %653
  %655 = vrot.lane.b32.xlu0 %v475, 8
  %v656 = vpop.permute.xlu0 %655
  %657 = vrot.lane.b32.xlu0 %v477, 8
  %v658 = vpop.permute.xlu0 %657
  %659 = vrot.lane.b32.xlu0 %v480, 8
  %v660 = vpop.permute.xlu0 %659
  %661 = vrot.lane.b32.xlu0 %v482, 8
  %v662 = vpop.permute.xlu0 %661
  %663 = vrot.lane.b32.xlu0 %v485, 8
  %v664 = vpop.permute.xlu0 %663
  %665 = vrot.lane.b32.xlu0 %v487, 8
  %v666 = vpop.permute.xlu0 %665
  %667 = vrot.lane.b32.xlu0 %v490, 8
  %v668 = vpop.permute.xlu0 %667
  %669 = vrot.lane.b32.xlu0 %v492, 8
  %v670 = vpop.permute.xlu0 %669
  %671 = vrot.lane.b32.xlu0 %v495, 8
  %v672 = vpop.permute.xlu0 %671
  %673 = vrot.lane.b32.xlu0 %v497, 8
  %v674 = vpop.permute.xlu0 %673
  %675 = vrot.lane.b32.xlu0 %v500, 8
  %v676 = vpop.permute.xlu0 %675
  %677 = vrot.lane.b32.xlu0 %v502, 8
  %v678 = vpop.permute.xlu0 %677
  %679 = vrot.lane.b32.xlu0 %v505, 8
  %v680 = vpop.permute.xlu0 %679
  %681 = vrot.lane.b32.xlu0 %v507, 8
  %v682 = vpop.permute.xlu0 %681
  %683 = vrot.lane.b32.xlu0 %v510, 8
  %v684 = vpop.permute.xlu0 %683
  %685 = vrot.lane.b32.xlu0 %v512, 8
  %v686 = vpop.permute.xlu0 %685
  %687 = vrot.lane.b32.xlu0 %v515, 8
  %v688 = vpop.permute.xlu0 %687
  %689 = vrot.lane.b32.xlu0 %v517, 8
  %v690 = vpop.permute.xlu0 %689
  %691 = vrot.lane.b32.xlu0 %v520, 8
  %v692 = vpop.permute.xlu0 %691
  %693 = vrot.lane.b32.xlu0 %v522, 8
  %v694 = vpop.permute.xlu0 %693
  %695 = vrot.lane.b32.xlu0 %v525, 8
  %v696 = vpop.permute.xlu0 %695
  %697 = vrot.lane.b32.xlu0 %v527, 8
  %v698 = vpop.permute.xlu0 %697
  %731 = vrot.lane.b32.xlu0 %v531, 16
  %v732 = vpop.permute.xlu0 %731
  %733 = vrot.lane.b32.xlu0 %v533, 16
  %v734 = vpop.permute.xlu0 %733
  %735 = vrot.lane.b32.xlu0 %v536, 16
  %v736 = vpop.permute.xlu0 %735
  %737 = vrot.lane.b32.xlu0 %v538, 16
  %v738 = vpop.permute.xlu0 %737
  %739 = vrot.lane.b32.xlu0 %v541, 16
  %v740 = vpop.permute.xlu0 %739
  %741 = vrot.lane.b32.xlu0 %v543, 16
  %v742 = vpop.permute.xlu0 %741
  %743 = vrot.lane.b32.xlu0 %v546, 16
  %v744 = vpop.permute.xlu0 %743
  %745 = vrot.lane.b32.xlu0 %v548, 16
  %v746 = vpop.permute.xlu0 %745
  %747 = vrot.lane.b32.xlu0 %v551, 16
  %v748 = vpop.permute.xlu0 %747
  %749 = vrot.lane.b32.xlu0 %v553, 16
  %v750 = vpop.permute.xlu0 %749
  %751 = vrot.lane.b32.xlu0 %v556, 16
  %v752 = vpop.permute.xlu0 %751
  %753 = vrot.lane.b32.xlu0 %v558, 16
  %v754 = vpop.permute.xlu0 %753
  %755 = vrot.lane.b32.xlu0 %v561, 16
  %v756 = vpop.permute.xlu0 %755
  %757 = vrot.lane.b32.xlu0 %v563, 16
  %v758 = vpop.permute.xlu0 %757
  %759 = vrot.lane.b32.xlu0 %v566, 16
  %v760 = vpop.permute.xlu0 %759
  %761 = vrot.lane.b32.xlu0 %v568, 16
  %v762 = vpop.permute.xlu0 %761
  %763 = vrot.lane.b32.xlu0 %v571, 16
  %v764 = vpop.permute.xlu0 %763
  %765 = vrot.lane.b32.xlu0 %v573, 16
  %v766 = vpop.permute.xlu0 %765
  %767 = vrot.lane.b32.xlu0 %v576, 16
  %v768 = vpop.permute.xlu0 %767
  %769 = vrot.lane.b32.xlu0 %v578, 16
  %v770 = vpop.permute.xlu0 %769
  %771 = vrot.lane.b32.xlu0 %v581, 16
  %v772 = vpop.permute.xlu0 %771
  %773 = vrot.lane.b32.xlu0 %v583, 16
  %v774 = vpop.permute.xlu0 %773
  %775 = vrot.lane.b32.xlu0 %v586, 16
  %v776 = vpop.permute.xlu0 %775
  %777 = vrot.lane.b32.xlu0 %v588, 16
  %v778 = vpop.permute.xlu0 %777
  %779 = vrot.lane.b32.xlu0 %v591, 16
  %v780 = vpop.permute.xlu0 %779
  %781 = vrot.lane.b32.xlu0 %v593, 16
  %v782 = vpop.permute.xlu0 %781
  %783 = vrot.lane.b32.xlu0 %v596, 16
  %v784 = vpop.permute.xlu0 %783
  %785 = vrot.lane.b32.xlu0 %v598, 16
  %v786 = vpop.permute.xlu0 %785
  %787 = vrot.lane.b32.xlu0 %v601, 16
  %v788 = vpop.permute.xlu0 %787
  %789 = vrot.lane.b32.xlu0 %v603, 16
  %v790 = vpop.permute.xlu0 %789
  %791 = vrot.lane.b32.xlu0 %v606, 16
  %v792 = vpop.permute.xlu0 %791
  %793 = vrot.lane.b32.xlu0 %v608, 16
  %v794 = vpop.permute.xlu0 %793
  %827 = vrot.lane.b32.xlu0 %v348, 24
  %v828 = vpop.permute.xlu0 %827
  %829 = vrot.lane.b32.xlu0 %v349, 24
  %v830 = vpop.permute.xlu0 %829
  %831 = vrot.lane.b32.xlu0 %v351, 24
  %v832 = vpop.permute.xlu0 %831
  %833 = vrot.lane.b32.xlu0 %v352, 24
  %v834 = vpop.permute.xlu0 %833
  %835 = vrot.lane.b32.xlu0 %v354, 24
  %v836 = vpop.permute.xlu0 %835
  %837 = vrot.lane.b32.xlu0 %v355, 24
  %v838 = vpop.permute.xlu0 %837
  %839 = vrot.lane.b32.xlu0 %v357, 24
  %v840 = vpop.permute.xlu0 %839
  %841 = vrot.lane.b32.xlu0 %v358, 24
  %v842 = vpop.permute.xlu0 %841
  %843 = vrot.lane.b32.xlu0 %v360, 24
  %v844 = vpop.permute.xlu0 %843
  %845 = vrot.lane.b32.xlu0 %v361, 24
  %v846 = vpop.permute.xlu0 %845
  %847 = vrot.lane.b32.xlu0 %v363, 24
  %v848 = vpop.permute.xlu0 %847
  %849 = vrot.lane.b32.xlu0 %v364, 24
  %v850 = vpop.permute.xlu0 %849
  %851 = vrot.lane.b32.xlu0 %v366, 24
  %v852 = vpop.permute.xlu0 %851
  %853 = vrot.lane.b32.xlu0 %v367, 24
  %v854 = vpop.permute.xlu0 %853
  %855 = vrot.lane.b32.xlu0 %v369, 24
  %v856 = vpop.permute.xlu0 %855
  %857 = vrot.lane.b32.xlu0 %v370, 24
  %v858 = vpop.permute.xlu0 %857
  %859 = vrot.lane.b32.xlu0 %v372, 24
  %v860 = vpop.permute.xlu0 %859
  %861 = vrot.lane.b32.xlu0 %v373, 24
  %v862 = vpop.permute.xlu0 %861
  %863 = vrot.lane.b32.xlu0 %v375, 24
  %v864 = vpop.permute.xlu0 %863
  %865 = vrot.lane.b32.xlu0 %v376, 24
  %v866 = vpop.permute.xlu0 %865
  %867 = vrot.lane.b32.xlu0 %v378, 24
  %v868 = vpop.permute.xlu0 %867
  %869 = vrot.lane.b32.xlu0 %v379, 24
  %v870 = vpop.permute.xlu0 %869
  %871 = vrot.lane.b32.xlu0 %v381, 24
  %v872 = vpop.permute.xlu0 %871
  %873 = vrot.lane.b32.xlu0 %v382, 24
  %v874 = vpop.permute.xlu0 %873
  %875 = vrot.lane.b32.xlu0 %v384, 24
  %v876 = vpop.permute.xlu0 %875
  %877 = vrot.lane.b32.xlu0 %v385, 24
  %v878 = vpop.permute.xlu0 %877
  %879 = vrot.lane.b32.xlu0 %v387, 24
  %v880 = vpop.permute.xlu0 %879
  %881 = vrot.lane.b32.xlu0 %v388, 24
  %v882 = vpop.permute.xlu0 %881
  %883 = vrot.lane.b32.xlu0 %v390, 24
  %v884 = vpop.permute.xlu0 %883
  %885 = vrot.lane.b32.xlu0 %v391, 24
  %v886 = vpop.permute.xlu0 %885
  %887 = vrot.lane.b32.xlu0 %v393, 24
  %v888 = vpop.permute.xlu0 %887
  %889 = vrot.lane.b32.xlu0 %v394, 24
  %v890 = vpop.permute.xlu0 %889
  %923 = vrot.lane.b32.xlu0 %v455, 32
  %v924 = vpop.permute.xlu0 %923
  %925 = vrot.lane.b32.xlu0 %v457, 32
  %v926 = vpop.permute.xlu0 %925
  %927 = vrot.lane.b32.xlu0 %v460, 32
  %v928 = vpop.permute.xlu0 %927
  %929 = vrot.lane.b32.xlu0 %v462, 32
  %v930 = vpop.permute.xlu0 %929
  %931 = vrot.lane.b32.xlu0 %v465, 32
  %v932 = vpop.permute.xlu0 %931
  %933 = vrot.lane.b32.xlu0 %v467, 32
  %v934 = vpop.permute.xlu0 %933
  %935 = vrot.lane.b32.xlu0 %v470, 32
  %v936 = vpop.permute.xlu0 %935
  %937 = vrot.lane.b32.xlu0 %v472, 32
  %v938 = vpop.permute.xlu0 %937
  %939 = vrot.lane.b32.xlu0 %v475, 32
  %v940 = vpop.permute.xlu0 %939
  %941 = vrot.lane.b32.xlu0 %v477, 32
  %v942 = vpop.permute.xlu0 %941
  %943 = vrot.lane.b32.xlu0 %v480, 32
  %v944 = vpop.permute.xlu0 %943
  %945 = vrot.lane.b32.xlu0 %v482, 32
  %v946 = vpop.permute.xlu0 %945
  %947 = vrot.lane.b32.xlu0 %v485, 32
  %v948 = vpop.permute.xlu0 %947
  %949 = vrot.lane.b32.xlu0 %v487, 32
  %v950 = vpop.permute.xlu0 %949
  %951 = vrot.lane.b32.xlu0 %v490, 32
  %v952 = vpop.permute.xlu0 %951
  %953 = vrot.lane.b32.xlu0 %v492, 32
  %v954 = vpop.permute.xlu0 %953
  %955 = vrot.lane.b32.xlu0 %v495, 32
  %v956 = vpop.permute.xlu0 %955
  %957 = vrot.lane.b32.xlu0 %v497, 32
  %v958 = vpop.permute.xlu0 %957
  %959 = vrot.lane.b32.xlu0 %v500, 32
  %v960 = vpop.permute.xlu0 %959
  %961 = vrot.lane.b32.xlu0 %v502, 32
  %v962 = vpop.permute.xlu0 %961
  %963 = vrot.lane.b32.xlu0 %v505, 32
  %v964 = vpop.permute.xlu0 %963
  %965 = vrot.lane.b32.xlu0 %v507, 32
  %v966 = vpop.permute.xlu0 %965
  %967 = vrot.lane.b32.xlu0 %v510, 32
  %v968 = vpop.permute.xlu0 %967
  %969 = vrot.lane.b32.xlu0 %v512, 32
  %v970 = vpop.permute.xlu0 %969
  %971 = vrot.lane.b32.xlu0 %v515, 32
  %v972 = vpop.permute.xlu0 %971
  %973 = vrot.lane.b32.xlu0 %v517, 32
  %v974 = vpop.permute.xlu0 %973
  %975 = vrot.lane.b32.xlu0 %v520, 32
  %v976 = vpop.permute.xlu0 %975
  %977 = vrot.lane.b32.xlu0 %v522, 32
  %v978 = vpop.permute.xlu0 %977
  %979 = vrot.lane.b32.xlu0 %v525, 32
  %v980 = vpop.permute.xlu0 %979
  %981 = vrot.lane.b32.xlu0 %v527, 32
  %v982 = vpop.permute.xlu0 %981
  %983 = vrot.lane.b32.xlu0 %v614, 32
  %v984 = vpop.permute.xlu0 %983
  %985 = vrot.lane.b32.xlu0 %v616, 32
  %v986 = vpop.permute.xlu0 %985
  %1019 = vrot.lane.b32.xlu0 %v536, 40
  %v1020 = vpop.permute.xlu0 %1019
  %1021 = vrot.lane.b32.xlu0 %v538, 40
  %v1022 = vpop.permute.xlu0 %1021
  %1023 = vrot.lane.b32.xlu0 %v541, 40
  %v1024 = vpop.permute.xlu0 %1023
  %1025 = vrot.lane.b32.xlu0 %v543, 40
  %v1026 = vpop.permute.xlu0 %1025
  %1027 = vrot.lane.b32.xlu0 %v546, 40
  %v1028 = vpop.permute.xlu0 %1027
  %1029 = vrot.lane.b32.xlu0 %v548, 40
  %v1030 = vpop.permute.xlu0 %1029
  %1031 = vrot.lane.b32.xlu0 %v551, 40
  %v1032 = vpop.permute.xlu0 %1031
  %1033 = vrot.lane.b32.xlu0 %v553, 40
  %v1034 = vpop.permute.xlu0 %1033
  %1035 = vrot.lane.b32.xlu0 %v556, 40
  %v1036 = vpop.permute.xlu0 %1035
  %1037 = vrot.lane.b32.xlu0 %v558, 40
  %v1038 = vpop.permute.xlu0 %1037
  %1039 = vrot.lane.b32.xlu0 %v561, 40
  %v1040 = vpop.permute.xlu0 %1039
  %1041 = vrot.lane.b32.xlu0 %v563, 40
  %v1042 = vpop.permute.xlu0 %1041
  %1043 = vrot.lane.b32.xlu0 %v566, 40
  %v1044 = vpop.permute.xlu0 %1043
  %1045 = vrot.lane.b32.xlu0 %v568, 40
  %v1046 = vpop.permute.xlu0 %1045
  %1047 = vrot.lane.b32.xlu0 %v571, 40
  %v1048 = vpop.permute.xlu0 %1047
  %1049 = vrot.lane.b32.xlu0 %v573, 40
  %v1050 = vpop.permute.xlu0 %1049
  %1051 = vrot.lane.b32.xlu0 %v576, 40
  %v1052 = vpop.permute.xlu0 %1051
  %1053 = vrot.lane.b32.xlu0 %v578, 40
  %v1054 = vpop.permute.xlu0 %1053
  %1055 = vrot.lane.b32.xlu0 %v581, 40
  %v1056 = vpop.permute.xlu0 %1055
  %1057 = vrot.lane.b32.xlu0 %v583, 40
  %v1058 = vpop.permute.xlu0 %1057
  %1059 = vrot.lane.b32.xlu0 %v586, 40
  %v1060 = vpop.permute.xlu0 %1059
  %1061 = vrot.lane.b32.xlu0 %v588, 40
  %v1062 = vpop.permute.xlu0 %1061
  %1063 = vrot.lane.b32.xlu0 %v591, 40
  %v1064 = vpop.permute.xlu0 %1063
  %1065 = vrot.lane.b32.xlu0 %v593, 40
  %v1066 = vpop.permute.xlu0 %1065
  %1067 = vrot.lane.b32.xlu0 %v596, 40
  %v1068 = vpop.permute.xlu0 %1067
  %1069 = vrot.lane.b32.xlu0 %v598, 40
  %v1070 = vpop.permute.xlu0 %1069
  %1071 = vrot.lane.b32.xlu0 %v601, 40
  %v1072 = vpop.permute.xlu0 %1071
  %1073 = vrot.lane.b32.xlu0 %v603, 40
  %v1074 = vpop.permute.xlu0 %1073
  %1075 = vrot.lane.b32.xlu0 %v606, 40
  %v1076 = vpop.permute.xlu0 %1075
  %1077 = vrot.lane.b32.xlu0 %v608, 40
  %v1078 = vpop.permute.xlu0 %1077
  %1079 = vrot.lane.b32.xlu0 %v619, 40
  %v1080 = vpop.permute.xlu0 %1079
  %1081 = vrot.lane.b32.xlu0 %v621, 40
  %v1082 = vpop.permute.xlu0 %1081
  %1115 = vrot.lane.b32.xlu0 %v351, 48
  %v1116 = vpop.permute.xlu0 %1115
  %1117 = vrot.lane.b32.xlu0 %v352, 48
  %v1118 = vpop.permute.xlu0 %1117
  %1119 = vrot.lane.b32.xlu0 %v354, 48
  %v1120 = vpop.permute.xlu0 %1119
  %1121 = vrot.lane.b32.xlu0 %v355, 48
  %v1122 = vpop.permute.xlu0 %1121
  %1123 = vrot.lane.b32.xlu0 %v357, 48
  %v1124 = vpop.permute.xlu0 %1123
  %1125 = vrot.lane.b32.xlu0 %v358, 48
  %v1126 = vpop.permute.xlu0 %1125
  %1127 = vrot.lane.b32.xlu0 %v360, 48
  %v1128 = vpop.permute.xlu0 %1127
  %1129 = vrot.lane.b32.xlu0 %v361, 48
  %v1130 = vpop.permute.xlu0 %1129
  %1131 = vrot.lane.b32.xlu0 %v363, 48
  %v1132 = vpop.permute.xlu0 %1131
  %1133 = vrot.lane.b32.xlu0 %v364, 48
  %v1134 = vpop.permute.xlu0 %1133
  %1135 = vrot.lane.b32.xlu0 %v366, 48
  %v1136 = vpop.permute.xlu0 %1135
  %1137 = vrot.lane.b32.xlu0 %v367, 48
  %v1138 = vpop.permute.xlu0 %1137
  %1139 = vrot.lane.b32.xlu0 %v369, 48
  %v1140 = vpop.permute.xlu0 %1139
  %1141 = vrot.lane.b32.xlu0 %v370, 48
  %v1142 = vpop.permute.xlu0 %1141
  %1143 = vrot.lane.b32.xlu0 %v372, 48
  %v1144 = vpop.permute.xlu0 %1143
  %1145 = vrot.lane.b32.xlu0 %v373, 48
  %v1146 = vpop.permute.xlu0 %1145
  %1147 = vrot.lane.b32.xlu0 %v375, 48
  %v1148 = vpop.permute.xlu0 %1147
  %1149 = vrot.lane.b32.xlu0 %v376, 48
  %v1150 = vpop.permute.xlu0 %1149
  %1151 = vrot.lane.b32.xlu0 %v378, 48
  %v1152 = vpop.permute.xlu0 %1151
  %1153 = vrot.lane.b32.xlu0 %v379, 48
  %v1154 = vpop.permute.xlu0 %1153
  %1155 = vrot.lane.b32.xlu0 %v381, 48
  %v1156 = vpop.permute.xlu0 %1155
  %1157 = vrot.lane.b32.xlu0 %v382, 48
  %v1158 = vpop.permute.xlu0 %1157
  %1159 = vrot.lane.b32.xlu0 %v384, 48
  %v1160 = vpop.permute.xlu0 %1159
  %1161 = vrot.lane.b32.xlu0 %v385, 48
  %v1162 = vpop.permute.xlu0 %1161
  %1163 = vrot.lane.b32.xlu0 %v387, 48
  %v1164 = vpop.permute.xlu0 %1163
  %1165 = vrot.lane.b32.xlu0 %v388, 48
  %v1166 = vpop.permute.xlu0 %1165
  %1167 = vrot.lane.b32.xlu0 %v390, 48
  %v1168 = vpop.permute.xlu0 %1167
  %1169 = vrot.lane.b32.xlu0 %v391, 48
  %v1170 = vpop.permute.xlu0 %1169
  %1171 = vrot.lane.b32.xlu0 %v393, 48
  %v1172 = vpop.permute.xlu0 %1171
  %1173 = vrot.lane.b32.xlu0 %v394, 48
  %v1174 = vpop.permute.xlu0 %1173
  %1175 = vrot.lane.b32.xlu0 %v396, 48
  %v1176 = vpop.permute.xlu0 %1175
  %1177 = vrot.lane.b32.xlu0 %v397, 48
  %v1178 = vpop.permute.xlu0 %1177
  %1211 = vrot.lane.b32.xlu0 %v460, 56
  %v1212 = vpop.permute.xlu0 %1211
  %1213 = vrot.lane.b32.xlu0 %v462, 56
  %v1214 = vpop.permute.xlu0 %1213
  %1215 = vrot.lane.b32.xlu0 %v465, 56
  %v1216 = vpop.permute.xlu0 %1215
  %1217 = vrot.lane.b32.xlu0 %v467, 56
  %v1218 = vpop.permute.xlu0 %1217
  %1219 = vrot.lane.b32.xlu0 %v470, 56
  %v1220 = vpop.permute.xlu0 %1219
  %1221 = vrot.lane.b32.xlu0 %v472, 56
  %v1222 = vpop.permute.xlu0 %1221
  %1223 = vrot.lane.b32.xlu0 %v475, 56
  %v1224 = vpop.permute.xlu0 %1223
  %1225 = vrot.lane.b32.xlu0 %v477, 56
  %v1226 = vpop.permute.xlu0 %1225
  %1227 = vrot.lane.b32.xlu0 %v480, 56
  %v1228 = vpop.permute.xlu0 %1227
  %1229 = vrot.lane.b32.xlu0 %v482, 56
  %v1230 = vpop.permute.xlu0 %1229
  %1231 = vrot.lane.b32.xlu0 %v485, 56
  %v1232 = vpop.permute.xlu0 %1231
  %1233 = vrot.lane.b32.xlu0 %v487, 56
  %v1234 = vpop.permute.xlu0 %1233
  %1235 = vrot.lane.b32.xlu0 %v490, 56
  %v1236 = vpop.permute.xlu0 %1235
  %1237 = vrot.lane.b32.xlu0 %v492, 56
  %v1238 = vpop.permute.xlu0 %1237
  %1239 = vrot.lane.b32.xlu0 %v495, 56
  %v1240 = vpop.permute.xlu0 %1239
  %1241 = vrot.lane.b32.xlu0 %v497, 56
  %v1242 = vpop.permute.xlu0 %1241
  %1243 = vrot.lane.b32.xlu0 %v500, 56
  %v1244 = vpop.permute.xlu0 %1243
  %1245 = vrot.lane.b32.xlu0 %v502, 56
  %v1246 = vpop.permute.xlu0 %1245
  %1247 = vrot.lane.b32.xlu0 %v505, 56
  %v1248 = vpop.permute.xlu0 %1247
  %1249 = vrot.lane.b32.xlu0 %v507, 56
  %v1250 = vpop.permute.xlu0 %1249
  %1251 = vrot.lane.b32.xlu0 %v510, 56
  %v1252 = vpop.permute.xlu0 %1251
  %1253 = vrot.lane.b32.xlu0 %v512, 56
  %v1254 = vpop.permute.xlu0 %1253
  %1255 = vrot.lane.b32.xlu0 %v515, 56
  %v1256 = vpop.permute.xlu0 %1255
  %1257 = vrot.lane.b32.xlu0 %v517, 56
  %v1258 = vpop.permute.xlu0 %1257
  %1259 = vrot.lane.b32.xlu0 %v520, 56
  %v1260 = vpop.permute.xlu0 %1259
  %1261 = vrot.lane.b32.xlu0 %v522, 56
  %v1262 = vpop.permute.xlu0 %1261
  %1263 = vrot.lane.b32.xlu0 %v525, 56
  %v1264 = vpop.permute.xlu0 %1263
  %1265 = vrot.lane.b32.xlu0 %v527, 56
  %v1266 = vpop.permute.xlu0 %1265
  %1267 = vrot.lane.b32.xlu0 %v614, 56
  %v1268 = vpop.permute.xlu0 %1267
  %1269 = vrot.lane.b32.xlu0 %v616, 56
  %v1270 = vpop.permute.xlu0 %1269
  %1271 = vrot.lane.b32.xlu0 %v627, 56
  %v1272 = vpop.permute.xlu0 %1271
  %1273 = vrot.lane.b32.xlu0 %v629, 56
  %v1274 = vpop.permute.xlu0 %1273
  %1307 = vrot.lane.b32.xlu0 %v541, 64
  %v1308 = vpop.permute.xlu0 %1307
  %1309 = vrot.lane.b32.xlu0 %v543, 64
  %v1310 = vpop.permute.xlu0 %1309
  %1311 = vrot.lane.b32.xlu0 %v546, 64
  %v1312 = vpop.permute.xlu0 %1311
  %1313 = vrot.lane.b32.xlu0 %v548, 64
  %v1314 = vpop.permute.xlu0 %1313
  %1315 = vrot.lane.b32.xlu0 %v551, 64
  %v1316 = vpop.permute.xlu0 %1315
  %1317 = vrot.lane.b32.xlu0 %v553, 64
  %v1318 = vpop.permute.xlu0 %1317
  %1319 = vrot.lane.b32.xlu0 %v556, 64
  %v1320 = vpop.permute.xlu0 %1319
  %1321 = vrot.lane.b32.xlu0 %v558, 64
  %v1322 = vpop.permute.xlu0 %1321
  %1323 = vrot.lane.b32.xlu0 %v561, 64
  %v1324 = vpop.permute.xlu0 %1323
  %1325 = vrot.lane.b32.xlu0 %v563, 64
  %v1326 = vpop.permute.xlu0 %1325
  %1327 = vrot.lane.b32.xlu0 %v566, 64
  %v1328 = vpop.permute.xlu0 %1327
  %1329 = vrot.lane.b32.xlu0 %v568, 64
  %v1330 = vpop.permute.xlu0 %1329
  %1331 = vrot.lane.b32.xlu0 %v571, 64
  %v1332 = vpop.permute.xlu0 %1331
  %1333 = vrot.lane.b32.xlu0 %v573, 64
  %v1334 = vpop.permute.xlu0 %1333
  %1335 = vrot.lane.b32.xlu0 %v576, 64
  %v1336 = vpop.permute.xlu0 %1335
  %1337 = vrot.lane.b32.xlu0 %v578, 64
  %v1338 = vpop.permute.xlu0 %1337
  %1339 = vrot.lane.b32.xlu0 %v581, 64
  %v1340 = vpop.permute.xlu0 %1339
  %1341 = vrot.lane.b32.xlu0 %v583, 64
  %v1342 = vpop.permute.xlu0 %1341
  %1343 = vrot.lane.b32.xlu0 %v586, 64
  %v1344 = vpop.permute.xlu0 %1343
  %1345 = vrot.lane.b32.xlu0 %v588, 64
  %v1346 = vpop.permute.xlu0 %1345
  %1347 = vrot.lane.b32.xlu0 %v591, 64
  %v1348 = vpop.permute.xlu0 %1347
  %1349 = vrot.lane.b32.xlu0 %v593, 64
  %v1350 = vpop.permute.xlu0 %1349
  %1351 = vrot.lane.b32.xlu0 %v596, 64
  %v1352 = vpop.permute.xlu0 %1351
  %1353 = vrot.lane.b32.xlu0 %v598, 64
  %v1354 = vpop.permute.xlu0 %1353
  %1355 = vrot.lane.b32.xlu0 %v601, 64
  %v1356 = vpop.permute.xlu0 %1355
  %1357 = vrot.lane.b32.xlu0 %v603, 64
  %v1358 = vpop.permute.xlu0 %1357
  %1359 = vrot.lane.b32.xlu0 %v606, 64
  %v1360 = vpop.permute.xlu0 %1359
  %1361 = vrot.lane.b32.xlu0 %v608, 64
  %v1362 = vpop.permute.xlu0 %1361
  %1363 = vrot.lane.b32.xlu0 %v619, 64
  %v1364 = vpop.permute.xlu0 %1363
  %1365 = vrot.lane.b32.xlu0 %v621, 64
  %v1366 = vpop.permute.xlu0 %1365
  %1367 = vrot.lane.b32.xlu0 %v632, 64
  %v1368 = vpop.permute.xlu0 %1367
  %1369 = vrot.lane.b32.xlu0 %v634, 64
  %v1370 = vpop.permute.xlu0 %1369
  %vm1403 = vcmask 64512
  %v1404 = vsel %vm1403, %v345, %v636
  %v1405 = vsel %vm1403, %v346, %v638
  %v1406 = vsel %vm1403, %v348, %v640
  %v1407 = vsel %vm1403, %v349, %v642
  %v1408 = vsel %vm1403, %v351, %v644
  %v1409 = vsel %vm1403, %v352, %v646
  %v1410 = vsel %vm1403, %v354, %v648
  %v1411 = vsel %vm1403, %v355, %v650
  %v1412 = vsel %vm1403, %v357, %v652
  %v1413 = vsel %vm1403, %v358, %v654
  %v1414 = vsel %vm1403, %v360, %v656
  %v1415 = vsel %vm1403, %v361, %v658
  %v1416 = vsel %vm1403, %v363, %v660
  %v1417 = vsel %vm1403, %v364, %v662
  %v1418 = vsel %vm1403, %v366, %v664
  %v1419 = vsel %vm1403, %v367, %v666
  %v1420 = vsel %vm1403, %v369, %v668
  %v1421 = vsel %vm1403, %v370, %v670
  %v1422 = vsel %vm1403, %v372, %v672
  %v1423 = vsel %vm1403, %v373, %v674
  %v1424 = vsel %vm1403, %v375, %v676
  %v1425 = vsel %vm1403, %v376, %v678
  %v1426 = vsel %vm1403, %v378, %v680
  %v1427 = vsel %vm1403, %v379, %v682
  %v1428 = vsel %vm1403, %v381, %v684
  %v1429 = vsel %vm1403, %v382, %v686
  %v1430 = vsel %vm1403, %v384, %v688
  %v1431 = vsel %vm1403, %v385, %v690
  %v1432 = vsel %vm1403, %v387, %v692
  %v1433 = vsel %vm1403, %v388, %v694
  %v1434 = vsel %vm1403, %v390, %v696
  %v1435 = vsel %vm1403, %v391, %v698
  %vm1436 = vcmask 130048
  %v1437 = vsel %vm1436, %v1404, %v732
  %v1438 = vsel %vm1436, %v1405, %v734
  %v1439 = vsel %vm1436, %v1406, %v736
  %v1440 = vsel %vm1436, %v1407, %v738
  %v1441 = vsel %vm1436, %v1408, %v740
  %v1442 = vsel %vm1436, %v1409, %v742
  %v1443 = vsel %vm1436, %v1410, %v744
  %v1444 = vsel %vm1436, %v1411, %v746
  %v1445 = vsel %vm1436, %v1412, %v748
  %v1446 = vsel %vm1436, %v1413, %v750
  %v1447 = vsel %vm1436, %v1414, %v752
  %v1448 = vsel %vm1436, %v1415, %v754
  %v1449 = vsel %vm1436, %v1416, %v756
  %v1450 = vsel %vm1436, %v1417, %v758
  %v1451 = vsel %vm1436, %v1418, %v760
  %v1452 = vsel %vm1436, %v1419, %v762
  %v1453 = vsel %vm1436, %v1420, %v764
  %v1454 = vsel %vm1436, %v1421, %v766
  %v1455 = vsel %vm1436, %v1422, %v768
  %v1456 = vsel %vm1436, %v1423, %v770
  %v1457 = vsel %vm1436, %v1424, %v772
  %v1458 = vsel %vm1436, %v1425, %v774
  %v1459 = vsel %vm1436, %v1426, %v776
  %v1460 = vsel %vm1436, %v1427, %v778
  %v1461 = vsel %vm1436, %v1428, %v780
  %v1462 = vsel %vm1436, %v1429, %v782
  %v1463 = vsel %vm1436, %v1430, %v784
  %v1464 = vsel %vm1436, %v1431, %v786
  %v1465 = vsel %vm1436, %v1432, %v788
  %v1466 = vsel %vm1436, %v1433, %v790
  %v1467 = vsel %vm1436, %v1434, %v792
  %v1468 = vsel %vm1436, %v1435, %v794
  %vm1469 = vcmask 195584
  %v1470 = vsel %vm1469, %v1437, %v828
  %v1471 = vsel %vm1469, %v1438, %v830
  %v1472 = vsel %vm1469, %v1439, %v832
  %v1473 = vsel %vm1469, %v1440, %v834
  %v1474 = vsel %vm1469, %v1441, %v836
  %v1475 = vsel %vm1469, %v1442, %v838
  %v1476 = vsel %vm1469, %v1443, %v840
  %v1477 = vsel %vm1469, %v1444, %v842
  %v1478 = vsel %vm1469, %v1445, %v844
  %v1479 = vsel %vm1469, %v1446, %v846
  %v1480 = vsel %vm1469, %v1447, %v848
  %v1481 = vsel %vm1469, %v1448, %v850
  %v1482 = vsel %vm1469, %v1449, %v852
  %v1483 = vsel %vm1469, %v1450, %v854
  %v1484 = vsel %vm1469, %v1451, %v856
  %v1485 = vsel %vm1469, %v1452, %v858
  %v1486 = vsel %vm1469, %v1453, %v860
  %v1487 = vsel %vm1469, %v1454, %v862
  %v1488 = vsel %vm1469, %v1455, %v864
  %v1489 = vsel %vm1469, %v1456, %v866
  %v1490 = vsel %vm1469, %v1457, %v868
  %v1491 = vsel %vm1469, %v1458, %v870
  %v1492 = vsel %vm1469, %v1459, %v872
  %v1493 = vsel %vm1469, %v1460, %v874
  %v1494 = vsel %vm1469, %v1461, %v876
  %v1495 = vsel %vm1469, %v1462, %v878
  %v1496 = vsel %vm1469, %v1463, %v880
  %v1497 = vsel %vm1469, %v1464, %v882
  %v1498 = vsel %vm1469, %v1465, %v884
  %v1499 = vsel %vm1469, %v1466, %v886
  %v1500 = vsel %vm1469, %v1467, %v888
  %v1501 = vsel %vm1469, %v1468, %v890
  %vm1502 = vcmask 261120
  %v1503 = vsel %vm1502, %v1470, %v924
  %v1504 = vsel %vm1502, %v1471, %v926
  %v1505 = vsel %vm1502, %v1472, %v928
  %v1506 = vsel %vm1502, %v1473, %v930
  %v1507 = vsel %vm1502, %v1474, %v932
  %v1508 = vsel %vm1502, %v1475, %v934
  %v1509 = vsel %vm1502, %v1476, %v936
  %v1510 = vsel %vm1502, %v1477, %v938
  %v1511 = vsel %vm1502, %v1478, %v940
  %v1512 = vsel %vm1502, %v1479, %v942
  %v1513 = vsel %vm1502, %v1480, %v944
  %v1514 = vsel %vm1502, %v1481, %v946
  %v1515 = vsel %vm1502, %v1482, %v948
  %v1516 = vsel %vm1502, %v1483, %v950
  %v1517 = vsel %vm1502, %v1484, %v952
  %v1518 = vsel %vm1502, %v1485, %v954
  %v1519 = vsel %vm1502, %v1486, %v956
  %v1520 = vsel %vm1502, %v1487, %v958
  %v1521 = vsel %vm1502, %v1488, %v960
  %v1522 = vsel %vm1502, %v1489, %v962
  %v1523 = vsel %vm1502, %v1490, %v964
  %v1524 = vsel %vm1502, %v1491, %v966
  %v1525 = vsel %vm1502, %v1492, %v968
  %v1526 = vsel %vm1502, %v1493, %v970
  %v1527 = vsel %vm1502, %v1494, %v972
  %v1528 = vsel %vm1502, %v1495, %v974
  %v1529 = vsel %vm1502, %v1496, %v976
  %v1530 = vsel %vm1502, %v1497, %v978
  %v1531 = vsel %vm1502, %v1498, %v980
  %v1532 = vsel %vm1502, %v1499, %v982
  %v1533 = vsel %vm1502, %v1500, %v984
  %v1534 = vsel %vm1502, %v1501, %v986
  %vm1535 = vcmask 326656
  %v1536 = vsel %vm1535, %v1503, %v1020
  %v1537 = vsel %vm1535, %v1504, %v1022
  %v1538 = vsel %vm1535, %v1505, %v1024
  %v1539 = vsel %vm1535, %v1506, %v1026
  %v1540 = vsel %vm1535, %v1507, %v1028
  %v1541 = vsel %vm1535, %v1508, %v1030
  %v1542 = vsel %vm1535, %v1509, %v1032
  %v1543 = vsel %vm1535, %v1510, %v1034
  %v1544 = vsel %vm1535, %v1511, %v1036
  %v1545 = vsel %vm1535, %v1512, %v1038
  %v1546 = vsel %vm1535, %v1513, %v1040
  %v1547 = vsel %vm1535, %v1514, %v1042
  %v1548 = vsel %vm1535, %v1515, %v1044
  %v1549 = vsel %vm1535, %v1516, %v1046
  %v1550 = vsel %vm1535, %v1517, %v1048
  %v1551 = vsel %vm1535, %v1518, %v1050
  %v1552 = vsel %vm1535, %v1519, %v1052
  %v1553 = vsel %vm1535, %v1520, %v1054
  %v1554 = vsel %vm1535, %v1521, %v1056
  %v1555 = vsel %vm1535, %v1522, %v1058
  %v1556 = vsel %vm1535, %v1523, %v1060
  %v1557 = vsel %vm1535, %v1524, %v1062
  %v1558 = vsel %vm1535, %v1525, %v1064
  %v1559 = vsel %vm1535, %v1526, %v1066
  %v1560 = vsel %vm1535, %v1527, %v1068
  %v1561 = vsel %vm1535, %v1528, %v1070
  %v1562 = vsel %vm1535, %v1529, %v1072
  %v1563 = vsel %vm1535, %v1530, %v1074
  %v1564 = vsel %vm1535, %v1531, %v1076
  %v1565 = vsel %vm1535, %v1532, %v1078
  %v1566 = vsel %vm1535, %v1533, %v1080
  %v1567 = vsel %vm1535, %v1534, %v1082
  %vm1568 = vcmask 392192
  %v1569 = vsel %vm1568, %v1536, %v1116
  %v1570 = vsel %vm1568, %v1537, %v1118
  %v1571 = vsel %vm1568, %v1538, %v1120
  %v1572 = vsel %vm1568, %v1539, %v1122
  %v1573 = vsel %vm1568, %v1540, %v1124
  %v1574 = vsel %vm1568, %v1541, %v1126
  %v1575 = vsel %vm1568, %v1542, %v1128
  %v1576 = vsel %vm1568, %v1543, %v1130
  %v1577 = vsel %vm1568, %v1544, %v1132
  %v1578 = vsel %vm1568, %v1545, %v1134
  %v1579 = vsel %vm1568, %v1546, %v1136
  %v1580 = vsel %vm1568, %v1547, %v1138
  %v1581 = vsel %vm1568, %v1548, %v1140
  %v1582 = vsel %vm1568, %v1549, %v1142
  %v1583 = vsel %vm1568, %v1550, %v1144
  %v1584 = vsel %vm1568, %v1551, %v1146
  %v1585 = vsel %vm1568, %v1552, %v1148
  %v1586 = vsel %vm1568, %v1553, %v1150
  %v1587 = vsel %vm1568, %v1554, %v1152
  %v1588 = vsel %vm1568, %v1555, %v1154
  %v1589 = vsel %vm1568, %v1556, %v1156
  %v1590 = vsel %vm1568, %v1557, %v1158
  %v1591 = vsel %vm1568, %v1558, %v1160
  %v1592 = vsel %vm1568, %v1559, %v1162
  %v1593 = vsel %vm1568, %v1560, %v1164
  %v1594 = vsel %vm1568, %v1561, %v1166
  %v1595 = vsel %vm1568, %v1562, %v1168
  %v1596 = vsel %vm1568, %v1563, %v1170
  %v1597 = vsel %vm1568, %v1564, %v1172
  %v1598 = vsel %vm1568, %v1565, %v1174
  %v1599 = vsel %vm1568, %v1566, %v1176
  %v1600 = vsel %vm1568, %v1567, %v1178
  %vm1601 = vcmask 457728
  %v1602 = vsel %vm1601, %v1569, %v1212
  %v1603 = vsel %vm1601, %v1570, %v1214
  %v1604 = vsel %vm1601, %v1571, %v1216
  %v1605 = vsel %vm1601, %v1572, %v1218
  %v1606 = vsel %vm1601, %v1573, %v1220
  %v1607 = vsel %vm1601, %v1574, %v1222
  %v1608 = vsel %vm1601, %v1575, %v1224
  %v1609 = vsel %vm1601, %v1576, %v1226
  %v1610 = vsel %vm1601, %v1577, %v1228
  %v1611 = vsel %vm1601, %v1578, %v1230
  %v1612 = vsel %vm1601, %v1579, %v1232
  %v1613 = vsel %vm1601, %v1580, %v1234
  %v1614 = vsel %vm1601, %v1581, %v1236
  %v1615 = vsel %vm1601, %v1582, %v1238
  %v1616 = vsel %vm1601, %v1583, %v1240
  %v1617 = vsel %vm1601, %v1584, %v1242
  %v1618 = vsel %vm1601, %v1585, %v1244
  %v1619 = vsel %vm1601, %v1586, %v1246
  %v1620 = vsel %vm1601, %v1587, %v1248
  %v1621 = vsel %vm1601, %v1588, %v1250
  %v1622 = vsel %vm1601, %v1589, %v1252
  %v1623 = vsel %vm1601, %v1590, %v1254
  %v1624 = vsel %vm1601, %v1591, %v1256
  %v1625 = vsel %vm1601, %v1592, %v1258
  %v1626 = vsel %vm1601, %v1593, %v1260
  %v1627 = vsel %vm1601, %v1594, %v1262
  %v1628 = vsel %vm1601, %v1595, %v1264
  %v1629 = vsel %vm1601, %v1596, %v1266
  %v1630 = vsel %vm1601, %v1597, %v1268
  %v1631 = vsel %vm1601, %v1598, %v1270
  %v1632 = vsel %vm1601, %v1599, %v1272
  %v1633 = vsel %vm1601, %v1600, %v1274
  %vm1634 = vcmask 523264
  %v1635 = vsel %vm1634, %v1602, %v1308
  %v1636 = vsel %vm1634, %v1603, %v1310
  %v1637 = vsel %vm1634, %v1604, %v1312
  %v1638 = vsel %vm1634, %v1605, %v1314
  %v1639 = vsel %vm1634, %v1606, %v1316
  %v1640 = vsel %vm1634, %v1607, %v1318
  %v1641 = vsel %vm1634, %v1608, %v1320
  %v1642 = vsel %vm1634, %v1609, %v1322
  %v1643 = vsel %vm1634, %v1610, %v1324
  %v1644 = vsel %vm1634, %v1611, %v1326
  %v1645 = vsel %vm1634, %v1612, %v1328
  %v1646 = vsel %vm1634, %v1613, %v1330
  %v1647 = vsel %vm1634, %v1614, %v1332
  %v1648 = vsel %vm1634, %v1615, %v1334
  %v1649 = vsel %vm1634, %v1616, %v1336
  %v1650 = vsel %vm1634, %v1617, %v1338
  %v1651 = vsel %vm1634, %v1618, %v1340
  %v1652 = vsel %vm1634, %v1619, %v1342
  %v1653 = vsel %vm1634, %v1620, %v1344
  %v1654 = vsel %vm1634, %v1621, %v1346
  %v1655 = vsel %vm1634, %v1622, %v1348
  %v1656 = vsel %vm1634, %v1623, %v1350
  %v1657 = vsel %vm1634, %v1624, %v1352
  %v1658 = vsel %vm1634, %v1625, %v1354
  %v1659 = vsel %vm1634, %v1626, %v1356
  %v1660 = vsel %vm1634, %v1627, %v1358
  %v1661 = vsel %vm1634, %v1628, %v1360
  %v1662 = vsel %vm1634, %v1629, %v1362
  %v1663 = vsel %vm1634, %v1630, %v1364
  %v1664 = vsel %vm1634, %v1631, %v1366
  %v1665 = vsel %vm1634, %v1632, %v1368
  %v1666 = vsel %vm1634, %v1633, %v1370
  %s1667 = scalar_lea.vmem %s0, 432
  %v1668 = vld [vmem:[%s1667] sm:$0xff]
  %v1669 = vld [vmem:[%s1667 + $0x8] sm:$0xff]
  %v1670 = vld [vmem:[%s1667 + $0x10] sm:$0x3]
  %v1671 = vld [vmem:[%s1667 + $0x18] sm:$0xff]
  %v1672 = vld [vmem:[%s1667 + $0x20] sm:$0xff]
  %v1673 = vld [vmem:[%s1667 + $0x28] sm:$0x3]
  %v1674 = vld [vmem:[%s1667 + $0x30] sm:$0xff]
  %v1675 = vld [vmem:[%s1667 + $0x38] sm:$0xff]
  %v1676 = vld [vmem:[%s1667 + $0x40] sm:$0x3]
  %v1677 = vld [vmem:[%s1667 + $0x48] sm:$0xff]
  %v1678 = vld [vmem:[%s1667 + $0x50] sm:$0xff]
  %v1679 = vld [vmem:[%s1667 + $0x58] sm:$0x3]
  %v1680 = vld [vmem:[%s1667 + $0x60] sm:$0xff]
  %v1681 = vld [vmem:[%s1667 + $0x68] sm:$0xff]
  %v1682 = vld [vmem:[%s1667 + $0x70] sm:$0x3]
  %v1683 = vld [vmem:[%s1667 + $0x78] sm:$0xff]
  %v1684 = vld [vmem:[%s1667 + $0x80] sm:$0xff]
  %v1685 = vld [vmem:[%s1667 + $0x88] sm:$0x3]
  %v1686 = vld [vmem:[%s1667 + $0x90] sm:$0xff]
  %v1687 = vld [vmem:[%s1667 + $0x98] sm:$0xff]
  %v1688 = vld [vmem:[%s1667 + $0xa0] sm:$0x3]
  %v1689 = vld [vmem:[%s1667 + $0xa8] sm:$0xff]
  %v1690 = vld [vmem:[%s1667 + $0xb0] sm:$0xff]
  %v1691 = vld [vmem:[%s1667 + $0xb8] sm:$0x3]
  %v1692 = vld [vmem:[%s1667 + $0xc0] sm:$0xff]
  %v1693 = vld [vmem:[%s1667 + $0xc8] sm:$0xff]
  %v1694 = vld [vmem:[%s1667 + $0xd0] sm:$0x3]
  %v1695 = vld [vmem:[%s1667 + $0xd8] sm:$0xff]
  %v1696 = vld [vmem:[%s1667 + $0xe0] sm:$0xff]
  %v1697 = vld [vmem:[%s1667 + $0xe8] sm:$0x3]
  %v1698 = vld [vmem:[%s1667 + $0xf0] sm:$0xff]
  %v1699 = vld [vmem:[%s1667 + $0xf8] sm:$0xff]
  %v1700 = vld [vmem:[%s1667 + $0x100] sm:$0x3]
  %v1701 = vld [vmem:[%s1667 + $0x108] sm:$0xff]
  %v1702 = vld [vmem:[%s1667 + $0x110] sm:$0xff]
  %v1703 = vld [vmem:[%s1667 + $0x118] sm:$0x3]
  %v1704 = vld [vmem:[%s1667 + $0x120] sm:$0xff]
  %v1705 = vld [vmem:[%s1667 + $0x128] sm:$0xff]
  %v1706 = vld [vmem:[%s1667 + $0x130] sm:$0x3]
  %v1707 = vld [vmem:[%s1667 + $0x138] sm:$0xff]
  %v1708 = vld [vmem:[%s1667 + $0x140] sm:$0xff]
  %v1709 = vld [vmem:[%s1667 + $0x148] sm:$0x3]
  %v1710 = vld [vmem:[%s1667 + $0x150] sm:$0xff]
  %v1711 = vld [vmem:[%s1667 + $0x158] sm:$0xff]
  %v1712 = vld [vmem:[%s1667 + $0x160] sm:$0x3]
  %v1713 = vld [vmem:[%s1667 + $0x168] sm:$0xff]
  %v1714 = vld [vmem:[%s1667 + $0x170] sm:$0xff]
  %v1715 = vld [vmem:[%s1667 + $0x178] sm:$0x3]
  %v1716 = vld [vmem:[%s1667 + $0x180] sm:$0xff]
  %v1717 = vld [vmem:[%s1667 + $0x188] sm:$0xff]
  %v1718 = vld [vmem:[%s1667 + $0x190] sm:$0x3]
  %v1719 = vld [vmem:[%s1667 + $0x198] sm:$0xff]
  %v1720 = vld [vmem:[%s1667 + $0x1a0] sm:$0xff]
  %v1721 = vld [vmem:[%s1667 + $0x1a8] sm:$0x3]
  %s1722 = scalar_lea.vmem %s1, 432
  %v1723 = vld [vmem:[%s1722] sm:$0xff]
  %v1724 = vld [vmem:[%s1722 + $0x8] sm:$0xff]
  %v1725 = vld [vmem:[%s1722 + $0x10] sm:$0x3]
  %v1726 = vld [vmem:[%s1722 + $0x18] sm:$0xff]
  %v1727 = vld [vmem:[%s1722 + $0x20] sm:$0xff]
  %v1728 = vld [vmem:[%s1722 + $0x28] sm:$0x3]
  %v1729 = vld [vmem:[%s1722 + $0x30] sm:$0xff]
  %v1730 = vld [vmem:[%s1722 + $0x38] sm:$0xff]
  %v1731 = vld [vmem:[%s1722 + $0x40] sm:$0x3]
  %v1732 = vld [vmem:[%s1722 + $0x48] sm:$0xff]
  %v1733 = vld [vmem:[%s1722 + $0x50] sm:$0xff]
  %v1734 = vld [vmem:[%s1722 + $0x58] sm:$0x3]
  %v1735 = vld [vmem:[%s1722 + $0x60] sm:$0xff]
  %v1736 = vld [vmem:[%s1722 + $0x68] sm:$0xff]
  %v1737 = vld [vmem:[%s1722 + $0x70] sm:$0x3]
  %v1738 = vld [vmem:[%s1722 + $0x78] sm:$0xff]
  %v1739 = vld [vmem:[%s1722 + $0x80] sm:$0xff]
  %v1740 = vld [vmem:[%s1722 + $0x88] sm:$0x3]
  %v1741 = vld [vmem:[%s1722 + $0x90] sm:$0xff]
  %v1742 = vld [vmem:[%s1722 + $0x98] sm:$0xff]
  %v1743 = vld [vmem:[%s1722 + $0xa0] sm:$0x3]
  %v1744 = vld [vmem:[%s1722 + $0xa8] sm:$0xff]
  %v1745 = vld [vmem:[%s1722 + $0xb0] sm:$0xff]
  %v1746 = vld [vmem:[%s1722 + $0xb8] sm:$0x3]
  %v1747 = vld [vmem:[%s1722 + $0xc0] sm:$0xff]
  %v1748 = vld [vmem:[%s1722 + $0xc8] sm:$0xff]
  %v1749 = vld [vmem:[%s1722 + $0xd0] sm:$0x3]
  %v1750 = vld [vmem:[%s1722 + $0xd8] sm:$0xff]
  %v1751 = vld [vmem:[%s1722 + $0xe0] sm:$0xff]
  %v1752 = vld [vmem:[%s1722 + $0xe8] sm:$0x3]
  %v1753 = vld [vmem:[%s1722 + $0xf0] sm:$0xff]
  %v1754 = vld [vmem:[%s1722 + $0xf8] sm:$0xff]
  %v1755 = vld [vmem:[%s1722 + $0x100] sm:$0x3]
  %v1756 = vld [vmem:[%s1722 + $0x108] sm:$0xff]
  %v1757 = vld [vmem:[%s1722 + $0x110] sm:$0xff]
  %v1758 = vld [vmem:[%s1722 + $0x118] sm:$0x3]
  %v1759 = vld [vmem:[%s1722 + $0x120] sm:$0xff]
  %v1760 = vld [vmem:[%s1722 + $0x128] sm:$0xff]
  %v1761 = vld [vmem:[%s1722 + $0x130] sm:$0x3]
  %v1762 = vld [vmem:[%s1722 + $0x138] sm:$0xff]
  %v1763 = vld [vmem:[%s1722 + $0x140] sm:$0xff]
  %v1764 = vld [vmem:[%s1722 + $0x148] sm:$0x3]
  %v1765 = vld [vmem:[%s1722 + $0x150] sm:$0xff]
  %v1766 = vld [vmem:[%s1722 + $0x158] sm:$0xff]
  %v1767 = vld [vmem:[%s1722 + $0x160] sm:$0x3]
  %v1768 = vld [vmem:[%s1722 + $0x168] sm:$0xff]
  %v1769 = vld [vmem:[%s1722 + $0x170] sm:$0xff]
  %v1770 = vld [vmem:[%s1722 + $0x178] sm:$0x3]
  %v1771 = vld [vmem:[%s1722 + $0x180] sm:$0xff]
  %v1772 = vld [vmem:[%s1722 + $0x188] sm:$0xff]
  %v1773 = vld [vmem:[%s1722 + $0x190] sm:$0x3]
  %v1774 = vld [vmem:[%s1722 + $0x198] sm:$0xff]
  %v1775 = vld [vmem:[%s1722 + $0x1a0] sm:$0xff]
  %v1776 = vld [vmem:[%s1722 + $0x1a8] sm:$0x3]
  %1831 = vrot.lane.b32.xlu0 %v1723, 4
  %v1832 = vpop.permute.xlu0 %1831
  %1833 = vrot.lane.b32.xlu0 %v1724, 4
  %v1834 = vpop.permute.xlu0 %1833
  %1835 = vrot.lane.b32.xlu0 %v1725, 4
  %v1836 = vpop.permute.xlu0 %1835
  %1837 = vrot.lane.b32.xlu0 %v1726, 4
  %v1838 = vpop.permute.xlu0 %1837
  %1839 = vrot.lane.b32.xlu0 %v1727, 4
  %v1840 = vpop.permute.xlu0 %1839
  %1841 = vrot.lane.b32.xlu0 %v1728, 4
  %v1842 = vpop.permute.xlu0 %1841
  %1843 = vrot.lane.b32.xlu0 %v1729, 4
  %v1844 = vpop.permute.xlu0 %1843
  %1845 = vrot.lane.b32.xlu0 %v1730, 4
  %v1846 = vpop.permute.xlu0 %1845
  %1847 = vrot.lane.b32.xlu0 %v1731, 4
  %v1848 = vpop.permute.xlu0 %1847
  %1849 = vrot.lane.b32.xlu0 %v1732, 4
  %v1850 = vpop.permute.xlu0 %1849
  %1851 = vrot.lane.b32.xlu0 %v1733, 4
  %v1852 = vpop.permute.xlu0 %1851
  %1853 = vrot.lane.b32.xlu0 %v1734, 4
  %v1854 = vpop.permute.xlu0 %1853
  %1855 = vrot.lane.b32.xlu0 %v1735, 4
  %v1856 = vpop.permute.xlu0 %1855
  %1857 = vrot.lane.b32.xlu0 %v1736, 4
  %v1858 = vpop.permute.xlu0 %1857
  %1859 = vrot.lane.b32.xlu0 %v1737, 4
  %v1860 = vpop.permute.xlu0 %1859
  %1861 = vrot.lane.b32.xlu0 %v1738, 4
  %v1862 = vpop.permute.xlu0 %1861
  %1863 = vrot.lane.b32.xlu0 %v1739, 4
  %v1864 = vpop.permute.xlu0 %1863
  %1865 = vrot.lane.b32.xlu0 %v1740, 4
  %v1866 = vpop.permute.xlu0 %1865
  %1867 = vrot.lane.b32.xlu0 %v1741, 4
  %v1868 = vpop.permute.xlu0 %1867
  %1869 = vrot.lane.b32.xlu0 %v1742, 4
  %v1870 = vpop.permute.xlu0 %1869
  %1871 = vrot.lane.b32.xlu0 %v1743, 4
  %v1872 = vpop.permute.xlu0 %1871
  %1873 = vrot.lane.b32.xlu0 %v1744, 4
  %v1874 = vpop.permute.xlu0 %1873
  %1875 = vrot.lane.b32.xlu0 %v1745, 4
  %v1876 = vpop.permute.xlu0 %1875
  %1877 = vrot.lane.b32.xlu0 %v1746, 4
  %v1878 = vpop.permute.xlu0 %1877
  %1879 = vrot.lane.b32.xlu0 %v1747, 4
  %v1880 = vpop.permute.xlu0 %1879
  %1881 = vrot.lane.b32.xlu0 %v1748, 4
  %v1882 = vpop.permute.xlu0 %1881
  %1883 = vrot.lane.b32.xlu0 %v1749, 4
  %v1884 = vpop.permute.xlu0 %1883
  %1885 = vrot.lane.b32.xlu0 %v1750, 4
  %v1886 = vpop.permute.xlu0 %1885
  %1887 = vrot.lane.b32.xlu0 %v1751, 4
  %v1888 = vpop.permute.xlu0 %1887
  %1889 = vrot.lane.b32.xlu0 %v1752, 4
  %v1890 = vpop.permute.xlu0 %1889
  %1891 = vrot.lane.b32.xlu0 %v1753, 4
  %v1892 = vpop.permute.xlu0 %1891
  %1893 = vrot.lane.b32.xlu0 %v1754, 4
  %v1894 = vpop.permute.xlu0 %1893
  %1895 = vrot.lane.b32.xlu0 %v1755, 4
  %v1896 = vpop.permute.xlu0 %1895
  %1897 = vrot.lane.b32.xlu0 %v1756, 4
  %v1898 = vpop.permute.xlu0 %1897
  %1899 = vrot.lane.b32.xlu0 %v1757, 4
  %v1900 = vpop.permute.xlu0 %1899
  %1901 = vrot.lane.b32.xlu0 %v1758, 4
  %v1902 = vpop.permute.xlu0 %1901
  %1903 = vrot.lane.b32.xlu0 %v1759, 4
  %v1904 = vpop.permute.xlu0 %1903
  %1905 = vrot.lane.b32.xlu0 %v1760, 4
  %v1906 = vpop.permute.xlu0 %1905
  %1907 = vrot.lane.b32.xlu0 %v1761, 4
  %v1908 = vpop.permute.xlu0 %1907
  %1909 = vrot.lane.b32.xlu0 %v1762, 4
  %v1910 = vpop.permute.xlu0 %1909
  %1911 = vrot.lane.b32.xlu0 %v1763, 4
  %v1912 = vpop.permute.xlu0 %1911
  %1913 = vrot.lane.b32.xlu0 %v1764, 4
  %v1914 = vpop.permute.xlu0 %1913
  %1915 = vrot.lane.b32.xlu0 %v1765, 4
  %v1916 = vpop.permute.xlu0 %1915
  %1917 = vrot.lane.b32.xlu0 %v1766, 4
  %v1918 = vpop.permute.xlu0 %1917
  %1919 = vrot.lane.b32.xlu0 %v1767, 4
  %v1920 = vpop.permute.xlu0 %1919
  %1921 = vrot.lane.b32.xlu0 %v1768, 4
  %v1922 = vpop.permute.xlu0 %1921
  %1923 = vrot.lane.b32.xlu0 %v1769, 4
  %v1924 = vpop.permute.xlu0 %1923
  %1925 = vrot.lane.b32.xlu0 %v1770, 4
  %v1926 = vpop.permute.xlu0 %1925
  %1927 = vrot.lane.b32.xlu0 %v1771, 4
  %v1928 = vpop.permute.xlu0 %1927
  %1929 = vrot.lane.b32.xlu0 %v1772, 4
  %v1930 = vpop.permute.xlu0 %1929
  %1931 = vrot.lane.b32.xlu0 %v1773, 4
  %v1932 = vpop.permute.xlu0 %1931
  %1933 = vrot.lane.b32.xlu0 %v1774, 4
  %v1934 = vpop.permute.xlu0 %1933
  %1935 = vrot.lane.b32.xlu0 %v1775, 4
  %v1936 = vpop.permute.xlu0 %1935
  %1937 = vrot.lane.b32.xlu0 %v1776, 4
  %v1938 = vpop.permute.xlu0 %1937
  %v1993 = vsel %vm344, %v1668, %v1832
  %v1994 = vsel %vm344, %v1669, %v1834
  %v1995 = vsel %vm344, %v1670, %v1836
  %v1996 = vsel %vm344, %v1671, %v1838
  %v1997 = vsel %vm344, %v1672, %v1840
  %v1998 = vsel %vm344, %v1673, %v1842
  %v1999 = vsel %vm344, %v1674, %v1844
  %v2000 = vsel %vm344, %v1675, %v1846
  %v2001 = vsel %vm344, %v1676, %v1848
  %v2002 = vsel %vm344, %v1677, %v1850
  %v2003 = vsel %vm344, %v1678, %v1852
  %v2004 = vsel %vm344, %v1679, %v1854
  %v2005 = vsel %vm344, %v1680, %v1856
  %v2006 = vsel %vm344, %v1681, %v1858
  %v2007 = vsel %vm344, %v1682, %v1860
  %v2008 = vsel %vm344, %v1683, %v1862
  %v2009 = vsel %vm344, %v1684, %v1864
  %v2010 = vsel %vm344, %v1685, %v1866
  %v2011 = vsel %vm344, %v1686, %v1868
  %v2012 = vsel %vm344, %v1687, %v1870
  %v2013 = vsel %vm344, %v1688, %v1872
  %v2014 = vsel %vm344, %v1689, %v1874
  %v2015 = vsel %vm344, %v1690, %v1876
  %v2016 = vsel %vm344, %v1691, %v1878
  %v2017 = vsel %vm344, %v1692, %v1880
  %v2018 = vsel %vm344, %v1693, %v1882
  %v2019 = vsel %vm344, %v1694, %v1884
  %v2020 = vsel %vm344, %v1695, %v1886
  %v2021 = vsel %vm344, %v1696, %v1888
  %v2022 = vsel %vm344, %v1697, %v1890
  %v2023 = vsel %vm344, %v1698, %v1892
  %v2024 = vsel %vm344, %v1699, %v1894
  %v2025 = vsel %vm344, %v1700, %v1896
  %v2026 = vsel %vm344, %v1701, %v1898
  %v2027 = vsel %vm344, %v1702, %v1900
  %v2028 = vsel %vm344, %v1703, %v1902
  %v2029 = vsel %vm344, %v1704, %v1904
  %v2030 = vsel %vm344, %v1705, %v1906
  %v2031 = vsel %vm344, %v1706, %v1908
  %v2032 = vsel %vm344, %v1707, %v1910
  %v2033 = vsel %vm344, %v1708, %v1912
  %v2034 = vsel %vm344, %v1709, %v1914
  %v2035 = vsel %vm344, %v1710, %v1916
  %v2036 = vsel %vm344, %v1711, %v1918
  %v2037 = vsel %vm344, %v1712, %v1920
  %v2038 = vsel %vm344, %v1713, %v1922
  %v2039 = vsel %vm344, %v1714, %v1924
  %v2040 = vsel %vm344, %v1715, %v1926
  %v2041 = vsel %vm344, %v1716, %v1928
  %v2042 = vsel %vm344, %v1717, %v1930
  %v2043 = vsel %vm344, %v1718, %v1932
  %v2044 = vsel %vm344, %v1719, %v1934
  %v2045 = vsel %vm344, %v1720, %v1936
  %v2046 = vsel %vm344, %v1721, %v1938
  %v2095 = vrot.slane %v1993, 1
  %v2096 = vrot.slane %v1994, 1
  %v2097 = vsel %vm447, %v2095, %v2096
  %v2098 = vrot.slane %v1995, 1
  %v2099 = vsel %vm447, %v2096, %v2098
  %v2100 = vrot.slane %v1996, 1
  %v2101 = vrot.slane %v1997, 1
  %v2102 = vsel %vm447, %v2100, %v2101
  %v2103 = vrot.slane %v1998, 1
  %v2104 = vsel %vm447, %v2101, %v2103
  %v2105 = vrot.slane %v1999, 1
  %v2106 = vrot.slane %v2000, 1
  %v2107 = vsel %vm447, %v2105, %v2106
  %v2108 = vrot.slane %v2001, 1
  %v2109 = vsel %vm447, %v2106, %v2108
  %v2110 = vrot.slane %v2002, 1
  %v2111 = vrot.slane %v2003, 1
  %v2112 = vsel %vm447, %v2110, %v2111
  %v2113 = vrot.slane %v2004, 1
  %v2114 = vsel %vm447, %v2111, %v2113
  %v2115 = vrot.slane %v2005, 1
  %v2116 = vrot.slane %v2006, 1
  %v2117 = vsel %vm447, %v2115, %v2116
  %v2118 = vrot.slane %v2007, 1
  %v2119 = vsel %vm447, %v2116, %v2118
  %v2120 = vrot.slane %v2008, 1
  %v2121 = vrot.slane %v2009, 1
  %v2122 = vsel %vm447, %v2120, %v2121
  %v2123 = vrot.slane %v2010, 1
  %v2124 = vsel %vm447, %v2121, %v2123
  %v2125 = vrot.slane %v2011, 1
  %v2126 = vrot.slane %v2012, 1
  %v2127 = vsel %vm447, %v2125, %v2126
  %v2128 = vrot.slane %v2013, 1
  %v2129 = vsel %vm447, %v2126, %v2128
  %v2130 = vrot.slane %v2014, 1
  %v2131 = vrot.slane %v2015, 1
  %v2132 = vsel %vm447, %v2130, %v2131
  %v2133 = vrot.slane %v2016, 1
  %v2134 = vsel %vm447, %v2131, %v2133
  %v2135 = vrot.slane %v2017, 1
  %v2136 = vrot.slane %v2018, 1
  %v2137 = vsel %vm447, %v2135, %v2136
  %v2138 = vrot.slane %v2019, 1
  %v2139 = vsel %vm447, %v2136, %v2138
  %v2140 = vrot.slane %v2020, 1
  %v2141 = vrot.slane %v2021, 1
  %v2142 = vsel %vm447, %v2140, %v2141
  %v2143 = vrot.slane %v2022, 1
  %v2144 = vsel %vm447, %v2141, %v2143
  %v2145 = vrot.slane %v2023, 1
  %v2146 = vrot.slane %v2024, 1
  %v2147 = vsel %vm447, %v2145, %v2146
  %v2148 = vrot.slane %v2025, 1
  %v2149 = vsel %vm447, %v2146, %v2148
  %v2150 = vrot.slane %v2026, 1
  %v2151 = vrot.slane %v2027, 1
  %v2152 = vsel %vm447, %v2150, %v2151
  %v2153 = vrot.slane %v2028, 1
  %v2154 = vsel %vm447, %v2151, %v2153
  %v2155 = vrot.slane %v2029, 1
  %v2156 = vrot.slane %v2030, 1
  %v2157 = vsel %vm447, %v2155, %v2156
  %v2158 = vrot.slane %v2031, 1
  %v2159 = vsel %vm447, %v2156, %v2158
  %v2160 = vrot.slane %v2032, 1
  %v2161 = vrot.slane %v2033, 1
  %v2162 = vsel %vm447, %v2160, %v2161
  %v2163 = vrot.slane %v2034, 1
  %v2164 = vsel %vm447, %v2161, %v2163
  %v2165 = vrot.slane %v2035, 1
  %v2166 = vrot.slane %v2036, 1
  %v2167 = vsel %vm447, %v2165, %v2166
  %v2168 = vrot.slane %v2037, 1
  %v2169 = vsel %vm447, %v2166, %v2168
  %v2170 = vrot.slane %v2038, 1
  %v2171 = vrot.slane %v2039, 1
  %v2172 = vsel %vm447, %v2170, %v2171
  %v2173 = vrot.slane %v2040, 1
  %v2174 = vsel %vm447, %v2171, %v2173
  %v2175 = vrot.slane %v1993, 2
  %v2176 = vrot.slane %v1994, 2
  %v2177 = vsel %vm528, %v2175, %v2176
  %v2178 = vrot.slane %v1995, 2
  %v2179 = vsel %vm528, %v2176, %v2178
  %v2180 = vrot.slane %v1996, 2
  %v2181 = vrot.slane %v1997, 2
  %v2182 = vsel %vm528, %v2180, %v2181
  %v2183 = vrot.slane %v1998, 2
  %v2184 = vsel %vm528, %v2181, %v2183
  %v2185 = vrot.slane %v1999, 2
  %v2186 = vrot.slane %v2000, 2
  %v2187 = vsel %vm528, %v2185, %v2186
  %v2188 = vrot.slane %v2001, 2
  %v2189 = vsel %vm528, %v2186, %v2188
  %v2190 = vrot.slane %v2002, 2
  %v2191 = vrot.slane %v2003, 2
  %v2192 = vsel %vm528, %v2190, %v2191
  %v2193 = vrot.slane %v2004, 2
  %v2194 = vsel %vm528, %v2191, %v2193
  %v2195 = vrot.slane %v2005, 2
  %v2196 = vrot.slane %v2006, 2
  %v2197 = vsel %vm528, %v2195, %v2196
  %v2198 = vrot.slane %v2007, 2
  %v2199 = vsel %vm528, %v2196, %v2198
  %v2200 = vrot.slane %v2008, 2
  %v2201 = vrot.slane %v2009, 2
  %v2202 = vsel %vm528, %v2200, %v2201
  %v2203 = vrot.slane %v2010, 2
  %v2204 = vsel %vm528, %v2201, %v2203
  %v2205 = vrot.slane %v2011, 2
  %v2206 = vrot.slane %v2012, 2
  %v2207 = vsel %vm528, %v2205, %v2206
  %v2208 = vrot.slane %v2013, 2
  %v2209 = vsel %vm528, %v2206, %v2208
  %v2210 = vrot.slane %v2014, 2
  %v2211 = vrot.slane %v2015, 2
  %v2212 = vsel %vm528, %v2210, %v2211
  %v2213 = vrot.slane %v2016, 2
  %v2214 = vsel %vm528, %v2211, %v2213
  %v2215 = vrot.slane %v2017, 2
  %v2216 = vrot.slane %v2018, 2
  %v2217 = vsel %vm528, %v2215, %v2216
  %v2218 = vrot.slane %v2019, 2
  %v2219 = vsel %vm528, %v2216, %v2218
  %v2220 = vrot.slane %v2020, 2
  %v2221 = vrot.slane %v2021, 2
  %v2222 = vsel %vm528, %v2220, %v2221
  %v2223 = vrot.slane %v2022, 2
  %v2224 = vsel %vm528, %v2221, %v2223
  %v2225 = vrot.slane %v2023, 2
  %v2226 = vrot.slane %v2024, 2
  %v2227 = vsel %vm528, %v2225, %v2226
  %v2228 = vrot.slane %v2025, 2
  %v2229 = vsel %vm528, %v2226, %v2228
  %v2230 = vrot.slane %v2026, 2
  %v2231 = vrot.slane %v2027, 2
  %v2232 = vsel %vm528, %v2230, %v2231
  %v2233 = vrot.slane %v2028, 2
  %v2234 = vsel %vm528, %v2231, %v2233
  %v2235 = vrot.slane %v2029, 2
  %v2236 = vrot.slane %v2030, 2
  %v2237 = vsel %vm528, %v2235, %v2236
  %v2238 = vrot.slane %v2031, 2
  %v2239 = vsel %vm528, %v2236, %v2238
  %v2240 = vrot.slane %v2032, 2
  %v2241 = vrot.slane %v2033, 2
  %v2242 = vsel %vm528, %v2240, %v2241
  %v2243 = vrot.slane %v2034, 2
  %v2244 = vsel %vm528, %v2241, %v2243
  %v2245 = vrot.slane %v2035, 2
  %v2246 = vrot.slane %v2036, 2
  %v2247 = vsel %vm528, %v2245, %v2246
  %v2248 = vrot.slane %v2037, 2
  %v2249 = vsel %vm528, %v2246, %v2248
  %v2250 = vrot.slane %v2038, 2
  %v2251 = vrot.slane %v2039, 2
  %v2252 = vsel %vm528, %v2250, %v2251
  %v2253 = vrot.slane %v2040, 2
  %v2254 = vsel %vm528, %v2251, %v2253
  %v2258 = vrot.slane %v2041, 1
  %v2259 = vrot.slane %v2042, 1
  %v2260 = vsel %vm447, %v2258, %v2259
  %v2261 = vrot.slane %v2043, 1
  %v2262 = vsel %vm447, %v2259, %v2261
  %v2263 = vrot.slane %v2041, 2
  %v2264 = vrot.slane %v2042, 2
  %v2265 = vsel %vm528, %v2263, %v2264
  %v2266 = vrot.slane %v2043, 2
  %v2267 = vsel %vm528, %v2264, %v2266
  %v2271 = vrot.slane %v2044, 1
  %v2272 = vrot.slane %v2045, 1
  %v2273 = vsel %vm447, %v2271, %v2272
  %v2274 = vrot.slane %v2046, 1
  %v2275 = vsel %vm447, %v2272, %v2274
  %v2276 = vrot.slane %v2044, 2
  %v2277 = vrot.slane %v2045, 2
  %v2278 = vsel %vm528, %v2276, %v2277
  %v2279 = vrot.slane %v2046, 2
  %v2280 = vsel %vm528, %v2277, %v2279
  %2281 = vrot.lane.b32.xlu0 %v2097, 8
  %v2282 = vpop.permute.xlu0 %2281
  %2283 = vrot.lane.b32.xlu0 %v2099, 8
  %v2284 = vpop.permute.xlu0 %2283
  %2285 = vrot.lane.b32.xlu0 %v2102, 8
  %v2286 = vpop.permute.xlu0 %2285
  %2287 = vrot.lane.b32.xlu0 %v2104, 8
  %v2288 = vpop.permute.xlu0 %2287
  %2289 = vrot.lane.b32.xlu0 %v2107, 8
  %v2290 = vpop.permute.xlu0 %2289
  %2291 = vrot.lane.b32.xlu0 %v2109, 8
  %v2292 = vpop.permute.xlu0 %2291
  %2293 = vrot.lane.b32.xlu0 %v2112, 8
  %v2294 = vpop.permute.xlu0 %2293
  %2295 = vrot.lane.b32.xlu0 %v2114, 8
  %v2296 = vpop.permute.xlu0 %2295
  %2297 = vrot.lane.b32.xlu0 %v2117, 8
  %v2298 = vpop.permute.xlu0 %2297
  %2299 = vrot.lane.b32.xlu0 %v2119, 8
  %v2300 = vpop.permute.xlu0 %2299
  %2301 = vrot.lane.b32.xlu0 %v2122, 8
  %v2302 = vpop.permute.xlu0 %2301
  %2303 = vrot.lane.b32.xlu0 %v2124, 8
  %v2304 = vpop.permute.xlu0 %2303
  %2305 = vrot.lane.b32.xlu0 %v2127, 8
  %v2306 = vpop.permute.xlu0 %2305
  %2307 = vrot.lane.b32.xlu0 %v2129, 8
  %v2308 = vpop.permute.xlu0 %2307
  %2309 = vrot.lane.b32.xlu0 %v2132, 8
  %v2310 = vpop.permute.xlu0 %2309
  %2311 = vrot.lane.b32.xlu0 %v2134, 8
  %v2312 = vpop.permute.xlu0 %2311
  %2313 = vrot.lane.b32.xlu0 %v2137, 8
  %v2314 = vpop.permute.xlu0 %2313
  %2315 = vrot.lane.b32.xlu0 %v2139, 8
  %v2316 = vpop.permute.xlu0 %2315
  %2317 = vrot.lane.b32.xlu0 %v2142, 8
  %v2318 = vpop.permute.xlu0 %2317
  %2319 = vrot.lane.b32.xlu0 %v2144, 8
  %v2320 = vpop.permute.xlu0 %2319
  %2321 = vrot.lane.b32.xlu0 %v2147, 8
  %v2322 = vpop.permute.xlu0 %2321
  %2323 = vrot.lane.b32.xlu0 %v2149, 8
  %v2324 = vpop.permute.xlu0 %2323
  %2325 = vrot.lane.b32.xlu0 %v2152, 8
  %v2326 = vpop.permute.xlu0 %2325
  %2327 = vrot.lane.b32.xlu0 %v2154, 8
  %v2328 = vpop.permute.xlu0 %2327
  %2329 = vrot.lane.b32.xlu0 %v2157, 8
  %v2330 = vpop.permute.xlu0 %2329
  %2331 = vrot.lane.b32.xlu0 %v2159, 8
  %v2332 = vpop.permute.xlu0 %2331
  %2333 = vrot.lane.b32.xlu0 %v2162, 8
  %v2334 = vpop.permute.xlu0 %2333
  %2335 = vrot.lane.b32.xlu0 %v2164, 8
  %v2336 = vpop.permute.xlu0 %2335
  %2337 = vrot.lane.b32.xlu0 %v2167, 8
  %v2338 = vpop.permute.xlu0 %2337
  %2339 = vrot.lane.b32.xlu0 %v2169, 8
  %v2340 = vpop.permute.xlu0 %2339
  %2341 = vrot.lane.b32.xlu0 %v2172, 8
  %v2342 = vpop.permute.xlu0 %2341
  %2343 = vrot.lane.b32.xlu0 %v2174, 8
  %v2344 = vpop.permute.xlu0 %2343
  %2377 = vrot.lane.b32.xlu0 %v2177, 16
  %v2378 = vpop.permute.xlu0 %2377
  %2379 = vrot.lane.b32.xlu0 %v2179, 16
  %v2380 = vpop.permute.xlu0 %2379
  %2381 = vrot.lane.b32.xlu0 %v2182, 16
  %v2382 = vpop.permute.xlu0 %2381
  %2383 = vrot.lane.b32.xlu0 %v2184, 16
  %v2384 = vpop.permute.xlu0 %2383
  %2385 = vrot.lane.b32.xlu0 %v2187, 16
  %v2386 = vpop.permute.xlu0 %2385
  %2387 = vrot.lane.b32.xlu0 %v2189, 16
  %v2388 = vpop.permute.xlu0 %2387
  %2389 = vrot.lane.b32.xlu0 %v2192, 16
  %v2390 = vpop.permute.xlu0 %2389
  %2391 = vrot.lane.b32.xlu0 %v2194, 16
  %v2392 = vpop.permute.xlu0 %2391
  %2393 = vrot.lane.b32.xlu0 %v2197, 16
  %v2394 = vpop.permute.xlu0 %2393
  %2395 = vrot.lane.b32.xlu0 %v2199, 16
  %v2396 = vpop.permute.xlu0 %2395
  %2397 = vrot.lane.b32.xlu0 %v2202, 16
  %v2398 = vpop.permute.xlu0 %2397
  %2399 = vrot.lane.b32.xlu0 %v2204, 16
  %v2400 = vpop.permute.xlu0 %2399
  %2401 = vrot.lane.b32.xlu0 %v2207, 16
  %v2402 = vpop.permute.xlu0 %2401
  %2403 = vrot.lane.b32.xlu0 %v2209, 16
  %v2404 = vpop.permute.xlu0 %2403
  %2405 = vrot.lane.b32.xlu0 %v2212, 16
  %v2406 = vpop.permute.xlu0 %2405
  %2407 = vrot.lane.b32.xlu0 %v2214, 16
  %v2408 = vpop.permute.xlu0 %2407
  %2409 = vrot.lane.b32.xlu0 %v2217, 16
  %v2410 = vpop.permute.xlu0 %2409
  %2411 = vrot.lane.b32.xlu0 %v2219, 16
  %v2412 = vpop.permute.xlu0 %2411
  %2413 = vrot.lane.b32.xlu0 %v2222, 16
  %v2414 = vpop.permute.xlu0 %2413
  %2415 = vrot.lane.b32.xlu0 %v2224, 16
  %v2416 = vpop.permute.xlu0 %2415
  %2417 = vrot.lane.b32.xlu0 %v2227, 16
  %v2418 = vpop.permute.xlu0 %2417
  %2419 = vrot.lane.b32.xlu0 %v2229, 16
  %v2420 = vpop.permute.xlu0 %2419
  %2421 = vrot.lane.b32.xlu0 %v2232, 16
  %v2422 = vpop.permute.xlu0 %2421
  %2423 = vrot.lane.b32.xlu0 %v2234, 16
  %v2424 = vpop.permute.xlu0 %2423
  %2425 = vrot.lane.b32.xlu0 %v2237, 16
  %v2426 = vpop.permute.xlu0 %2425
  %2427 = vrot.lane.b32.xlu0 %v2239, 16
  %v2428 = vpop.permute.xlu0 %2427
  %2429 = vrot.lane.b32.xlu0 %v2242, 16
  %v2430 = vpop.permute.xlu0 %2429
  %2431 = vrot.lane.b32.xlu0 %v2244, 16
  %v2432 = vpop.permute.xlu0 %2431
  %2433 = vrot.lane.b32.xlu0 %v2247, 16
  %v2434 = vpop.permute.xlu0 %2433
  %2435 = vrot.lane.b32.xlu0 %v2249, 16
  %v2436 = vpop.permute.xlu0 %2435
  %2437 = vrot.lane.b32.xlu0 %v2252, 16
  %v2438 = vpop.permute.xlu0 %2437
  %2439 = vrot.lane.b32.xlu0 %v2254, 16
  %v2440 = vpop.permute.xlu0 %2439
  %2473 = vrot.lane.b32.xlu0 %v1996, 24
  %v2474 = vpop.permute.xlu0 %2473
  %2475 = vrot.lane.b32.xlu0 %v1997, 24
  %v2476 = vpop.permute.xlu0 %2475
  %2477 = vrot.lane.b32.xlu0 %v1999, 24
  %v2478 = vpop.permute.xlu0 %2477
  %2479 = vrot.lane.b32.xlu0 %v2000, 24
  %v2480 = vpop.permute.xlu0 %2479
  %2481 = vrot.lane.b32.xlu0 %v2002, 24
  %v2482 = vpop.permute.xlu0 %2481
  %2483 = vrot.lane.b32.xlu0 %v2003, 24
  %v2484 = vpop.permute.xlu0 %2483
  %2485 = vrot.lane.b32.xlu0 %v2005, 24
  %v2486 = vpop.permute.xlu0 %2485
  %2487 = vrot.lane.b32.xlu0 %v2006, 24
  %v2488 = vpop.permute.xlu0 %2487
  %2489 = vrot.lane.b32.xlu0 %v2008, 24
  %v2490 = vpop.permute.xlu0 %2489
  %2491 = vrot.lane.b32.xlu0 %v2009, 24
  %v2492 = vpop.permute.xlu0 %2491
  %2493 = vrot.lane.b32.xlu0 %v2011, 24
  %v2494 = vpop.permute.xlu0 %2493
  %2495 = vrot.lane.b32.xlu0 %v2012, 24
  %v2496 = vpop.permute.xlu0 %2495
  %2497 = vrot.lane.b32.xlu0 %v2014, 24
  %v2498 = vpop.permute.xlu0 %2497
  %2499 = vrot.lane.b32.xlu0 %v2015, 24
  %v2500 = vpop.permute.xlu0 %2499
  %2501 = vrot.lane.b32.xlu0 %v2017, 24
  %v2502 = vpop.permute.xlu0 %2501
  %2503 = vrot.lane.b32.xlu0 %v2018, 24
  %v2504 = vpop.permute.xlu0 %2503
  %2505 = vrot.lane.b32.xlu0 %v2020, 24
  %v2506 = vpop.permute.xlu0 %2505
  %2507 = vrot.lane.b32.xlu0 %v2021, 24
  %v2508 = vpop.permute.xlu0 %2507
  %2509 = vrot.lane.b32.xlu0 %v2023, 24
  %v2510 = vpop.permute.xlu0 %2509
  %2511 = vrot.lane.b32.xlu0 %v2024, 24
  %v2512 = vpop.permute.xlu0 %2511
  %2513 = vrot.lane.b32.xlu0 %v2026, 24
  %v2514 = vpop.permute.xlu0 %2513
  %2515 = vrot.lane.b32.xlu0 %v2027, 24
  %v2516 = vpop.permute.xlu0 %2515
  %2517 = vrot.lane.b32.xlu0 %v2029, 24
  %v2518 = vpop.permute.xlu0 %2517
  %2519 = vrot.lane.b32.xlu0 %v2030, 24
  %v2520 = vpop.permute.xlu0 %2519
  %2521 = vrot.lane.b32.xlu0 %v2032, 24
  %v2522 = vpop.permute.xlu0 %2521
  %2523 = vrot.lane.b32.xlu0 %v2033, 24
  %v2524 = vpop.permute.xlu0 %2523
  %2525 = vrot.lane.b32.xlu0 %v2035, 24
  %v2526 = vpop.permute.xlu0 %2525
  %2527 = vrot.lane.b32.xlu0 %v2036, 24
  %v2528 = vpop.permute.xlu0 %2527
  %2529 = vrot.lane.b32.xlu0 %v2038, 24
  %v2530 = vpop.permute.xlu0 %2529
  %2531 = vrot.lane.b32.xlu0 %v2039, 24
  %v2532 = vpop.permute.xlu0 %2531
  %2533 = vrot.lane.b32.xlu0 %v2041, 24
  %v2534 = vpop.permute.xlu0 %2533
  %2535 = vrot.lane.b32.xlu0 %v2042, 24
  %v2536 = vpop.permute.xlu0 %2535
  %2569 = vrot.lane.b32.xlu0 %v2102, 32
  %v2570 = vpop.permute.xlu0 %2569
  %2571 = vrot.lane.b32.xlu0 %v2104, 32
  %v2572 = vpop.permute.xlu0 %2571
  %2573 = vrot.lane.b32.xlu0 %v2107, 32
  %v2574 = vpop.permute.xlu0 %2573
  %2575 = vrot.lane.b32.xlu0 %v2109, 32
  %v2576 = vpop.permute.xlu0 %2575
  %2577 = vrot.lane.b32.xlu0 %v2112, 32
  %v2578 = vpop.permute.xlu0 %2577
  %2579 = vrot.lane.b32.xlu0 %v2114, 32
  %v2580 = vpop.permute.xlu0 %2579
  %2581 = vrot.lane.b32.xlu0 %v2117, 32
  %v2582 = vpop.permute.xlu0 %2581
  %2583 = vrot.lane.b32.xlu0 %v2119, 32
  %v2584 = vpop.permute.xlu0 %2583
  %2585 = vrot.lane.b32.xlu0 %v2122, 32
  %v2586 = vpop.permute.xlu0 %2585
  %2587 = vrot.lane.b32.xlu0 %v2124, 32
  %v2588 = vpop.permute.xlu0 %2587
  %2589 = vrot.lane.b32.xlu0 %v2127, 32
  %v2590 = vpop.permute.xlu0 %2589
  %2591 = vrot.lane.b32.xlu0 %v2129, 32
  %v2592 = vpop.permute.xlu0 %2591
  %2593 = vrot.lane.b32.xlu0 %v2132, 32
  %v2594 = vpop.permute.xlu0 %2593
  %2595 = vrot.lane.b32.xlu0 %v2134, 32
  %v2596 = vpop.permute.xlu0 %2595
  %2597 = vrot.lane.b32.xlu0 %v2137, 32
  %v2598 = vpop.permute.xlu0 %2597
  %2599 = vrot.lane.b32.xlu0 %v2139, 32
  %v2600 = vpop.permute.xlu0 %2599
  %2601 = vrot.lane.b32.xlu0 %v2142, 32
  %v2602 = vpop.permute.xlu0 %2601
  %2603 = vrot.lane.b32.xlu0 %v2144, 32
  %v2604 = vpop.permute.xlu0 %2603
  %2605 = vrot.lane.b32.xlu0 %v2147, 32
  %v2606 = vpop.permute.xlu0 %2605
  %2607 = vrot.lane.b32.xlu0 %v2149, 32
  %v2608 = vpop.permute.xlu0 %2607
  %2609 = vrot.lane.b32.xlu0 %v2152, 32
  %v2610 = vpop.permute.xlu0 %2609
  %2611 = vrot.lane.b32.xlu0 %v2154, 32
  %v2612 = vpop.permute.xlu0 %2611
  %2613 = vrot.lane.b32.xlu0 %v2157, 32
  %v2614 = vpop.permute.xlu0 %2613
  %2615 = vrot.lane.b32.xlu0 %v2159, 32
  %v2616 = vpop.permute.xlu0 %2615
  %2617 = vrot.lane.b32.xlu0 %v2162, 32
  %v2618 = vpop.permute.xlu0 %2617
  %2619 = vrot.lane.b32.xlu0 %v2164, 32
  %v2620 = vpop.permute.xlu0 %2619
  %2621 = vrot.lane.b32.xlu0 %v2167, 32
  %v2622 = vpop.permute.xlu0 %2621
  %2623 = vrot.lane.b32.xlu0 %v2169, 32
  %v2624 = vpop.permute.xlu0 %2623
  %2625 = vrot.lane.b32.xlu0 %v2172, 32
  %v2626 = vpop.permute.xlu0 %2625
  %2627 = vrot.lane.b32.xlu0 %v2174, 32
  %v2628 = vpop.permute.xlu0 %2627
  %2629 = vrot.lane.b32.xlu0 %v2260, 32
  %v2630 = vpop.permute.xlu0 %2629
  %2631 = vrot.lane.b32.xlu0 %v2262, 32
  %v2632 = vpop.permute.xlu0 %2631
  %2665 = vrot.lane.b32.xlu0 %v2182, 40
  %v2666 = vpop.permute.xlu0 %2665
  %2667 = vrot.lane.b32.xlu0 %v2184, 40
  %v2668 = vpop.permute.xlu0 %2667
  %2669 = vrot.lane.b32.xlu0 %v2187, 40
  %v2670 = vpop.permute.xlu0 %2669
  %2671 = vrot.lane.b32.xlu0 %v2189, 40
  %v2672 = vpop.permute.xlu0 %2671
  %2673 = vrot.lane.b32.xlu0 %v2192, 40
  %v2674 = vpop.permute.xlu0 %2673
  %2675 = vrot.lane.b32.xlu0 %v2194, 40
  %v2676 = vpop.permute.xlu0 %2675
  %2677 = vrot.lane.b32.xlu0 %v2197, 40
  %v2678 = vpop.permute.xlu0 %2677
  %2679 = vrot.lane.b32.xlu0 %v2199, 40
  %v2680 = vpop.permute.xlu0 %2679
  %2681 = vrot.lane.b32.xlu0 %v2202, 40
  %v2682 = vpop.permute.xlu0 %2681
  %2683 = vrot.lane.b32.xlu0 %v2204, 40
  %v2684 = vpop.permute.xlu0 %2683
  %2685 = vrot.lane.b32.xlu0 %v2207, 40
  %v2686 = vpop.permute.xlu0 %2685
  %2687 = vrot.lane.b32.xlu0 %v2209, 40
  %v2688 = vpop.permute.xlu0 %2687
  %2689 = vrot.lane.b32.xlu0 %v2212, 40
  %v2690 = vpop.permute.xlu0 %2689
  %2691 = vrot.lane.b32.xlu0 %v2214, 40
  %v2692 = vpop.permute.xlu0 %2691
  %2693 = vrot.lane.b32.xlu0 %v2217, 40
  %v2694 = vpop.permute.xlu0 %2693
  %2695 = vrot.lane.b32.xlu0 %v2219, 40
  %v2696 = vpop.permute.xlu0 %2695
  %2697 = vrot.lane.b32.xlu0 %v2222, 40
  %v2698 = vpop.permute.xlu0 %2697
  %2699 = vrot.lane.b32.xlu0 %v2224, 40
  %v2700 = vpop.permute.xlu0 %2699
  %2701 = vrot.lane.b32.xlu0 %v2227, 40
  %v2702 = vpop.permute.xlu0 %2701
  %2703 = vrot.lane.b32.xlu0 %v2229, 40
  %v2704 = vpop.permute.xlu0 %2703
  %2705 = vrot.lane.b32.xlu0 %v2232, 40
  %v2706 = vpop.permute.xlu0 %2705
  %2707 = vrot.lane.b32.xlu0 %v2234, 40
  %v2708 = vpop.permute.xlu0 %2707
  %2709 = vrot.lane.b32.xlu0 %v2237, 40
  %v2710 = vpop.permute.xlu0 %2709
  %2711 = vrot.lane.b32.xlu0 %v2239, 40
  %v2712 = vpop.permute.xlu0 %2711
  %2713 = vrot.lane.b32.xlu0 %v2242, 40
  %v2714 = vpop.permute.xlu0 %2713
  %2715 = vrot.lane.b32.xlu0 %v2244, 40
  %v2716 = vpop.permute.xlu0 %2715
  %2717 = vrot.lane.b32.xlu0 %v2247, 40
  %v2718 = vpop.permute.xlu0 %2717
  %2719 = vrot.lane.b32.xlu0 %v2249, 40
  %v2720 = vpop.permute.xlu0 %2719
  %2721 = vrot.lane.b32.xlu0 %v2252, 40
  %v2722 = vpop.permute.xlu0 %2721
  %2723 = vrot.lane.b32.xlu0 %v2254, 40
  %v2724 = vpop.permute.xlu0 %2723
  %2725 = vrot.lane.b32.xlu0 %v2265, 40
  %v2726 = vpop.permute.xlu0 %2725
  %2727 = vrot.lane.b32.xlu0 %v2267, 40
  %v2728 = vpop.permute.xlu0 %2727
  %2761 = vrot.lane.b32.xlu0 %v1999, 48
  %v2762 = vpop.permute.xlu0 %2761
  %2763 = vrot.lane.b32.xlu0 %v2000, 48
  %v2764 = vpop.permute.xlu0 %2763
  %2765 = vrot.lane.b32.xlu0 %v2002, 48
  %v2766 = vpop.permute.xlu0 %2765
  %2767 = vrot.lane.b32.xlu0 %v2003, 48
  %v2768 = vpop.permute.xlu0 %2767
  %2769 = vrot.lane.b32.xlu0 %v2005, 48
  %v2770 = vpop.permute.xlu0 %2769
  %2771 = vrot.lane.b32.xlu0 %v2006, 48
  %v2772 = vpop.permute.xlu0 %2771
  %2773 = vrot.lane.b32.xlu0 %v2008, 48
  %v2774 = vpop.permute.xlu0 %2773
  %2775 = vrot.lane.b32.xlu0 %v2009, 48
  %v2776 = vpop.permute.xlu0 %2775
  %2777 = vrot.lane.b32.xlu0 %v2011, 48
  %v2778 = vpop.permute.xlu0 %2777
  %2779 = vrot.lane.b32.xlu0 %v2012, 48
  %v2780 = vpop.permute.xlu0 %2779
  %2781 = vrot.lane.b32.xlu0 %v2014, 48
  %v2782 = vpop.permute.xlu0 %2781
  %2783 = vrot.lane.b32.xlu0 %v2015, 48
  %v2784 = vpop.permute.xlu0 %2783
  %2785 = vrot.lane.b32.xlu0 %v2017, 48
  %v2786 = vpop.permute.xlu0 %2785
  %2787 = vrot.lane.b32.xlu0 %v2018, 48
  %v2788 = vpop.permute.xlu0 %2787
  %2789 = vrot.lane.b32.xlu0 %v2020, 48
  %v2790 = vpop.permute.xlu0 %2789
  %2791 = vrot.lane.b32.xlu0 %v2021, 48
  %v2792 = vpop.permute.xlu0 %2791
  %2793 = vrot.lane.b32.xlu0 %v2023, 48
  %v2794 = vpop.permute.xlu0 %2793
  %2795 = vrot.lane.b32.xlu0 %v2024, 48
  %v2796 = vpop.permute.xlu0 %2795
  %2797 = vrot.lane.b32.xlu0 %v2026, 48
  %v2798 = vpop.permute.xlu0 %2797
  %2799 = vrot.lane.b32.xlu0 %v2027, 48
  %v2800 = vpop.permute.xlu0 %2799
  %2801 = vrot.lane.b32.xlu0 %v2029, 48
  %v2802 = vpop.permute.xlu0 %2801
  %2803 = vrot.lane.b32.xlu0 %v2030, 48
  %v2804 = vpop.permute.xlu0 %2803
  %2805 = vrot.lane.b32.xlu0 %v2032, 48
  %v2806 = vpop.permute.xlu0 %2805
  %2807 = vrot.lane.b32.xlu0 %v2033, 48
  %v2808 = vpop.permute.xlu0 %2807
  %2809 = vrot.lane.b32.xlu0 %v2035, 48
  %v2810 = vpop.permute.xlu0 %2809
  %2811 = vrot.lane.b32.xlu0 %v2036, 48
  %v2812 = vpop.permute.xlu0 %2811
  %2813 = vrot.lane.b32.xlu0 %v2038, 48
  %v2814 = vpop.permute.xlu0 %2813
  %2815 = vrot.lane.b32.xlu0 %v2039, 48
  %v2816 = vpop.permute.xlu0 %2815
  %2817 = vrot.lane.b32.xlu0 %v2041, 48
  %v2818 = vpop.permute.xlu0 %2817
  %2819 = vrot.lane.b32.xlu0 %v2042, 48
  %v2820 = vpop.permute.xlu0 %2819
  %2821 = vrot.lane.b32.xlu0 %v2044, 48
  %v2822 = vpop.permute.xlu0 %2821
  %2823 = vrot.lane.b32.xlu0 %v2045, 48
  %v2824 = vpop.permute.xlu0 %2823
  %2857 = vrot.lane.b32.xlu0 %v2107, 56
  %v2858 = vpop.permute.xlu0 %2857
  %2859 = vrot.lane.b32.xlu0 %v2109, 56
  %v2860 = vpop.permute.xlu0 %2859
  %2861 = vrot.lane.b32.xlu0 %v2112, 56
  %v2862 = vpop.permute.xlu0 %2861
  %2863 = vrot.lane.b32.xlu0 %v2114, 56
  %v2864 = vpop.permute.xlu0 %2863
  %2865 = vrot.lane.b32.xlu0 %v2117, 56
  %v2866 = vpop.permute.xlu0 %2865
  %2867 = vrot.lane.b32.xlu0 %v2119, 56
  %v2868 = vpop.permute.xlu0 %2867
  %2869 = vrot.lane.b32.xlu0 %v2122, 56
  %v2870 = vpop.permute.xlu0 %2869
  %2871 = vrot.lane.b32.xlu0 %v2124, 56
  %v2872 = vpop.permute.xlu0 %2871
  %2873 = vrot.lane.b32.xlu0 %v2127, 56
  %v2874 = vpop.permute.xlu0 %2873
  %2875 = vrot.lane.b32.xlu0 %v2129, 56
  %v2876 = vpop.permute.xlu0 %2875
  %2877 = vrot.lane.b32.xlu0 %v2132, 56
  %v2878 = vpop.permute.xlu0 %2877
  %2879 = vrot.lane.b32.xlu0 %v2134, 56
  %v2880 = vpop.permute.xlu0 %2879
  %2881 = vrot.lane.b32.xlu0 %v2137, 56
  %v2882 = vpop.permute.xlu0 %2881
  %2883 = vrot.lane.b32.xlu0 %v2139, 56
  %v2884 = vpop.permute.xlu0 %2883
  %2885 = vrot.lane.b32.xlu0 %v2142, 56
  %v2886 = vpop.permute.xlu0 %2885
  %2887 = vrot.lane.b32.xlu0 %v2144, 56
  %v2888 = vpop.permute.xlu0 %2887
  %2889 = vrot.lane.b32.xlu0 %v2147, 56
  %v2890 = vpop.permute.xlu0 %2889
  %2891 = vrot.lane.b32.xlu0 %v2149, 56
  %v2892 = vpop.permute.xlu0 %2891
  %2893 = vrot.lane.b32.xlu0 %v2152, 56
  %v2894 = vpop.permute.xlu0 %2893
  %2895 = vrot.lane.b32.xlu0 %v2154, 56
  %v2896 = vpop.permute.xlu0 %2895
  %2897 = vrot.lane.b32.xlu0 %v2157, 56
  %v2898 = vpop.permute.xlu0 %2897
  %2899 = vrot.lane.b32.xlu0 %v2159, 56
  %v2900 = vpop.permute.xlu0 %2899
  %2901 = vrot.lane.b32.xlu0 %v2162, 56
  %v2902 = vpop.permute.xlu0 %2901
  %2903 = vrot.lane.b32.xlu0 %v2164, 56
  %v2904 = vpop.permute.xlu0 %2903
  %2905 = vrot.lane.b32.xlu0 %v2167, 56
  %v2906 = vpop.permute.xlu0 %2905
  %2907 = vrot.lane.b32.xlu0 %v2169, 56
  %v2908 = vpop.permute.xlu0 %2907
  %2909 = vrot.lane.b32.xlu0 %v2172, 56
  %v2910 = vpop.permute.xlu0 %2909
  %2911 = vrot.lane.b32.xlu0 %v2174, 56
  %v2912 = vpop.permute.xlu0 %2911
  %2913 = vrot.lane.b32.xlu0 %v2260, 56
  %v2914 = vpop.permute.xlu0 %2913
  %2915 = vrot.lane.b32.xlu0 %v2262, 56
  %v2916 = vpop.permute.xlu0 %2915
  %2917 = vrot.lane.b32.xlu0 %v2273, 56
  %v2918 = vpop.permute.xlu0 %2917
  %2919 = vrot.lane.b32.xlu0 %v2275, 56
  %v2920 = vpop.permute.xlu0 %2919
  %2953 = vrot.lane.b32.xlu0 %v2187, 64
  %v2954 = vpop.permute.xlu0 %2953
  %2955 = vrot.lane.b32.xlu0 %v2189, 64
  %v2956 = vpop.permute.xlu0 %2955
  %2957 = vrot.lane.b32.xlu0 %v2192, 64
  %v2958 = vpop.permute.xlu0 %2957
  %2959 = vrot.lane.b32.xlu0 %v2194, 64
  %v2960 = vpop.permute.xlu0 %2959
  %2961 = vrot.lane.b32.xlu0 %v2197, 64
  %v2962 = vpop.permute.xlu0 %2961
  %2963 = vrot.lane.b32.xlu0 %v2199, 64
  %v2964 = vpop.permute.xlu0 %2963
  %2965 = vrot.lane.b32.xlu0 %v2202, 64
  %v2966 = vpop.permute.xlu0 %2965
  %2967 = vrot.lane.b32.xlu0 %v2204, 64
  %v2968 = vpop.permute.xlu0 %2967
  %2969 = vrot.lane.b32.xlu0 %v2207, 64
  %v2970 = vpop.permute.xlu0 %2969
  %2971 = vrot.lane.b32.xlu0 %v2209, 64
  %v2972 = vpop.permute.xlu0 %2971
  %2973 = vrot.lane.b32.xlu0 %v2212, 64
  %v2974 = vpop.permute.xlu0 %2973
  %2975 = vrot.lane.b32.xlu0 %v2214, 64
  %v2976 = vpop.permute.xlu0 %2975
  %2977 = vrot.lane.b32.xlu0 %v2217, 64
  %v2978 = vpop.permute.xlu0 %2977
  %2979 = vrot.lane.b32.xlu0 %v2219, 64
  %v2980 = vpop.permute.xlu0 %2979
  %2981 = vrot.lane.b32.xlu0 %v2222, 64
  %v2982 = vpop.permute.xlu0 %2981
  %2983 = vrot.lane.b32.xlu0 %v2224, 64
  %v2984 = vpop.permute.xlu0 %2983
  %2985 = vrot.lane.b32.xlu0 %v2227, 64
  %v2986 = vpop.permute.xlu0 %2985
  %2987 = vrot.lane.b32.xlu0 %v2229, 64
  %v2988 = vpop.permute.xlu0 %2987
  %2989 = vrot.lane.b32.xlu0 %v2232, 64
  %v2990 = vpop.permute.xlu0 %2989
  %2991 = vrot.lane.b32.xlu0 %v2234, 64
  %v2992 = vpop.permute.xlu0 %2991
  %2993 = vrot.lane.b32.xlu0 %v2237, 64
  %v2994 = vpop.permute.xlu0 %2993
  %2995 = vrot.lane.b32.xlu0 %v2239, 64
  %v2996 = vpop.permute.xlu0 %2995
  %2997 = vrot.lane.b32.xlu0 %v2242, 64
  %v2998 = vpop.permute.xlu0 %2997
  %2999 = vrot.lane.b32.xlu0 %v2244, 64
  %v3000 = vpop.permute.xlu0 %2999
  %3001 = vrot.lane.b32.xlu0 %v2247, 64
  %v3002 = vpop.permute.xlu0 %3001
  %3003 = vrot.lane.b32.xlu0 %v2249, 64
  %v3004 = vpop.permute.xlu0 %3003
  %3005 = vrot.lane.b32.xlu0 %v2252, 64
  %v3006 = vpop.permute.xlu0 %3005
  %3007 = vrot.lane.b32.xlu0 %v2254, 64
  %v3008 = vpop.permute.xlu0 %3007
  %3009 = vrot.lane.b32.xlu0 %v2265, 64
  %v3010 = vpop.permute.xlu0 %3009
  %3011 = vrot.lane.b32.xlu0 %v2267, 64
  %v3012 = vpop.permute.xlu0 %3011
  %3013 = vrot.lane.b32.xlu0 %v2278, 64
  %v3014 = vpop.permute.xlu0 %3013
  %3015 = vrot.lane.b32.xlu0 %v2280, 64
  %v3016 = vpop.permute.xlu0 %3015
  %v3049 = vsel %vm1403, %v1993, %v2282
  %v3050 = vsel %vm1403, %v1994, %v2284
  %v3051 = vsel %vm1403, %v1996, %v2286
  %v3052 = vsel %vm1403, %v1997, %v2288
  %v3053 = vsel %vm1403, %v1999, %v2290
  %v3054 = vsel %vm1403, %v2000, %v2292
  %v3055 = vsel %vm1403, %v2002, %v2294
  %v3056 = vsel %vm1403, %v2003, %v2296
  %v3057 = vsel %vm1403, %v2005, %v2298
  %v3058 = vsel %vm1403, %v2006, %v2300
  %v3059 = vsel %vm1403, %v2008, %v2302
  %v3060 = vsel %vm1403, %v2009, %v2304
  %v3061 = vsel %vm1403, %v2011, %v2306
  %v3062 = vsel %vm1403, %v2012, %v2308
  %v3063 = vsel %vm1403, %v2014, %v2310
  %v3064 = vsel %vm1403, %v2015, %v2312
  %v3065 = vsel %vm1403, %v2017, %v2314
  %v3066 = vsel %vm1403, %v2018, %v2316
  %v3067 = vsel %vm1403, %v2020, %v2318
  %v3068 = vsel %vm1403, %v2021, %v2320
  %v3069 = vsel %vm1403, %v2023, %v2322
  %v3070 = vsel %vm1403, %v2024, %v2324
  %v3071 = vsel %vm1403, %v2026, %v2326
  %v3072 = vsel %vm1403, %v2027, %v2328
  %v3073 = vsel %vm1403, %v2029, %v2330
  %v3074 = vsel %vm1403, %v2030, %v2332
  %v3075 = vsel %vm1403, %v2032, %v2334
  %v3076 = vsel %vm1403, %v2033, %v2336
  %v3077 = vsel %vm1403, %v2035, %v2338
  %v3078 = vsel %vm1403, %v2036, %v2340
  %v3079 = vsel %vm1403, %v2038, %v2342
  %v3080 = vsel %vm1403, %v2039, %v2344
  %v3081 = vsel %vm1436, %v3049, %v2378
  %v3082 = vsel %vm1436, %v3050, %v2380
  %v3083 = vsel %vm1436, %v3051, %v2382
  %v3084 = vsel %vm1436, %v3052, %v2384
  %v3085 = vsel %vm1436, %v3053, %v2386
  %v3086 = vsel %vm1436, %v3054, %v2388
  %v3087 = vsel %vm1436, %v3055, %v2390
  %v3088 = vsel %vm1436, %v3056, %v2392
  %v3089 = vsel %vm1436, %v3057, %v2394
  %v3090 = vsel %vm1436, %v3058, %v2396
  %v3091 = vsel %vm1436, %v3059, %v2398
  %v3092 = vsel %vm1436, %v3060, %v2400
  %v3093 = vsel %vm1436, %v3061, %v2402
  %v3094 = vsel %vm1436, %v3062, %v2404
  %v3095 = vsel %vm1436, %v3063, %v2406
  %v3096 = vsel %vm1436, %v3064, %v2408
  %v3097 = vsel %vm1436, %v3065, %v2410
  %v3098 = vsel %vm1436, %v3066, %v2412
  %v3099 = vsel %vm1436, %v3067, %v2414
  %v3100 = vsel %vm1436, %v3068, %v2416
  %v3101 = vsel %vm1436, %v3069, %v2418
  %v3102 = vsel %vm1436, %v3070, %v2420
  %v3103 = vsel %vm1436, %v3071, %v2422
  %v3104 = vsel %vm1436, %v3072, %v2424
  %v3105 = vsel %vm1436, %v3073, %v2426
  %v3106 = vsel %vm1436, %v3074, %v2428
  %v3107 = vsel %vm1436, %v3075, %v2430
  %v3108 = vsel %vm1436, %v3076, %v2432
  %v3109 = vsel %vm1436, %v3077, %v2434
  %v3110 = vsel %vm1436, %v3078, %v2436
  %v3111 = vsel %vm1436, %v3079, %v2438
  %v3112 = vsel %vm1436, %v3080, %v2440
  %v3113 = vsel %vm1469, %v3081, %v2474
  %v3114 = vsel %vm1469, %v3082, %v2476
  %v3115 = vsel %vm1469, %v3083, %v2478
  %v3116 = vsel %vm1469, %v3084, %v2480
  %v3117 = vsel %vm1469, %v3085, %v2482
  %v3118 = vsel %vm1469, %v3086, %v2484
  %v3119 = vsel %vm1469, %v3087, %v2486
  %v3120 = vsel %vm1469, %v3088, %v2488
  %v3121 = vsel %vm1469, %v3089, %v2490
  %v3122 = vsel %vm1469, %v3090, %v2492
  %v3123 = vsel %vm1469, %v3091, %v2494
  %v3124 = vsel %vm1469, %v3092, %v2496
  %v3125 = vsel %vm1469, %v3093, %v2498
  %v3126 = vsel %vm1469, %v3094, %v2500
  %v3127 = vsel %vm1469, %v3095, %v2502
  %v3128 = vsel %vm1469, %v3096, %v2504
  %v3129 = vsel %vm1469, %v3097, %v2506
  %v3130 = vsel %vm1469, %v3098, %v2508
  %v3131 = vsel %vm1469, %v3099, %v2510
  %v3132 = vsel %vm1469, %v3100, %v2512
  %v3133 = vsel %vm1469, %v3101, %v2514
  %v3134 = vsel %vm1469, %v3102, %v2516
  %v3135 = vsel %vm1469, %v3103, %v2518
  %v3136 = vsel %vm1469, %v3104, %v2520
  %v3137 = vsel %vm1469, %v3105, %v2522
  %v3138 = vsel %vm1469, %v3106, %v2524
  %v3139 = vsel %vm1469, %v3107, %v2526
  %v3140 = vsel %vm1469, %v3108, %v2528
  %v3141 = vsel %vm1469, %v3109, %v2530
  %v3142 = vsel %vm1469, %v3110, %v2532
  %v3143 = vsel %vm1469, %v3111, %v2534
  %v3144 = vsel %vm1469, %v3112, %v2536
  %v3145 = vsel %vm1502, %v3113, %v2570
  %v3146 = vsel %vm1502, %v3114, %v2572
  %v3147 = vsel %vm1502, %v3115, %v2574
  %v3148 = vsel %vm1502, %v3116, %v2576
  %v3149 = vsel %vm1502, %v3117, %v2578
  %v3150 = vsel %vm1502, %v3118, %v2580
  %v3151 = vsel %vm1502, %v3119, %v2582
  %v3152 = vsel %vm1502, %v3120, %v2584
  %v3153 = vsel %vm1502, %v3121, %v2586
  %v3154 = vsel %vm1502, %v3122, %v2588
  %v3155 = vsel %vm1502, %v3123, %v2590
  %v3156 = vsel %vm1502, %v3124, %v2592
  %v3157 = vsel %vm1502, %v3125, %v2594
  %v3158 = vsel %vm1502, %v3126, %v2596
  %v3159 = vsel %vm1502, %v3127, %v2598
  %v3160 = vsel %vm1502, %v3128, %v2600
  %v3161 = vsel %vm1502, %v3129, %v2602
  %v3162 = vsel %vm1502, %v3130, %v2604
  %v3163 = vsel %vm1502, %v3131, %v2606
  %v3164 = vsel %vm1502, %v3132, %v2608
  %v3165 = vsel %vm1502, %v3133, %v2610
  %v3166 = vsel %vm1502, %v3134, %v2612
  %v3167 = vsel %vm1502, %v3135, %v2614
  %v3168 = vsel %vm1502, %v3136, %v2616
  %v3169 = vsel %vm1502, %v3137, %v2618
  %v3170 = vsel %vm1502, %v3138, %v2620
  %v3171 = vsel %vm1502, %v3139, %v2622
  %v3172 = vsel %vm1502, %v3140, %v2624
  %v3173 = vsel %vm1502, %v3141, %v2626
  %v3174 = vsel %vm1502, %v3142, %v2628
  %v3175 = vsel %vm1502, %v3143, %v2630
  %v3176 = vsel %vm1502, %v3144, %v2632
  %v3177 = vsel %vm1535, %v3145, %v2666
  %v3178 = vsel %vm1535, %v3146, %v2668
  %v3179 = vsel %vm1535, %v3147, %v2670
  %v3180 = vsel %vm1535, %v3148, %v2672
  %v3181 = vsel %vm1535, %v3149, %v2674
  %v3182 = vsel %vm1535, %v3150, %v2676
  %v3183 = vsel %vm1535, %v3151, %v2678
  %v3184 = vsel %vm1535, %v3152, %v2680
  %v3185 = vsel %vm1535, %v3153, %v2682
  %v3186 = vsel %vm1535, %v3154, %v2684
  %v3187 = vsel %vm1535, %v3155, %v2686
  %v3188 = vsel %vm1535, %v3156, %v2688
  %v3189 = vsel %vm1535, %v3157, %v2690
  %v3190 = vsel %vm1535, %v3158, %v2692
  %v3191 = vsel %vm1535, %v3159, %v2694
  %v3192 = vsel %vm1535, %v3160, %v2696
  %v3193 = vsel %vm1535, %v3161, %v2698
  %v3194 = vsel %vm1535, %v3162, %v2700
  %v3195 = vsel %vm1535, %v3163, %v2702
  %v3196 = vsel %vm1535, %v3164, %v2704
  %v3197 = vsel %vm1535, %v3165, %v2706
  %v3198 = vsel %vm1535, %v3166, %v2708
  %v3199 = vsel %vm1535, %v3167, %v2710
  %v3200 = vsel %vm1535, %v3168, %v2712
  %v3201 = vsel %vm1535, %v3169, %v2714
  %v3202 = vsel %vm1535, %v3170, %v2716
  %v3203 = vsel %vm1535, %v3171, %v2718
  %v3204 = vsel %vm1535, %v3172, %v2720
  %v3205 = vsel %vm1535, %v3173, %v2722
  %v3206 = vsel %vm1535, %v3174, %v2724
  %v3207 = vsel %vm1535, %v3175, %v2726
  %v3208 = vsel %vm1535, %v3176, %v2728
  %v3209 = vsel %vm1568, %v3177, %v2762
  %v3210 = vsel %vm1568, %v3178, %v2764
  %v3211 = vsel %vm1568, %v3179, %v2766
  %v3212 = vsel %vm1568, %v3180, %v2768
  %v3213 = vsel %vm1568, %v3181, %v2770
  %v3214 = vsel %vm1568, %v3182, %v2772
  %v3215 = vsel %vm1568, %v3183, %v2774
  %v3216 = vsel %vm1568, %v3184, %v2776
  %v3217 = vsel %vm1568, %v3185, %v2778
  %v3218 = vsel %vm1568, %v3186, %v2780
  %v3219 = vsel %vm1568, %v3187, %v2782
  %v3220 = vsel %vm1568, %v3188, %v2784
  %v3221 = vsel %vm1568, %v3189, %v2786
  %v3222 = vsel %vm1568, %v3190, %v2788
  %v3223 = vsel %vm1568, %v3191, %v2790
  %v3224 = vsel %vm1568, %v3192, %v2792
  %v3225 = vsel %vm1568, %v3193, %v2794
  %v3226 = vsel %vm1568, %v3194, %v2796
  %v3227 = vsel %vm1568, %v3195, %v2798
  %v3228 = vsel %vm1568, %v3196, %v2800
  %v3229 = vsel %vm1568, %v3197, %v2802
  %v3230 = vsel %vm1568, %v3198, %v2804
  %v3231 = vsel %vm1568, %v3199, %v2806
  %v3232 = vsel %vm1568, %v3200, %v2808
  %v3233 = vsel %vm1568, %v3201, %v2810
  %v3234 = vsel %vm1568, %v3202, %v2812
  %v3235 = vsel %vm1568, %v3203, %v2814
  %v3236 = vsel %vm1568, %v3204, %v2816
  %v3237 = vsel %vm1568, %v3205, %v2818
  %v3238 = vsel %vm1568, %v3206, %v2820
  %v3239 = vsel %vm1568, %v3207, %v2822
  %v3240 = vsel %vm1568, %v3208, %v2824
  %v3241 = vsel %vm1601, %v3209, %v2858
  %v3242 = vsel %vm1601, %v3210, %v2860
  %v3243 = vsel %vm1601, %v3211, %v2862
  %v3244 = vsel %vm1601, %v3212, %v2864
  %v3245 = vsel %vm1601, %v3213, %v2866
  %v3246 = vsel %vm1601, %v3214, %v2868
  %v3247 = vsel %vm1601, %v3215, %v2870
  %v3248 = vsel %vm1601, %v3216, %v2872
  %v3249 = vsel %vm1601, %v3217, %v2874
  %v3250 = vsel %vm1601, %v3218, %v2876
  %v3251 = vsel %vm1601, %v3219, %v2878
  %v3252 = vsel %vm1601, %v3220, %v2880
  %v3253 = vsel %vm1601, %v3221, %v2882
  %v3254 = vsel %vm1601, %v3222, %v2884
  %v3255 = vsel %vm1601, %v3223, %v2886
  %v3256 = vsel %vm1601, %v3224, %v2888
  %v3257 = vsel %vm1601, %v3225, %v2890
  %v3258 = vsel %vm1601, %v3226, %v2892
  %v3259 = vsel %vm1601, %v3227, %v2894
  %v3260 = vsel %vm1601, %v3228, %v2896
  %v3261 = vsel %vm1601, %v3229, %v2898
  %v3262 = vsel %vm1601, %v3230, %v2900
  %v3263 = vsel %vm1601, %v3231, %v2902
  %v3264 = vsel %vm1601, %v3232, %v2904
  %v3265 = vsel %vm1601, %v3233, %v2906
  %v3266 = vsel %vm1601, %v3234, %v2908
  %v3267 = vsel %vm1601, %v3235, %v2910
  %v3268 = vsel %vm1601, %v3236, %v2912
  %v3269 = vsel %vm1601, %v3237, %v2914
  %v3270 = vsel %vm1601, %v3238, %v2916
  %v3271 = vsel %vm1601, %v3239, %v2918
  %v3272 = vsel %vm1601, %v3240, %v2920
  %v3273 = vsel %vm1634, %v3241, %v2954
  %v3274 = vsel %vm1634, %v3242, %v2956
  %v3275 = vsel %vm1634, %v3243, %v2958
  %v3276 = vsel %vm1634, %v3244, %v2960
  %v3277 = vsel %vm1634, %v3245, %v2962
  %v3278 = vsel %vm1634, %v3246, %v2964
  %v3279 = vsel %vm1634, %v3247, %v2966
  %v3280 = vsel %vm1634, %v3248, %v2968
  %v3281 = vsel %vm1634, %v3249, %v2970
  %v3282 = vsel %vm1634, %v3250, %v2972
  %v3283 = vsel %vm1634, %v3251, %v2974
  %v3284 = vsel %vm1634, %v3252, %v2976
  %v3285 = vsel %vm1634, %v3253, %v2978
  %v3286 = vsel %vm1634, %v3254, %v2980
  %v3287 = vsel %vm1634, %v3255, %v2982
  %v3288 = vsel %vm1634, %v3256, %v2984
  %v3289 = vsel %vm1634, %v3257, %v2986
  %v3290 = vsel %vm1634, %v3258, %v2988
  %v3291 = vsel %vm1634, %v3259, %v2990
  %v3292 = vsel %vm1634, %v3260, %v2992
  %v3293 = vsel %vm1634, %v3261, %v2994
  %v3294 = vsel %vm1634, %v3262, %v2996
  %v3295 = vsel %vm1634, %v3263, %v2998
  %v3296 = vsel %vm1634, %v3264, %v3000
  %v3297 = vsel %vm1634, %v3265, %v3002
  %v3298 = vsel %vm1634, %v3266, %v3004
  %v3299 = vsel %vm1634, %v3267, %v3006
  %v3300 = vsel %vm1634, %v3268, %v3008
  %v3301 = vsel %vm1634, %v3269, %v3010
  %v3302 = vsel %vm1634, %v3270, %v3012
  %v3303 = vsel %vm1634, %v3271, %v3014
  %v3304 = vsel %vm1634, %v3272, %v3016
  %v3305 = vld [vmem:[%s2] sm:$0xff]
  %v3306 = vld [vmem:[%s2 + $0x8] sm:$0xff]
  %v3307 = vld [vmem:[%s2 + $0x10] sm:$0xff]
  %v3308 = vld [vmem:[%s2 + $0x18] sm:$0xff]
  %v3309 = vld [vmem:[%s2 + $0x20] sm:$0xff]
  %v3310 = vld [vmem:[%s2 + $0x28] sm:$0xff]
  %v3311 = vld [vmem:[%s2 + $0x30] sm:$0xff]
  %v3312 = vld [vmem:[%s2 + $0x38] sm:$0xff]
  %v3313 = vld [vmem:[%s2 + $0x40] sm:$0xff]
  %vm3314 = vcmask 588800
  %v3316 = vsel %vm3314, %v1635, 0
  %v3319 = vsel %vm3314, %v1636, 0
  %v3322 = vsel %vm3314, %v1637, 0
  %v3325 = vsel %vm3314, %v1638, 0
  %v3328 = vsel %vm3314, %v1639, 0
  %v3331 = vsel %vm3314, %v1640, 0
  %v3334 = vsel %vm3314, %v1641, 0
  %v3337 = vsel %vm3314, %v1642, 0
  %v3340 = vsel %vm3314, %v1643, 0
  %v3343 = vsel %vm3314, %v1644, 0
  %v3346 = vsel %vm3314, %v1645, 0
  %v3349 = vsel %vm3314, %v1646, 0
  %v3352 = vsel %vm3314, %v1647, 0
  %v3355 = vsel %vm3314, %v1648, 0
  %v3358 = vsel %vm3314, %v1649, 0
  %v3361 = vsel %vm3314, %v1650, 0
  %v3364 = vsel %vm3314, %v1651, 0
  %v3367 = vsel %vm3314, %v1652, 0
  %v3370 = vsel %vm3314, %v1653, 0
  %v3373 = vsel %vm3314, %v1654, 0
  %v3376 = vsel %vm3314, %v1655, 0
  %v3379 = vsel %vm3314, %v1656, 0
  %v3382 = vsel %vm3314, %v1657, 0
  %v3385 = vsel %vm3314, %v1658, 0
  %v3388 = vsel %vm3314, %v1659, 0
  %v3391 = vsel %vm3314, %v1660, 0
  %v3394 = vsel %vm3314, %v1661, 0
  %v3397 = vsel %vm3314, %v1662, 0
  %v3400 = vsel %vm3314, %v1663, 0
  %v3403 = vsel %vm3314, %v1664, 0
  %v3406 = vsel %vm3314, %v1665, 0
  %v3409 = vsel %vm3314, %v1666, 0
  %v3412 = vsel %vm3314, %v3273, 0
  %v3415 = vsel %vm3314, %v3274, 0
  %v3418 = vsel %vm3314, %v3275, 0
  %v3421 = vsel %vm3314, %v3276, 0
  %v3424 = vsel %vm3314, %v3277, 0
  %v3427 = vsel %vm3314, %v3278, 0
  %v3430 = vsel %vm3314, %v3279, 0
  %v3433 = vsel %vm3314, %v3280, 0
  %v3436 = vsel %vm3314, %v3281, 0
  %v3439 = vsel %vm3314, %v3282, 0
  %v3442 = vsel %vm3314, %v3283, 0
  %v3445 = vsel %vm3314, %v3284, 0
  %v3448 = vsel %vm3314, %v3285, 0
  %v3451 = vsel %vm3314, %v3286, 0
  %v3454 = vsel %vm3314, %v3287, 0
  %v3457 = vsel %vm3314, %v3288, 0
  %v3460 = vsel %vm3314, %v3289, 0
  %v3463 = vsel %vm3314, %v3290, 0
  %v3466 = vsel %vm3314, %v3291, 0
  %v3469 = vsel %vm3314, %v3292, 0
  %v3472 = vsel %vm3314, %v3293, 0
  %v3475 = vsel %vm3314, %v3294, 0
  %v3478 = vsel %vm3314, %v3295, 0
  %v3481 = vsel %vm3314, %v3296, 0
  %v3484 = vsel %vm3314, %v3297, 0
  %v3487 = vsel %vm3314, %v3298, 0
  %v3490 = vsel %vm3314, %v3299, 0
  %v3493 = vsel %vm3314, %v3300, 0
  %v3496 = vsel %vm3314, %v3301, 0
  %v3499 = vsel %vm3314, %v3302, 0
  %v3502 = vsel %vm3314, %v3303, 0
  %v3505 = vsel %vm3314, %v3304, 0
  %3507 = vmatpush.msra.mxu0 0.0
  %3508 = vmatpush.msra.mxu0 0.0
  %3509 = vmatpush.msra.mxu0 0.0
  %3510 = vmatpush.msra.mxu0 0.0
  %3511 = vmatpush.msra.mxu0 0.0
  %3512 = vmatpush.msra.mxu0 0.0
  %3513 = vmatpush.msra.mxu0 0.0
  %3514 = vmatpush.msra.mxu0 %v3313
  %3515 = vmatpush.msra.mxu0 %v3312
  %3516 = vmatpush.msra.mxu0 %v3311
  %3517 = vmatpush.msra.mxu0 %v3310
  %3518 = vmatpush.msra.mxu0 %v3309
  %3519 = vmatpush.msra.mxu0 %v3308
  %3520 = vmatpush.msra.mxu0 %v3307
  %3521 = vmatpush.msra.mxu0 %v3306
  %3522 = vmatpush.msra.mxu0 %v3305
  %3523 = vmatmul.f32.gmra.mxu0 %v3316
  %v3524 = vpop.f32.mrf.mxu0
  %v3525 = vadd.f32 0.0, %v3524
  %3526 = vmatmul.f32.gmra.mxu0 %v3319
  %v3527 = vpop.f32.mrf.mxu0
  %v3528 = vadd.f32 0.0, %v3527
  %3529 = vmatmul.f32.gmra.mxu0 %v3322
  %v3530 = vpop.f32.mrf.mxu0
  %v3531 = vadd.f32 0.0, %v3530
  %3532 = vmatmul.f32.gmra.mxu0 %v3325
  %v3533 = vpop.f32.mrf.mxu0
  %v3534 = vadd.f32 0.0, %v3533
  %3535 = vmatmul.f32.gmra.mxu0 %v3328
  %v3536 = vpop.f32.mrf.mxu0
  %v3537 = vadd.f32 0.0, %v3536
  %3538 = vmatmul.f32.gmra.mxu0 %v3331
  %v3539 = vpop.f32.mrf.mxu0
  %v3540 = vadd.f32 0.0, %v3539
  %3541 = vmatmul.f32.gmra.mxu0 %v3334
  %v3542 = vpop.f32.mrf.mxu0
  %v3543 = vadd.f32 0.0, %v3542
  %3544 = vmatmul.f32.gmra.mxu0 %v3337
  %v3545 = vpop.f32.mrf.mxu0
  %v3546 = vadd.f32 0.0, %v3545
  %3547 = vmatmul.f32.gmra.mxu0 %v3340
  %v3548 = vpop.f32.mrf.mxu0
  %v3549 = vadd.f32 0.0, %v3548
  %3550 = vmatmul.f32.gmra.mxu0 %v3343
  %v3551 = vpop.f32.mrf.mxu0
  %v3552 = vadd.f32 0.0, %v3551
  %3553 = vmatmul.f32.gmra.mxu0 %v3346
  %v3554 = vpop.f32.mrf.mxu0
  %v3555 = vadd.f32 0.0, %v3554
  %3556 = vmatmul.f32.gmra.mxu0 %v3349
  %v3557 = vpop.f32.mrf.mxu0
  %v3558 = vadd.f32 0.0, %v3557
  %3559 = vmatmul.f32.gmra.mxu0 %v3352
  %v3560 = vpop.f32.mrf.mxu0
  %v3561 = vadd.f32 0.0, %v3560
  %3562 = vmatmul.f32.gmra.mxu0 %v3355
  %v3563 = vpop.f32.mrf.mxu0
  %v3564 = vadd.f32 0.0, %v3563
  %3565 = vmatmul.f32.gmra.mxu0 %v3358
  %v3566 = vpop.f32.mrf.mxu0
  %v3567 = vadd.f32 0.0, %v3566
  %3568 = vmatmul.f32.gmra.mxu0 %v3361
  %v3569 = vpop.f32.mrf.mxu0
  %v3570 = vadd.f32 0.0, %v3569
  %3571 = vmatmul.f32.gmra.mxu0 %v3364
  %v3572 = vpop.f32.mrf.mxu0
  %v3573 = vadd.f32 0.0, %v3572
  %3574 = vmatmul.f32.gmra.mxu0 %v3367
  %v3575 = vpop.f32.mrf.mxu0
  %v3576 = vadd.f32 0.0, %v3575
  %3577 = vmatmul.f32.gmra.mxu0 %v3370
  %v3578 = vpop.f32.mrf.mxu0
  %v3579 = vadd.f32 0.0, %v3578
  %3580 = vmatmul.f32.gmra.mxu0 %v3373
  %v3581 = vpop.f32.mrf.mxu0
  %v3582 = vadd.f32 0.0, %v3581
  %3583 = vmatmul.f32.gmra.mxu0 %v3376
  %v3584 = vpop.f32.mrf.mxu0
  %v3585 = vadd.f32 0.0, %v3584
  %3586 = vmatmul.f32.gmra.mxu0 %v3379
  %v3587 = vpop.f32.mrf.mxu0
  %v3588 = vadd.f32 0.0, %v3587
  %3589 = vmatmul.f32.gmra.mxu0 %v3382
  %v3590 = vpop.f32.mrf.mxu0
  %v3591 = vadd.f32 0.0, %v3590
  %3592 = vmatmul.f32.gmra.mxu0 %v3385
  %v3593 = vpop.f32.mrf.mxu0
  %v3594 = vadd.f32 0.0, %v3593
  %3595 = vmatmul.f32.gmra.mxu0 %v3388
  %v3596 = vpop.f32.mrf.mxu0
  %v3597 = vadd.f32 0.0, %v3596
  %3598 = vmatmul.f32.gmra.mxu0 %v3391
  %v3599 = vpop.f32.mrf.mxu0
  %v3600 = vadd.f32 0.0, %v3599
  %3601 = vmatmul.f32.gmra.mxu0 %v3394
  %v3602 = vpop.f32.mrf.mxu0
  %v3603 = vadd.f32 0.0, %v3602
  %3604 = vmatmul.f32.gmra.mxu0 %v3397
  %v3605 = vpop.f32.mrf.mxu0
  %v3606 = vadd.f32 0.0, %v3605
  %3607 = vmatmul.f32.gmra.mxu0 %v3400
  %v3608 = vpop.f32.mrf.mxu0
  %v3609 = vadd.f32 0.0, %v3608
  %3610 = vmatmul.f32.gmra.mxu0 %v3403
  %v3611 = vpop.f32.mrf.mxu0
  %v3612 = vadd.f32 0.0, %v3611
  %3613 = vmatmul.f32.gmra.mxu0 %v3406
  %v3614 = vpop.f32.mrf.mxu0
  %v3615 = vadd.f32 0.0, %v3614
  %3616 = vmatmul.f32.gmra.mxu0 %v3409
  %v3617 = vpop.f32.mrf.mxu0
  %v3618 = vadd.f32 0.0, %v3617
  %3619 = vmatmul.f32.gmra.mxu0 %v3412
  %v3620 = vpop.f32.mrf.mxu0
  %v3621 = vadd.f32 0.0, %v3620
  %3622 = vmatmul.f32.gmra.mxu0 %v3415
  %v3623 = vpop.f32.mrf.mxu0
  %v3624 = vadd.f32 0.0, %v3623
  %3625 = vmatmul.f32.gmra.mxu0 %v3418
  %v3626 = vpop.f32.mrf.mxu0
  %v3627 = vadd.f32 0.0, %v3626
  %3628 = vmatmul.f32.gmra.mxu0 %v3421
  %v3629 = vpop.f32.mrf.mxu0
  %v3630 = vadd.f32 0.0, %v3629
  %3631 = vmatmul.f32.gmra.mxu0 %v3424
  %v3632 = vpop.f32.mrf.mxu0
  %v3633 = vadd.f32 0.0, %v3632
  %3634 = vmatmul.f32.gmra.mxu0 %v3427
  %v3635 = vpop.f32.mrf.mxu0
  %v3636 = vadd.f32 0.0, %v3635
  %3637 = vmatmul.f32.gmra.mxu0 %v3430
  %v3638 = vpop.f32.mrf.mxu0
  %v3639 = vadd.f32 0.0, %v3638
  %3640 = vmatmul.f32.gmra.mxu0 %v3433
  %v3641 = vpop.f32.mrf.mxu0
  %v3642 = vadd.f32 0.0, %v3641
  %3643 = vmatmul.f32.gmra.mxu0 %v3436
  %v3644 = vpop.f32.mrf.mxu0
  %v3645 = vadd.f32 0.0, %v3644
  %3646 = vmatmul.f32.gmra.mxu0 %v3439
  %v3647 = vpop.f32.mrf.mxu0
  %v3648 = vadd.f32 0.0, %v3647
  %3649 = vmatmul.f32.gmra.mxu0 %v3442
  %v3650 = vpop.f32.mrf.mxu0
  %v3651 = vadd.f32 0.0, %v3650
  %3652 = vmatmul.f32.gmra.mxu0 %v3445
  %v3653 = vpop.f32.mrf.mxu0
  %v3654 = vadd.f32 0.0, %v3653
  %3655 = vmatmul.f32.gmra.mxu0 %v3448
  %v3656 = vpop.f32.mrf.mxu0
  %v3657 = vadd.f32 0.0, %v3656
  %3658 = vmatmul.f32.gmra.mxu0 %v3451
  %v3659 = vpop.f32.mrf.mxu0
  %v3660 = vadd.f32 0.0, %v3659
  %3661 = vmatmul.f32.gmra.mxu0 %v3454
  %v3662 = vpop.f32.mrf.mxu0
  %v3663 = vadd.f32 0.0, %v3662
  %3664 = vmatmul.f32.gmra.mxu0 %v3457
  %v3665 = vpop.f32.mrf.mxu0
  %v3666 = vadd.f32 0.0, %v3665
  %3667 = vmatmul.f32.gmra.mxu0 %v3460
  %v3668 = vpop.f32.mrf.mxu0
  %v3669 = vadd.f32 0.0, %v3668
  %3670 = vmatmul.f32.gmra.mxu0 %v3463
  %v3671 = vpop.f32.mrf.mxu0
  %v3672 = vadd.f32 0.0, %v3671
  %3673 = vmatmul.f32.gmra.mxu0 %v3466
  %v3674 = vpop.f32.mrf.mxu0
  %v3675 = vadd.f32 0.0, %v3674
  %3676 = vmatmul.f32.gmra.mxu0 %v3469
  %v3677 = vpop.f32.mrf.mxu0
  %v3678 = vadd.f32 0.0, %v3677
  %3679 = vmatmul.f32.gmra.mxu0 %v3472
  %v3680 = vpop.f32.mrf.mxu0
  %v3681 = vadd.f32 0.0, %v3680
  %3682 = vmatmul.f32.gmra.mxu0 %v3475
  %v3683 = vpop.f32.mrf.mxu0
  %v3684 = vadd.f32 0.0, %v3683
  %3685 = vmatmul.f32.gmra.mxu0 %v3478
  %v3686 = vpop.f32.mrf.mxu0
  %v3687 = vadd.f32 0.0, %v3686
  %3688 = vmatmul.f32.gmra.mxu0 %v3481
  %v3689 = vpop.f32.mrf.mxu0
  %v3690 = vadd.f32 0.0, %v3689
  %3691 = vmatmul.f32.gmra.mxu0 %v3484
  %v3692 = vpop.f32.mrf.mxu0
  %v3693 = vadd.f32 0.0, %v3692
  %3694 = vmatmul.f32.gmra.mxu0 %v3487
  %v3695 = vpop.f32.mrf.mxu0
  %v3696 = vadd.f32 0.0, %v3695
  %3697 = vmatmul.f32.gmra.mxu0 %v3490
  %v3698 = vpop.f32.mrf.mxu0
  %v3699 = vadd.f32 0.0, %v3698
  %3700 = vmatmul.f32.gmra.mxu0 %v3493
  %v3701 = vpop.f32.mrf.mxu0
  %v3702 = vadd.f32 0.0, %v3701
  %3703 = vmatmul.f32.gmra.mxu0 %v3496
  %v3704 = vpop.f32.mrf.mxu0
  %v3705 = vadd.f32 0.0, %v3704
  %3706 = vmatmul.f32.gmra.mxu0 %v3499
  %v3707 = vpop.f32.mrf.mxu0
  %v3708 = vadd.f32 0.0, %v3707
  %3709 = vmatmul.f32.gmra.mxu0 %v3502
  %v3710 = vpop.f32.mrf.mxu0
  %v3711 = vadd.f32 0.0, %v3710
  %3712 = vmatmul.f32.gmra.mxu0 %v3505
  %v3713 = vpop.f32.mrf.mxu0
  %v3714 = vadd.f32 0.0, %v3713
  %3715 = vdwg.mxu0
  %v3716 = vsel %vm1403, %v3525, 0.0
  %v3717 = vsel %vm1403, %v3528, 0.0
  %v3718 = vadd.f32 %v3716, %v3717
  %v3719 = vsel %vm1403, %v3531, 0.0
  %v3720 = vadd.f32 %v3718, %v3719
  %v3721 = vsel %vm1403, %v3534, 0.0
  %v3722 = vadd.f32 %v3720, %v3721
  %v3723 = vsel %vm1403, %v3537, 0.0
  %v3724 = vadd.f32 %v3722, %v3723
  %v3725 = vsel %vm1403, %v3540, 0.0
  %v3726 = vadd.f32 %v3724, %v3725
  %v3727 = vsel %vm1403, %v3543, 0.0
  %v3728 = vadd.f32 %v3726, %v3727
  %v3729 = vsel %vm1403, %v3546, 0.0
  %v3730 = vadd.f32 %v3728, %v3729
  %v3731 = vsel %vm1403, %v3549, 0.0
  %v3732 = vadd.f32 %v3730, %v3731
  %v3733 = vsel %vm1403, %v3552, 0.0
  %v3734 = vadd.f32 %v3732, %v3733
  %v3735 = vsel %vm1403, %v3555, 0.0
  %v3736 = vadd.f32 %v3734, %v3735
  %v3737 = vsel %vm1403, %v3558, 0.0
  %v3738 = vadd.f32 %v3736, %v3737
  %v3739 = vsel %vm1403, %v3561, 0.0
  %v3740 = vadd.f32 %v3738, %v3739
  %v3741 = vsel %vm1403, %v3564, 0.0
  %v3742 = vadd.f32 %v3740, %v3741
  %v3743 = vsel %vm1403, %v3567, 0.0
  %v3744 = vadd.f32 %v3742, %v3743
  %v3745 = vsel %vm1403, %v3570, 0.0
  %v3746 = vadd.f32 %v3744, %v3745
  %v3747 = vsel %vm1403, %v3573, 0.0
  %v3748 = vadd.f32 %v3746, %v3747
  %v3749 = vsel %vm1403, %v3576, 0.0
  %v3750 = vadd.f32 %v3748, %v3749
  %v3751 = vsel %vm1403, %v3579, 0.0
  %v3752 = vadd.f32 %v3750, %v3751
  %v3753 = vsel %vm1403, %v3582, 0.0
  %v3754 = vadd.f32 %v3752, %v3753
  %v3755 = vsel %vm1403, %v3585, 0.0
  %v3756 = vadd.f32 %v3754, %v3755
  %v3757 = vsel %vm1403, %v3588, 0.0
  %v3758 = vadd.f32 %v3756, %v3757
  %v3759 = vsel %vm1403, %v3591, 0.0
  %v3760 = vadd.f32 %v3758, %v3759
  %v3761 = vsel %vm1403, %v3594, 0.0
  %v3762 = vadd.f32 %v3760, %v3761
  %v3763 = vsel %vm1403, %v3597, 0.0
  %v3764 = vadd.f32 %v3762, %v3763
  %v3765 = vsel %vm1403, %v3600, 0.0
  %v3766 = vadd.f32 %v3764, %v3765
  %v3767 = vsel %vm1403, %v3603, 0.0
  %v3768 = vadd.f32 %v3766, %v3767
  %v3769 = vsel %vm1403, %v3606, 0.0
  %v3770 = vadd.f32 %v3768, %v3769
  %v3771 = vsel %vm1403, %v3609, 0.0
  %v3772 = vadd.f32 %v3770, %v3771
  %v3773 = vsel %vm1403, %v3612, 0.0
  %v3774 = vadd.f32 %v3772, %v3773
  %v3775 = vsel %vm1403, %v3615, 0.0
  %v3776 = vadd.f32 %v3774, %v3775
  %v3777 = vsel %vm1403, %v3618, 0.0
  %v3778 = vadd.f32 %v3776, %v3777
  %v3779 = vsel %vm1403, %v3621, 0.0
  %v3780 = vadd.f32 %v3778, %v3779
  %v3781 = vsel %vm1403, %v3624, 0.0
  %v3782 = vadd.f32 %v3780, %v3781
  %v3783 = vsel %vm1403, %v3627, 0.0
  %v3784 = vadd.f32 %v3782, %v3783
  %v3785 = vsel %vm1403, %v3630, 0.0
  %v3786 = vadd.f32 %v3784, %v3785
  %v3787 = vsel %vm1403, %v3633, 0.0
  %v3788 = vadd.f32 %v3786, %v3787
  %v3789 = vsel %vm1403, %v3636, 0.0
  %v3790 = vadd.f32 %v3788, %v3789
  %v3791 = vsel %vm1403, %v3639, 0.0
  %v3792 = vadd.f32 %v3790, %v3791
  %v3793 = vsel %vm1403, %v3642, 0.0
  %v3794 = vadd.f32 %v3792, %v3793
  %v3795 = vsel %vm1403, %v3645, 0.0
  %v3796 = vadd.f32 %v3794, %v3795
  %v3797 = vsel %vm1403, %v3648, 0.0
  %v3798 = vadd.f32 %v3796, %v3797
  %v3799 = vsel %vm1403, %v3651, 0.0
  %v3800 = vadd.f32 %v3798, %v3799
  %v3801 = vsel %vm1403, %v3654, 0.0
  %v3802 = vadd.f32 %v3800, %v3801
  %v3803 = vsel %vm1403, %v3657, 0.0
  %v3804 = vadd.f32 %v3802, %v3803
  %v3805 = vsel %vm1403, %v3660, 0.0
  %v3806 = vadd.f32 %v3804, %v3805
  %v3807 = vsel %vm1403, %v3663, 0.0
  %v3808 = vadd.f32 %v3806, %v3807
  %v3809 = vsel %vm1403, %v3666, 0.0
  %v3810 = vadd.f32 %v3808, %v3809
  %v3811 = vsel %vm1403, %v3669, 0.0
  %v3812 = vadd.f32 %v3810, %v3811
  %v3813 = vsel %vm1403, %v3672, 0.0
  %v3814 = vadd.f32 %v3812, %v3813
  %v3815 = vsel %vm1403, %v3675, 0.0
  %v3816 = vadd.f32 %v3814, %v3815
  %v3817 = vsel %vm1403, %v3678, 0.0
  %v3818 = vadd.f32 %v3816, %v3817
  %v3819 = vsel %vm1403, %v3681, 0.0
  %v3820 = vadd.f32 %v3818, %v3819
  %v3821 = vsel %vm1403, %v3684, 0.0
  %v3822 = vadd.f32 %v3820, %v3821
  %v3823 = vsel %vm1403, %v3687, 0.0
  %v3824 = vadd.f32 %v3822, %v3823
  %v3825 = vsel %vm1403, %v3690, 0.0
  %v3826 = vadd.f32 %v3824, %v3825
  %v3827 = vsel %vm1403, %v3693, 0.0
  %v3828 = vadd.f32 %v3826, %v3827
  %v3829 = vsel %vm1403, %v3696, 0.0
  %v3830 = vadd.f32 %v3828, %v3829
  %v3831 = vsel %vm1403, %v3699, 0.0
  %v3832 = vadd.f32 %v3830, %v3831
  %v3833 = vsel %vm1403, %v3702, 0.0
  %v3834 = vadd.f32 %v3832, %v3833
  %v3835 = vsel %vm1403, %v3705, 0.0
  %v3836 = vadd.f32 %v3834, %v3835
  %v3837 = vsel %vm1403, %v3708, 0.0
  %v3838 = vadd.f32 %v3836, %v3837
  %v3839 = vsel %vm1403, %v3711, 0.0
  %v3840 = vadd.f32 %v3838, %v3839
  %v3841 = vsel %vm1403, %v3714, 0.0
  %v3842 = vadd.f32 %v3840, %v3841
  %v3843 = vrot.slane %v3842, 4
  %v3844 = vadd.f32 %v3842, %v3843
  %v3845 = vrot.slane %v3844, 2
  %v3846 = vadd.f32 %v3844, %v3845
  %v3847 = vrot.slane %v3846, 1
  %v3848 = vadd.f32 %v3846, %v3847
  %v3849 = vmul.f32 %v3848, 0.001953125
  %v3850 = vsub.f32 %v3525, %v3849
  %v3851 = vsub.f32 %v3528, %v3849
  %v3852 = vsub.f32 %v3531, %v3849
  %v3853 = vsub.f32 %v3534, %v3849
  %v3854 = vsub.f32 %v3537, %v3849
  %v3855 = vsub.f32 %v3540, %v3849
  %v3856 = vsub.f32 %v3543, %v3849
  %v3857 = vsub.f32 %v3546, %v3849
  %v3858 = vsub.f32 %v3549, %v3849
  %v3859 = vsub.f32 %v3552, %v3849
  %v3860 = vsub.f32 %v3555, %v3849
  %v3861 = vsub.f32 %v3558, %v3849
  %v3862 = vsub.f32 %v3561, %v3849
  %v3863 = vsub.f32 %v3564, %v3849
  %v3864 = vsub.f32 %v3567, %v3849
  %v3865 = vsub.f32 %v3570, %v3849
  %v3866 = vsub.f32 %v3573, %v3849
  %v3867 = vsub.f32 %v3576, %v3849
  %v3868 = vsub.f32 %v3579, %v3849
  %v3869 = vsub.f32 %v3582, %v3849
  %v3870 = vsub.f32 %v3585, %v3849
  %v3871 = vsub.f32 %v3588, %v3849
  %v3872 = vsub.f32 %v3591, %v3849
  %v3873 = vsub.f32 %v3594, %v3849
  %v3874 = vsub.f32 %v3597, %v3849
  %v3875 = vsub.f32 %v3600, %v3849
  %v3876 = vsub.f32 %v3603, %v3849
  %v3877 = vsub.f32 %v3606, %v3849
  %v3878 = vsub.f32 %v3609, %v3849
  %v3879 = vsub.f32 %v3612, %v3849
  %v3880 = vsub.f32 %v3615, %v3849
  %v3881 = vsub.f32 %v3618, %v3849
  %v3882 = vsub.f32 %v3621, %v3849
  %v3883 = vsub.f32 %v3624, %v3849
  %v3884 = vsub.f32 %v3627, %v3849
  %v3885 = vsub.f32 %v3630, %v3849
  %v3886 = vsub.f32 %v3633, %v3849
  %v3887 = vsub.f32 %v3636, %v3849
  %v3888 = vsub.f32 %v3639, %v3849
  %v3889 = vsub.f32 %v3642, %v3849
  %v3890 = vsub.f32 %v3645, %v3849
  %v3891 = vsub.f32 %v3648, %v3849
  %v3892 = vsub.f32 %v3651, %v3849
  %v3893 = vsub.f32 %v3654, %v3849
  %v3894 = vsub.f32 %v3657, %v3849
  %v3895 = vsub.f32 %v3660, %v3849
  %v3896 = vsub.f32 %v3663, %v3849
  %v3897 = vsub.f32 %v3666, %v3849
  %v3898 = vsub.f32 %v3669, %v3849
  %v3899 = vsub.f32 %v3672, %v3849
  %v3900 = vsub.f32 %v3675, %v3849
  %v3901 = vsub.f32 %v3678, %v3849
  %v3902 = vsub.f32 %v3681, %v3849
  %v3903 = vsub.f32 %v3684, %v3849
  %v3904 = vsub.f32 %v3687, %v3849
  %v3905 = vsub.f32 %v3690, %v3849
  %v3906 = vsub.f32 %v3693, %v3849
  %v3907 = vsub.f32 %v3696, %v3849
  %v3908 = vsub.f32 %v3699, %v3849
  %v3909 = vsub.f32 %v3702, %v3849
  %v3910 = vsub.f32 %v3705, %v3849
  %v3911 = vsub.f32 %v3708, %v3849
  %v3912 = vsub.f32 %v3711, %v3849
  %v3913 = vsub.f32 %v3714, %v3849
  %v3914 = vmul.f32 %v3850, %v3850
  %v3915 = vmul.f32 %v3851, %v3851
  %v3916 = vmul.f32 %v3852, %v3852
  %v3917 = vmul.f32 %v3853, %v3853
  %v3918 = vmul.f32 %v3854, %v3854
  %v3919 = vmul.f32 %v3855, %v3855
  %v3920 = vmul.f32 %v3856, %v3856
  %v3921 = vmul.f32 %v3857, %v3857
  %v3922 = vmul.f32 %v3858, %v3858
  %v3923 = vmul.f32 %v3859, %v3859
  %v3924 = vmul.f32 %v3860, %v3860
  %v3925 = vmul.f32 %v3861, %v3861
  %v3926 = vmul.f32 %v3862, %v3862
  %v3927 = vmul.f32 %v3863, %v3863
  %v3928 = vmul.f32 %v3864, %v3864
  %v3929 = vmul.f32 %v3865, %v3865
  %v3930 = vmul.f32 %v3866, %v3866
  %v3931 = vmul.f32 %v3867, %v3867
  %v3932 = vmul.f32 %v3868, %v3868
  %v3933 = vmul.f32 %v3869, %v3869
  %v3934 = vmul.f32 %v3870, %v3870
  %v3935 = vmul.f32 %v3871, %v3871
  %v3936 = vmul.f32 %v3872, %v3872
  %v3937 = vmul.f32 %v3873, %v3873
  %v3938 = vmul.f32 %v3874, %v3874
  %v3939 = vmul.f32 %v3875, %v3875
  %v3940 = vmul.f32 %v3876, %v3876
  %v3941 = vmul.f32 %v3877, %v3877
  %v3942 = vmul.f32 %v3878, %v3878
  %v3943 = vmul.f32 %v3879, %v3879
  %v3944 = vmul.f32 %v3880, %v3880
  %v3945 = vmul.f32 %v3881, %v3881
  %v3946 = vmul.f32 %v3882, %v3882
  %v3947 = vmul.f32 %v3883, %v3883
  %v3948 = vmul.f32 %v3884, %v3884
  %v3949 = vmul.f32 %v3885, %v3885
  %v3950 = vmul.f32 %v3886, %v3886
  %v3951 = vmul.f32 %v3887, %v3887
  %v3952 = vmul.f32 %v3888, %v3888
  %v3953 = vmul.f32 %v3889, %v3889
  %v3954 = vmul.f32 %v3890, %v3890
  %v3955 = vmul.f32 %v3891, %v3891
  %v3956 = vmul.f32 %v3892, %v3892
  %v3957 = vmul.f32 %v3893, %v3893
  %v3958 = vmul.f32 %v3894, %v3894
  %v3959 = vmul.f32 %v3895, %v3895
  %v3960 = vmul.f32 %v3896, %v3896
  %v3961 = vmul.f32 %v3897, %v3897
  %v3962 = vmul.f32 %v3898, %v3898
  %v3963 = vmul.f32 %v3899, %v3899
  %v3964 = vmul.f32 %v3900, %v3900
  %v3965 = vmul.f32 %v3901, %v3901
  %v3966 = vmul.f32 %v3902, %v3902
  %v3967 = vmul.f32 %v3903, %v3903
  %v3968 = vmul.f32 %v3904, %v3904
  %v3969 = vmul.f32 %v3905, %v3905
  %v3970 = vmul.f32 %v3906, %v3906
  %v3971 = vmul.f32 %v3907, %v3907
  %v3972 = vmul.f32 %v3908, %v3908
  %v3973 = vmul.f32 %v3909, %v3909
  %v3974 = vmul.f32 %v3910, %v3910
  %v3975 = vmul.f32 %v3911, %v3911
  %v3976 = vmul.f32 %v3912, %v3912
  %v3977 = vmul.f32 %v3913, %v3913
  %v3978 = vsel %vm1403, %v3914, 0.0
  %v3979 = vsel %vm1403, %v3915, 0.0
  %v3980 = vadd.f32 %v3978, %v3979
  %v3981 = vsel %vm1403, %v3916, 0.0
  %v3982 = vadd.f32 %v3980, %v3981
  %v3983 = vsel %vm1403, %v3917, 0.0
  %v3984 = vadd.f32 %v3982, %v3983
  %v3985 = vsel %vm1403, %v3918, 0.0
  %v3986 = vadd.f32 %v3984, %v3985
  %v3987 = vsel %vm1403, %v3919, 0.0
  %v3988 = vadd.f32 %v3986, %v3987
  %v3989 = vsel %vm1403, %v3920, 0.0
  %v3990 = vadd.f32 %v3988, %v3989
  %v3991 = vsel %vm1403, %v3921, 0.0
  %v3992 = vadd.f32 %v3990, %v3991
  %v3993 = vsel %vm1403, %v3922, 0.0
  %v3994 = vadd.f32 %v3992, %v3993
  %v3995 = vsel %vm1403, %v3923, 0.0
  %v3996 = vadd.f32 %v3994, %v3995
  %v3997 = vsel %vm1403, %v3924, 0.0
  %v3998 = vadd.f32 %v3996, %v3997
  %v3999 = vsel %vm1403, %v3925, 0.0
  %v4000 = vadd.f32 %v3998, %v3999
  %v4001 = vsel %vm1403, %v3926, 0.0
  %v4002 = vadd.f32 %v4000, %v4001
  %v4003 = vsel %vm1403, %v3927, 0.0
  %v4004 = vadd.f32 %v4002, %v4003
  %v4005 = vsel %vm1403, %v3928, 0.0
  %v4006 = vadd.f32 %v4004, %v4005
  %v4007 = vsel %vm1403, %v3929, 0.0
  %v4008 = vadd.f32 %v4006, %v4007
  %v4009 = vsel %vm1403, %v3930, 0.0
  %v4010 = vadd.f32 %v4008, %v4009
  %v4011 = vsel %vm1403, %v3931, 0.0
  %v4012 = vadd.f32 %v4010, %v4011
  %v4013 = vsel %vm1403, %v3932, 0.0
  %v4014 = vadd.f32 %v4012, %v4013
  %v4015 = vsel %vm1403, %v3933, 0.0
  %v4016 = vadd.f32 %v4014, %v4015
  %v4017 = vsel %vm1403, %v3934, 0.0
  %v4018 = vadd.f32 %v4016, %v4017
  %v4019 = vsel %vm1403, %v3935, 0.0
  %v4020 = vadd.f32 %v4018, %v4019
  %v4021 = vsel %vm1403, %v3936, 0.0
  %v4022 = vadd.f32 %v4020, %v4021
  %v4023 = vsel %vm1403, %v3937, 0.0
  %v4024 = vadd.f32 %v4022, %v4023
  %v4025 = vsel %vm1403, %v3938, 0.0
  %v4026 = vadd.f32 %v4024, %v4025
  %v4027 = vsel %vm1403, %v3939, 0.0
  %v4028 = vadd.f32 %v4026, %v4027
  %v4029 = vsel %vm1403, %v3940, 0.0
  %v4030 = vadd.f32 %v4028, %v4029
  %v4031 = vsel %vm1403, %v3941, 0.0
  %v4032 = vadd.f32 %v4030, %v4031
  %v4033 = vsel %vm1403, %v3942, 0.0
  %v4034 = vadd.f32 %v4032, %v4033
  %v4035 = vsel %vm1403, %v3943, 0.0
  %v4036 = vadd.f32 %v4034, %v4035
  %v4037 = vsel %vm1403, %v3944, 0.0
  %v4038 = vadd.f32 %v4036, %v4037
  %v4039 = vsel %vm1403, %v3945, 0.0
  %v4040 = vadd.f32 %v4038, %v4039
  %v4041 = vsel %vm1403, %v3946, 0.0
  %v4042 = vadd.f32 %v4040, %v4041
  %v4043 = vsel %vm1403, %v3947, 0.0
  %v4044 = vadd.f32 %v4042, %v4043
  %v4045 = vsel %vm1403, %v3948, 0.0
  %v4046 = vadd.f32 %v4044, %v4045
  %v4047 = vsel %vm1403, %v3949, 0.0
  %v4048 = vadd.f32 %v4046, %v4047
  %v4049 = vsel %vm1403, %v3950, 0.0
  %v4050 = vadd.f32 %v4048, %v4049
  %v4051 = vsel %vm1403, %v3951, 0.0
  %v4052 = vadd.f32 %v4050, %v4051
  %v4053 = vsel %vm1403, %v3952, 0.0
  %v4054 = vadd.f32 %v4052, %v4053
  %v4055 = vsel %vm1403, %v3953, 0.0
  %v4056 = vadd.f32 %v4054, %v4055
  %v4057 = vsel %vm1403, %v3954, 0.0
  %v4058 = vadd.f32 %v4056, %v4057
  %v4059 = vsel %vm1403, %v3955, 0.0
  %v4060 = vadd.f32 %v4058, %v4059
  %v4061 = vsel %vm1403, %v3956, 0.0
  %v4062 = vadd.f32 %v4060, %v4061
  %v4063 = vsel %vm1403, %v3957, 0.0
  %v4064 = vadd.f32 %v4062, %v4063
  %v4065 = vsel %vm1403, %v3958, 0.0
  %v4066 = vadd.f32 %v4064, %v4065
  %v4067 = vsel %vm1403, %v3959, 0.0
  %v4068 = vadd.f32 %v4066, %v4067
  %v4069 = vsel %vm1403, %v3960, 0.0
  %v4070 = vadd.f32 %v4068, %v4069
  %v4071 = vsel %vm1403, %v3961, 0.0
  %v4072 = vadd.f32 %v4070, %v4071
  %v4073 = vsel %vm1403, %v3962, 0.0
  %v4074 = vadd.f32 %v4072, %v4073
  %v4075 = vsel %vm1403, %v3963, 0.0
  %v4076 = vadd.f32 %v4074, %v4075
  %v4077 = vsel %vm1403, %v3964, 0.0
  %v4078 = vadd.f32 %v4076, %v4077
  %v4079 = vsel %vm1403, %v3965, 0.0
  %v4080 = vadd.f32 %v4078, %v4079
  %v4081 = vsel %vm1403, %v3966, 0.0
  %v4082 = vadd.f32 %v4080, %v4081
  %v4083 = vsel %vm1403, %v3967, 0.0
  %v4084 = vadd.f32 %v4082, %v4083
  %v4085 = vsel %vm1403, %v3968, 0.0
  %v4086 = vadd.f32 %v4084, %v4085
  %v4087 = vsel %vm1403, %v3969, 0.0
  %v4088 = vadd.f32 %v4086, %v4087
  %v4089 = vsel %vm1403, %v3970, 0.0
  %v4090 = vadd.f32 %v4088, %v4089
  %v4091 = vsel %vm1403, %v3971, 0.0
  %v4092 = vadd.f32 %v4090, %v4091
  %v4093 = vsel %vm1403, %v3972, 0.0
  %v4094 = vadd.f32 %v4092, %v4093
  %v4095 = vsel %vm1403, %v3973, 0.0
  %v4096 = vadd.f32 %v4094, %v4095
  %v4097 = vsel %vm1403, %v3974, 0.0
  %v4098 = vadd.f32 %v4096, %v4097
  %v4099 = vsel %vm1403, %v3975, 0.0
  %v4100 = vadd.f32 %v4098, %v4099
  %v4101 = vsel %vm1403, %v3976, 0.0
  %v4102 = vadd.f32 %v4100, %v4101
  %v4103 = vsel %vm1403, %v3977, 0.0
  %v4104 = vadd.f32 %v4102, %v4103
  %v4105 = vrot.slane %v4104, 4
  %v4106 = vadd.f32 %v4104, %v4105
  %v4107 = vrot.slane %v4106, 2
  %v4108 = vadd.f32 %v4106, %v4107
  %v4109 = vrot.slane %v4108, 1
  %v4110 = vadd.f32 %v4108, %v4109
  %v4111 = vmul.f32 %v4110, 0.001953125
  %v4112 = vld [vmem:[%s3] sm:$0x1]
  %v4113 = vadd.f32 %v4111, 1e-05
  %v4114 = vrsqrt.pop %v4113
  %v4115 = vmul.f32 %v4114, %v4113
  %v4116 = vmul.f32 %v4115, %v4114
  %v4117 = vmul.f32 0.5, %v4116
  %v4118 = vsub.f32 1.5, %v4117
  %v4119 = vmul.f32 %v4114, %v4118
  %vm4120 = vweird.f32 %v4113
  %vm4121 = vweird.f32 %v4114
  %vm4122 = vmor %vm4120, %vm4121
  %v4123 = vsel %vm4122, %v4114, %v4119
  %v4124 = vmul.f32 %v4112, %v4123
  %v4125 = vld [vmem:[%s4] sm:$0x1]
  %v4126 = vmul.f32 %v3849, %v4124
  %v4127 = vsub.f32 %v4125, %v4126
  %v4129 = vperm.slane %v4124, 0
  %v4131 = vmul.f32 %v3525, %v4129
  %v4132 = vmul.f32 %v3528, %v4129
  %v4133 = vmul.f32 %v3531, %v4129
  %v4134 = vmul.f32 %v3534, %v4129
  %v4135 = vmul.f32 %v3537, %v4129
  %v4136 = vmul.f32 %v3540, %v4129
  %v4137 = vmul.f32 %v3543, %v4129
  %v4138 = vmul.f32 %v3546, %v4129
  %v4139 = vmul.f32 %v3549, %v4129
  %v4140 = vmul.f32 %v3552, %v4129
  %v4141 = vmul.f32 %v3555, %v4129
  %v4142 = vmul.f32 %v3558, %v4129
  %v4143 = vmul.f32 %v3561, %v4129
  %v4144 = vmul.f32 %v3564, %v4129
  %v4145 = vmul.f32 %v3567, %v4129
  %v4146 = vmul.f32 %v3570, %v4129
  %v4147 = vmul.f32 %v3573, %v4129
  %v4148 = vmul.f32 %v3576, %v4129
  %v4149 = vmul.f32 %v3579, %v4129
  %v4150 = vmul.f32 %v3582, %v4129
  %v4151 = vmul.f32 %v3585, %v4129
  %v4152 = vmul.f32 %v3588, %v4129
  %v4153 = vmul.f32 %v3591, %v4129
  %v4154 = vmul.f32 %v3594, %v4129
  %v4155 = vmul.f32 %v3597, %v4129
  %v4156 = vmul.f32 %v3600, %v4129
  %v4157 = vmul.f32 %v3603, %v4129
  %v4158 = vmul.f32 %v3606, %v4129
  %v4159 = vmul.f32 %v3609, %v4129
  %v4160 = vmul.f32 %v3612, %v4129
  %v4161 = vmul.f32 %v3615, %v4129
  %v4162 = vmul.f32 %v3618, %v4129
  %v4163 = vmul.f32 %v3621, %v4129
  %v4164 = vmul.f32 %v3624, %v4129
  %v4165 = vmul.f32 %v3627, %v4129
  %v4166 = vmul.f32 %v3630, %v4129
  %v4167 = vmul.f32 %v3633, %v4129
  %v4168 = vmul.f32 %v3636, %v4129
  %v4169 = vmul.f32 %v3639, %v4129
  %v4170 = vmul.f32 %v3642, %v4129
  %v4171 = vmul.f32 %v3645, %v4129
  %v4172 = vmul.f32 %v3648, %v4129
  %v4173 = vmul.f32 %v3651, %v4129
  %v4174 = vmul.f32 %v3654, %v4129
  %v4175 = vmul.f32 %v3657, %v4129
  %v4176 = vmul.f32 %v3660, %v4129
  %v4177 = vmul.f32 %v3663, %v4129
  %v4178 = vmul.f32 %v3666, %v4129
  %v4179 = vmul.f32 %v3669, %v4129
  %v4180 = vmul.f32 %v3672, %v4129
  %v4181 = vmul.f32 %v3675, %v4129
  %v4182 = vmul.f32 %v3678, %v4129
  %v4183 = vmul.f32 %v3681, %v4129
  %v4184 = vmul.f32 %v3684, %v4129
  %v4185 = vmul.f32 %v3687, %v4129
  %v4186 = vmul.f32 %v3690, %v4129
  %v4187 = vmul.f32 %v3693, %v4129
  %v4188 = vmul.f32 %v3696, %v4129
  %v4189 = vmul.f32 %v3699, %v4129
  %v4190 = vmul.f32 %v3702, %v4129
  %v4191 = vmul.f32 %v3705, %v4129
  %v4192 = vmul.f32 %v3708, %v4129
  %v4193 = vmul.f32 %v3711, %v4129
  %v4194 = vmul.f32 %v3714, %v4129
  %v4196 = vperm.slane %v4127, 0
  %v4198 = vadd.f32 %v4131, %v4196
  %v4199 = vadd.f32 %v4132, %v4196
  %v4200 = vadd.f32 %v4133, %v4196
  %v4201 = vadd.f32 %v4134, %v4196
  %v4202 = vadd.f32 %v4135, %v4196
  %v4203 = vadd.f32 %v4136, %v4196
  %v4204 = vadd.f32 %v4137, %v4196
  %v4205 = vadd.f32 %v4138, %v4196
  %v4206 = vadd.f32 %v4139, %v4196
  %v4207 = vadd.f32 %v4140, %v4196
  %v4208 = vadd.f32 %v4141, %v4196
  %v4209 = vadd.f32 %v4142, %v4196
  %v4210 = vadd.f32 %v4143, %v4196
  %v4211 = vadd.f32 %v4144, %v4196
  %v4212 = vadd.f32 %v4145, %v4196
  %v4213 = vadd.f32 %v4146, %v4196
  %v4214 = vadd.f32 %v4147, %v4196
  %v4215 = vadd.f32 %v4148, %v4196
  %v4216 = vadd.f32 %v4149, %v4196
  %v4217 = vadd.f32 %v4150, %v4196
  %v4218 = vadd.f32 %v4151, %v4196
  %v4219 = vadd.f32 %v4152, %v4196
  %v4220 = vadd.f32 %v4153, %v4196
  %v4221 = vadd.f32 %v4154, %v4196
  %v4222 = vadd.f32 %v4155, %v4196
  %v4223 = vadd.f32 %v4156, %v4196
  %v4224 = vadd.f32 %v4157, %v4196
  %v4225 = vadd.f32 %v4158, %v4196
  %v4226 = vadd.f32 %v4159, %v4196
  %v4227 = vadd.f32 %v4160, %v4196
  %v4228 = vadd.f32 %v4161, %v4196
  %v4229 = vadd.f32 %v4162, %v4196
  %v4230 = vadd.f32 %v4163, %v4196
  %v4231 = vadd.f32 %v4164, %v4196
  %v4232 = vadd.f32 %v4165, %v4196
  %v4233 = vadd.f32 %v4166, %v4196
  %v4234 = vadd.f32 %v4167, %v4196
  %v4235 = vadd.f32 %v4168, %v4196
  %v4236 = vadd.f32 %v4169, %v4196
  %v4237 = vadd.f32 %v4170, %v4196
  %v4238 = vadd.f32 %v4171, %v4196
  %v4239 = vadd.f32 %v4172, %v4196
  %v4240 = vadd.f32 %v4173, %v4196
  %v4241 = vadd.f32 %v4174, %v4196
  %v4242 = vadd.f32 %v4175, %v4196
  %v4243 = vadd.f32 %v4176, %v4196
  %v4244 = vadd.f32 %v4177, %v4196
  %v4245 = vadd.f32 %v4178, %v4196
  %v4246 = vadd.f32 %v4179, %v4196
  %v4247 = vadd.f32 %v4180, %v4196
  %v4248 = vadd.f32 %v4181, %v4196
  %v4249 = vadd.f32 %v4182, %v4196
  %v4250 = vadd.f32 %v4183, %v4196
  %v4251 = vadd.f32 %v4184, %v4196
  %v4252 = vadd.f32 %v4185, %v4196
  %v4253 = vadd.f32 %v4186, %v4196
  %v4254 = vadd.f32 %v4187, %v4196
  %v4255 = vadd.f32 %v4188, %v4196
  %v4256 = vadd.f32 %v4189, %v4196
  %v4257 = vadd.f32 %v4190, %v4196
  %v4258 = vadd.f32 %v4191, %v4196
  %v4259 = vadd.f32 %v4192, %v4196
  %v4260 = vadd.f32 %v4193, %v4196
  %v4261 = vadd.f32 %v4194, %v4196
  %v4262 = vmax.f32 %v4198, 0.0
  %v4263 = vmax.f32 %v4199, 0.0
  %v4264 = vmax.f32 %v4200, 0.0
  %v4265 = vmax.f32 %v4201, 0.0
  %v4266 = vmax.f32 %v4202, 0.0
  %v4267 = vmax.f32 %v4203, 0.0
  %v4268 = vmax.f32 %v4204, 0.0
  %v4269 = vmax.f32 %v4205, 0.0
  %v4270 = vmax.f32 %v4206, 0.0
  %v4271 = vmax.f32 %v4207, 0.0
  %v4272 = vmax.f32 %v4208, 0.0
  %v4273 = vmax.f32 %v4209, 0.0
  %v4274 = vmax.f32 %v4210, 0.0
  %v4275 = vmax.f32 %v4211, 0.0
  %v4276 = vmax.f32 %v4212, 0.0
  %v4277 = vmax.f32 %v4213, 0.0
  %v4278 = vmax.f32 %v4214, 0.0
  %v4279 = vmax.f32 %v4215, 0.0
  %v4280 = vmax.f32 %v4216, 0.0
  %v4281 = vmax.f32 %v4217, 0.0
  %v4282 = vmax.f32 %v4218, 0.0
  %v4283 = vmax.f32 %v4219, 0.0
  %v4284 = vmax.f32 %v4220, 0.0
  %v4285 = vmax.f32 %v4221, 0.0
  %v4286 = vmax.f32 %v4222, 0.0
  %v4287 = vmax.f32 %v4223, 0.0
  %v4288 = vmax.f32 %v4224, 0.0
  %v4289 = vmax.f32 %v4225, 0.0
  %v4290 = vmax.f32 %v4226, 0.0
  %v4291 = vmax.f32 %v4227, 0.0
  %v4292 = vmax.f32 %v4228, 0.0
  %v4293 = vmax.f32 %v4229, 0.0
  %v4294 = vmax.f32 %v4230, 0.0
  %v4295 = vmax.f32 %v4231, 0.0
  %v4296 = vmax.f32 %v4232, 0.0
  %v4297 = vmax.f32 %v4233, 0.0
  %v4298 = vmax.f32 %v4234, 0.0
  %v4299 = vmax.f32 %v4235, 0.0
  %v4300 = vmax.f32 %v4236, 0.0
  %v4301 = vmax.f32 %v4237, 0.0
  %v4302 = vmax.f32 %v4238, 0.0
  %v4303 = vmax.f32 %v4239, 0.0
  %v4304 = vmax.f32 %v4240, 0.0
  %v4305 = vmax.f32 %v4241, 0.0
  %v4306 = vmax.f32 %v4242, 0.0
  %v4307 = vmax.f32 %v4243, 0.0
  %v4308 = vmax.f32 %v4244, 0.0
  %v4309 = vmax.f32 %v4245, 0.0
  %v4310 = vmax.f32 %v4246, 0.0
  %v4311 = vmax.f32 %v4247, 0.0
  %v4312 = vmax.f32 %v4248, 0.0
  %v4313 = vmax.f32 %v4249, 0.0
  %v4314 = vmax.f32 %v4250, 0.0
  %v4315 = vmax.f32 %v4251, 0.0
  %v4316 = vmax.f32 %v4252, 0.0
  %v4317 = vmax.f32 %v4253, 0.0
  %v4318 = vmax.f32 %v4254, 0.0
  %v4319 = vmax.f32 %v4255, 0.0
  %v4320 = vmax.f32 %v4256, 0.0
  %v4321 = vmax.f32 %v4257, 0.0
  %v4322 = vmax.f32 %v4258, 0.0
  %v4323 = vmax.f32 %v4259, 0.0
  %v4324 = vmax.f32 %v4260, 0.0
  %v4325 = vmax.f32 %v4261, 0.0
  %4326 = vst.msk [vmem:[%s5] sm:$0xff] %vm1403, %v4262
  %4327 = vst.msk [vmem:[%s5 + $0x8] sm:$0xff] %vm1403, %v4263
  %4328 = vst.msk [vmem:[%s5 + $0x10] sm:$0xff] %vm1403, %v4264
  %4329 = vst.msk [vmem:[%s5 + $0x18] sm:$0xff] %vm1403, %v4265
  %4330 = vst.msk [vmem:[%s5 + $0x20] sm:$0xff] %vm1403, %v4266
  %4331 = vst.msk [vmem:[%s5 + $0x28] sm:$0xff] %vm1403, %v4267
  %4332 = vst.msk [vmem:[%s5 + $0x30] sm:$0xff] %vm1403, %v4268
  %4333 = vst.msk [vmem:[%s5 + $0x38] sm:$0xff] %vm1403, %v4269
  %4334 = vst.msk [vmem:[%s5 + $0x40] sm:$0xff] %vm1403, %v4270
  %4335 = vst.msk [vmem:[%s5 + $0x48] sm:$0xff] %vm1403, %v4271
  %4336 = vst.msk [vmem:[%s5 + $0x50] sm:$0xff] %vm1403, %v4272
  %4337 = vst.msk [vmem:[%s5 + $0x58] sm:$0xff] %vm1403, %v4273
  %4338 = vst.msk [vmem:[%s5 + $0x60] sm:$0xff] %vm1403, %v4274
  %4339 = vst.msk [vmem:[%s5 + $0x68] sm:$0xff] %vm1403, %v4275
  %4340 = vst.msk [vmem:[%s5 + $0x70] sm:$0xff] %vm1403, %v4276
  %4341 = vst.msk [vmem:[%s5 + $0x78] sm:$0xff] %vm1403, %v4277
  %4342 = vst.msk [vmem:[%s5 + $0x80] sm:$0xff] %vm1403, %v4278
  %4343 = vst.msk [vmem:[%s5 + $0x88] sm:$0xff] %vm1403, %v4279
  %4344 = vst.msk [vmem:[%s5 + $0x90] sm:$0xff] %vm1403, %v4280
  %4345 = vst.msk [vmem:[%s5 + $0x98] sm:$0xff] %vm1403, %v4281
  %4346 = vst.msk [vmem:[%s5 + $0xa0] sm:$0xff] %vm1403, %v4282
  %4347 = vst.msk [vmem:[%s5 + $0xa8] sm:$0xff] %vm1403, %v4283
  %4348 = vst.msk [vmem:[%s5 + $0xb0] sm:$0xff] %vm1403, %v4284
  %4349 = vst.msk [vmem:[%s5 + $0xb8] sm:$0xff] %vm1403, %v4285
  %4350 = vst.msk [vmem:[%s5 + $0xc0] sm:$0xff] %vm1403, %v4286
  %4351 = vst.msk [vmem:[%s5 + $0xc8] sm:$0xff] %vm1403, %v4287
  %4352 = vst.msk [vmem:[%s5 + $0xd0] sm:$0xff] %vm1403, %v4288
  %4353 = vst.msk [vmem:[%s5 + $0xd8] sm:$0xff] %vm1403, %v4289
  %4354 = vst.msk [vmem:[%s5 + $0xe0] sm:$0xff] %vm1403, %v4290
  %4355 = vst.msk [vmem:[%s5 + $0xe8] sm:$0xff] %vm1403, %v4291
  %4356 = vst.msk [vmem:[%s5 + $0xf0] sm:$0xff] %vm1403, %v4292
  %4357 = vst.msk [vmem:[%s5 + $0xf8] sm:$0xff] %vm1403, %v4293
  %4358 = vst.msk [vmem:[%s5 + $0x100] sm:$0xff] %vm1403, %v4294
  %4359 = vst.msk [vmem:[%s5 + $0x108] sm:$0xff] %vm1403, %v4295
  %4360 = vst.msk [vmem:[%s5 + $0x110] sm:$0xff] %vm1403, %v4296
  %4361 = vst.msk [vmem:[%s5 + $0x118] sm:$0xff] %vm1403, %v4297
  %4362 = vst.msk [vmem:[%s5 + $0x120] sm:$0xff] %vm1403, %v4298
  %4363 = vst.msk [vmem:[%s5 + $0x128] sm:$0xff] %vm1403, %v4299
  %4364 = vst.msk [vmem:[%s5 + $0x130] sm:$0xff] %vm1403, %v4300
  %4365 = vst.msk [vmem:[%s5 + $0x138] sm:$0xff] %vm1403, %v4301
  %4366 = vst.msk [vmem:[%s5 + $0x140] sm:$0xff] %vm1403, %v4302
  %4367 = vst.msk [vmem:[%s5 + $0x148] sm:$0xff] %vm1403, %v4303
  %4368 = vst.msk [vmem:[%s5 + $0x150] sm:$0xff] %vm1403, %v4304
  %4369 = vst.msk [vmem:[%s5 + $0x158] sm:$0xff] %vm1403, %v4305
  %4370 = vst.msk [vmem:[%s5 + $0x160] sm:$0xff] %vm1403, %v4306
  %4371 = vst.msk [vmem:[%s5 + $0x168] sm:$0xff] %vm1403, %v4307
  %4372 = vst.msk [vmem:[%s5 + $0x170] sm:$0xff] %vm1403, %v4308
  %4373 = vst.msk [vmem:[%s5 + $0x178] sm:$0xff] %vm1403, %v4309
  %4374 = vst.msk [vmem:[%s5 + $0x180] sm:$0xff] %vm1403, %v4310
  %4375 = vst.msk [vmem:[%s5 + $0x188] sm:$0xff] %vm1403, %v4311
  %4376 = vst.msk [vmem:[%s5 + $0x190] sm:$0xff] %vm1403, %v4312
  %4377 = vst.msk [vmem:[%s5 + $0x198] sm:$0xff] %vm1403, %v4313
  %4378 = vst.msk [vmem:[%s5 + $0x1a0] sm:$0xff] %vm1403, %v4314
  %4379 = vst.msk [vmem:[%s5 + $0x1a8] sm:$0xff] %vm1403, %v4315
  %4380 = vst.msk [vmem:[%s5 + $0x1b0] sm:$0xff] %vm1403, %v4316
  %4381 = vst.msk [vmem:[%s5 + $0x1b8] sm:$0xff] %vm1403, %v4317
  %4382 = vst.msk [vmem:[%s5 + $0x1c0] sm:$0xff] %vm1403, %v4318
  %4383 = vst.msk [vmem:[%s5 + $0x1c8] sm:$0xff] %vm1403, %v4319
  %4384 = vst.msk [vmem:[%s5 + $0x1d0] sm:$0xff] %vm1403, %v4320
  %4385 = vst.msk [vmem:[%s5 + $0x1d8] sm:$0xff] %vm1403, %v4321
  %4386 = vst.msk [vmem:[%s5 + $0x1e0] sm:$0xff] %vm1403, %v4322
  %4387 = vst.msk [vmem:[%s5 + $0x1e8] sm:$0xff] %vm1403, %v4323
  %4388 = vst.msk [vmem:[%s5 + $0x1f0] sm:$0xff] %vm1403, %v4324
  %4389 = vst.msk [vmem:[%s5 + $0x1f8] sm:$0xff] %vm1403, %v4325
  // Predicated region
  $region22: #{tpu_custom_call.1} parent=0 // pred_check
    _
  $region23: #{tpu_custom_call.1} parent=0 // pred_check_branch
    %4391 = sbr.rel (0) target = $region25
  $region24: #{tpu_custom_call.1} parent=0 // pred_region
    _
  $region25: #{tpu_custom_call.1} parent=0 // pred_fallthru
    _
  // Predicated region
  $region26: #{tpu_custom_call.1} parent=0 // pred_check
    _
  $region27: #{tpu_custom_call.1} parent=0 // pred_check_branch
    %4393 = sbr.rel (0) target = $region29
  $region28: #{tpu_custom_call.1} parent=0 // pred_region
    _
  $region29: #{tpu_custom_call.1} parent=0 // pred_fallthru
    _

</llo_original>
